<compile_context>
chip_gen: v7x
topology: tpu7x:2x2x1
jax: 0.10.0
libtpu: 0.0.40
codegen_flags: <defaults>
</compile_context>

<pallas_src>
import functools
from math import sqrt, pi

import jax
import jax.numpy as jnp
from jax.experimental import pallas as pl
from jax.experimental.pallas import tpu as pltpu


def _layernorm(v, eps=1e-5):
    # nn.LayerNorm(elementwise_affine=False): biased variance, eps=1e-5 (f32 stats)
    mu = jnp.mean(v, axis=-1, keepdims=True)
    var = jnp.mean((v - mu) ** 2, axis=-1, keepdims=True)
    return (v - mu) * jax.lax.rsqrt(var + eps)


def _gelu_tanh(x):
    # Matches the custom GELU module (tanh approximation)
    return 0.5 * x * (1.0 + jnp.tanh(sqrt(2.0 / pi) * (x + 0.044715 * x * x * x)))


def transformer_layer_kernel(xq_ref, xkv_ref, wq_ref, wk_ref, wv_ref, wfc_ref,
                             w1_ref, b1_ref, w2_ref, b2_ref, o_ref,
                             *, n_heads, compute_dtype):
    f32 = jnp.float32
    cdt = compute_dtype

    x_q = xq_ref[0].astype(f32)     # (tq, E) query rows (residual path)
    x_kv = xkv_ref[0].astype(f32)   # (S, E)  full sequence (keys / values)

    # ---- attention block ----
    xn_q = _layernorm(x_q).astype(cdt)
    xn_kv = _layernorm(x_kv).astype(cdt)

    attn_proj = jnp.zeros(x_q.shape, f32)          # (tq, E)
    for h in range(n_heads):                       # static unroll, no concat
        # head-major weights -> leading-axis index (no lane slicing)
        q = jnp.dot(xn_q, wq_ref[h], preferred_element_type=f32).astype(cdt)   # (tq, hd)
        k = jnp.dot(xn_kv, wk_ref[h], preferred_element_type=f32).astype(cdt)  # (S, hd)
        v = jnp.dot(xn_kv, wv_ref[h], preferred_element_type=f32).astype(cdt)  # (S, hd)

        # scale already folded into wq on the host
        s = jnp.einsum('qd,kd->qk', q, k, preferred_element_type=f32)          # (tq, S)
        s = s - jnp.max(s, axis=-1, keepdims=True)
        p = jnp.exp(s)
        p = p * pl.reciprocal(jnp.sum(p, axis=-1, keepdims=True), approx=True)

        o_h = jnp.dot(p.astype(cdt), v, preferred_element_type=f32)            # (tq, hd)
        # accumulate straight into the output projection
        attn_proj = attn_proj + jnp.dot(o_h.astype(cdt), wfc_ref[h],
                                        preferred_element_type=f32)            # (tq, E)

    x2 = x_q + attn_proj

    # ---- MLP block ----
    xn2 = _layernorm(x2).astype(cdt)
    h1 = jnp.dot(xn2, w1_ref[...], preferred_element_type=f32) + b1_ref[...]
    g = _gelu_tanh(h1).astype(cdt)
    out = x2 + jnp.dot(g, w2_ref[...], preferred_element_type=f32) + b2_ref[...]

    o_ref[...] = out[None].astype(o_ref.dtype)


def transformer_layer(x, params, *, n_heads, attn_dim, q_tile=256,
                      compute_dtype=jnp.bfloat16):
    B, S, E = x.shape
    hd = attn_dim // n_heads
    wqkv, wfc, w1, b1, w2, b2 = params

    # --- host-side layout plumbing (free): head-major weights, Q scale folded ---
    wqkv_hm = wqkv.reshape(E, 3, n_heads, hd)
    wq = (jnp.transpose(wqkv_hm[:, 0], (1, 0, 2)) * (1.0 / sqrt(hd))).astype(compute_dtype)
    wk = jnp.transpose(wqkv_hm[:, 1], (1, 0, 2)).astype(compute_dtype)     # (H, E, hd)
    wv = jnp.transpose(wqkv_hm[:, 2], (1, 0, 2)).astype(compute_dtype)     # (H, E, hd)
    wfc_hm = wfc.reshape(n_heads, hd, E).astype(compute_dtype)             # (H, hd, E)
    w1c = w1.astype(compute_dtype)
    w2c = w2.astype(compute_dtype)
    b1f = b1.astype(jnp.float32)
    b2f = b2.astype(jnp.float32)

    tq = min(q_tile, S)
    grid = (B, pl.cdiv(S, tq))

    kernel = functools.partial(transformer_layer_kernel,
                               n_heads=n_heads, compute_dtype=compute_dtype)

    def build(single_buffer_weights):
        def wspec(shape):
            zero = lambda b, q, _n=len(shape): (0,) * _n
            if single_buffer_weights:
                # constant-index weights: single buffer (important on v7x 64 MiB VMEM)
                return pl.BlockSpec(shape, zero, pipeline_mode=pl.Buffered(1))
            return pl.BlockSpec(shape, zero)

        return pl.pallas_call(
            kernel,
            out_shape=jax.ShapeDtypeStruct((B, S, E), x.dtype),
            grid_spec=pltpu.PrefetchScalarGridSpec(
                num_scalar_prefetch=0,
                grid=grid,
                in_specs=[
                    pl.BlockSpec((1, tq, E), lambda b, q: (b, q, 0)),   # x: query tile
                    pl.BlockSpec((1, S, E), lambda b, q: (b, 0, 0)),    # x: full seq -> K/V
                    wspec(wq.shape), wspec(wk.shape), wspec(wv.shape),
                    wspec(wfc_hm.shape), wspec(w1c.shape), wspec(b1f.shape),
                    wspec(w2c.shape), wspec(b2f.shape),
                ],
                out_specs=pl.BlockSpec((1, tq, E), lambda b, q: (b, q, 0)),
            ),
            compiler_params=pltpu.CompilerParams(
                dimension_semantics=("parallel", "parallel"),
                vmem_limit_bytes=64 * 1024 * 1024),
        )

    args = (x, x, wq, wk, wv, wfc_hm, w1c, b1f, w2c, b2f)
    try:
        return build(True)(*args)
    except Exception:
        # Fallback if this JAX build does not support pipeline_mode=pl.Buffered(1).
        return build(False)(*args)


def reference_forward(x, params, *, n_heads, attn_dim):
    # Pure-JAX f32 reference mirroring the PyTorch forward.
    wqkv, wfc, w1, b1, w2, b2 = params
    B, S, E = x.shape
    hd = attn_dim // n_heads

    res = x
    xn = _layernorm(x)
    qkv = xn @ wqkv
    q, k, v = jnp.split(qkv, 3, axis=-1)
    q = q.reshape(B, S, n_heads, hd)
    k = k.reshape(B, S, n_heads, hd)
    v = v.reshape(B, S, n_heads, hd)
    attn = jnp.einsum('bqnc,bknc->bnqk', q, k) / sqrt(hd)
    attn = jax.nn.softmax(attn, axis=-1)
    attn_val = jnp.einsum('bnqk,bknc->bqnc', attn, v).reshape(B, S, attn_dim)
    x = res + attn_val @ wfc
    res = x
    xn2 = _layernorm(x)
    h1 = xn2 @ w1 + b1
    x = res + _gelu_tanh(h1) @ w2 + b2
    return x


if __name__ == "__main__":
    # Small shapes consistent with the module
    B, S = 2, 8
    embed_dim, n_heads, attn_dim = 32, 4, 32
    mlp_dim = embed_dim * 4  # 128

    key = jax.random.PRNGKey(0)
    kx, k1, k2, k3, k4, k5, k6 = jax.random.split(key, 7)

    x = jax.random.normal(kx, (B, S, embed_dim), dtype=jnp.float32)

    scale = 0.02
    wqkv = scale * jax.random.normal(k1, (embed_dim, attn_dim * 3), jnp.float32)
    wfc = scale * jax.random.normal(k2, (attn_dim, embed_dim), jnp.float32)
    w1 = scale * jax.random.normal(k3, (embed_dim, mlp_dim), jnp.float32)
    b1 = scale * jax.random.normal(k4, (1, mlp_dim), jnp.float32)
    w2 = scale * jax.random.normal(k5, (mlp_dim, embed_dim), jnp.float32)
    b2 = scale * jax.random.normal(k6, (1, embed_dim), jnp.float32)
    params = (wqkv, wfc, w1, b1, w2, b2)

    out = transformer_layer(x, params, n_heads=n_heads, attn_dim=attn_dim)
    out = jax.block_until_ready(out)

    ref = reference_forward(x, params, n_heads=n_heads, attn_dim=attn_dim)
    assert out.shape == (B, S, embed_dim)
    # bf16 MXU operands + approx reciprocal -> loose tolerance vs f32 reference
    assert jnp.allclose(out, ref, atol=2e-2, rtol=2e-2), "mismatch vs reference"

    print("KERNEL_OK")
</pallas_src>

<mosaic_0001>
module attributes {stable_mosaic.version = 11 : i64} {
  func.func @transformer_layer_kernel(%arg0: i32, %arg1: i32, %arg2: memref<1x8x32xf32, #tpu.memory_space<vmem>>, %arg3: memref<1x8x32xf32, #tpu.memory_space<vmem>>, %arg4: memref<4x32x8xbf16, #tpu.memory_space<vmem>>, %arg5: memref<4x32x8xbf16, #tpu.memory_space<vmem>>, %arg6: memref<4x32x8xbf16, #tpu.memory_space<vmem>>, %arg7: memref<4x8x32xbf16, #tpu.memory_space<vmem>>, %arg8: memref<32x128xbf16, #tpu.memory_space<vmem>>, %arg9: memref<1x128xf32, #tpu.memory_space<vmem>>, %arg10: memref<128x32xbf16, #tpu.memory_space<vmem>>, %arg11: memref<1x32xf32, #tpu.memory_space<vmem>>, %arg12: memref<1x8x32xf32, #tpu.memory_space<vmem>>) attributes {dimension_semantics = [#tpu.dimension_semantics<parallel>, #tpu.dimension_semantics<parallel>], iteration_bounds = array<i64: 2, 1>, scalar_prefetch = 0 : i64, scratch_operands = 0 : i64, tpu.core_type = #tpu.core_type<tc>, window_params = [{transform_indices = @transform_0, window_bounds = array<i64: 1, 8, 32>}, {transform_indices = @transform_1, window_bounds = array<i64: 1, 8, 32>}, {pipeline_mode = #tpu.pipeline_mode<synchronous>, transform_indices = @transform_2, window_bounds = array<i64: 4, 32, 8>}, {pipeline_mode = #tpu.pipeline_mode<synchronous>, transform_indices = @transform_3, window_bounds = array<i64: 4, 32, 8>}, {pipeline_mode = #tpu.pipeline_mode<synchronous>, transform_indices = @transform_4, window_bounds = array<i64: 4, 32, 8>}, {pipeline_mode = #tpu.pipeline_mode<synchronous>, transform_indices = @transform_5, window_bounds = array<i64: 4, 8, 32>}, {pipeline_mode = #tpu.pipeline_mode<synchronous>, transform_indices = @transform_6, window_bounds = array<i64: 32, 128>}, {pipeline_mode = #tpu.pipeline_mode<synchronous>, transform_indices = @transform_7, window_bounds = array<i64: 1, 128>}, {pipeline_mode = #tpu.pipeline_mode<synchronous>, transform_indices = @transform_8, window_bounds = array<i64: 128, 32>}, {pipeline_mode = #tpu.pipeline_mode<synchronous>, transform_indices = @transform_9, window_bounds = array<i64: 1, 32>}, {transform_indices = @transform_10, window_bounds = array<i64: 1, 8, 32>}]} {
    %c0 = arith.constant 0 : index
    %c0_0 = arith.constant 0 : index
    %c0_1 = arith.constant 0 : index
    %0 = vector.load %arg2[%c0, %c0_0, %c0_1] : memref<1x8x32xf32, #tpu.memory_space<vmem>>, vector<1x8x32xf32>
    %1 = vector.shape_cast %0 : vector<1x8x32xf32> to vector<8x32xf32>
    %c0_2 = arith.constant 0 : index
    %c0_3 = arith.constant 0 : index
    %c0_4 = arith.constant 0 : index
    %2 = vector.load %arg3[%c0_2, %c0_3, %c0_4] : memref<1x8x32xf32, #tpu.memory_space<vmem>>, vector<1x8x32xf32>
    %3 = vector.shape_cast %2 : vector<1x8x32xf32> to vector<8x32xf32>
    %cst = arith.constant dense<0.000000e+00> : vector<8xf32>
    %4 = vector.multi_reduction <add>, %1, %cst [1] : vector<8x32xf32> to vector<8xf32>
    %5 = vector.shape_cast %4 : vector<8xf32> to vector<8x1xf32>
    %cst_5 = arith.constant 3.200000e+01 : f32
    %6 = vector.broadcast %cst_5 : f32 to vector<8x1xf32>
    %7 = arith.divf %5, %6 : vector<8x1xf32>
    %8 = vector.broadcast %7 : vector<8x1xf32> to vector<8x32xf32>
    %9 = arith.subf %1, %8 : vector<8x32xf32>
    %10 = arith.mulf %9, %9 : vector<8x32xf32>
    %cst_6 = arith.constant dense<0.000000e+00> : vector<8xf32>
    %11 = vector.multi_reduction <add>, %10, %cst_6 [1] : vector<8x32xf32> to vector<8xf32>
    %12 = vector.shape_cast %11 : vector<8xf32> to vector<8x1xf32>
    %cst_7 = arith.constant 3.200000e+01 : f32
    %13 = vector.broadcast %cst_7 : f32 to vector<8x1xf32>
    %14 = arith.divf %12, %13 : vector<8x1xf32>
    %15 = vector.broadcast %7 : vector<8x1xf32> to vector<8x32xf32>
    %16 = arith.subf %1, %15 : vector<8x32xf32>
    %cst_8 = arith.constant 9.99999974E-6 : f32
    %17 = vector.broadcast %cst_8 : f32 to vector<8x1xf32>
    %18 = arith.addf %14, %17 : vector<8x1xf32>
    %19 = math.rsqrt %18 : vector<8x1xf32>
    %20 = vector.broadcast %19 : vector<8x1xf32> to vector<8x32xf32>
    %21 = arith.mulf %16, %20 : vector<8x32xf32>
    %22 = arith.truncf %21 : vector<8x32xf32> to vector<8x32xbf16>
    %cst_9 = arith.constant dense<0.000000e+00> : vector<8xf32>
    %23 = vector.multi_reduction <add>, %3, %cst_9 [1] : vector<8x32xf32> to vector<8xf32>
    %24 = vector.shape_cast %23 : vector<8xf32> to vector<8x1xf32>
    %cst_10 = arith.constant 3.200000e+01 : f32
    %25 = vector.broadcast %cst_10 : f32 to vector<8x1xf32>
    %26 = arith.divf %24, %25 : vector<8x1xf32>
    %27 = vector.broadcast %26 : vector<8x1xf32> to vector<8x32xf32>
    %28 = arith.subf %3, %27 : vector<8x32xf32>
    %29 = arith.mulf %28, %28 : vector<8x32xf32>
    %cst_11 = arith.constant dense<0.000000e+00> : vector<8xf32>
    %30 = vector.multi_reduction <add>, %29, %cst_11 [1] : vector<8x32xf32> to vector<8xf32>
    %31 = vector.shape_cast %30 : vector<8xf32> to vector<8x1xf32>
    %cst_12 = arith.constant 3.200000e+01 : f32
    %32 = vector.broadcast %cst_12 : f32 to vector<8x1xf32>
    %33 = arith.divf %31, %32 : vector<8x1xf32>
    %34 = vector.broadcast %26 : vector<8x1xf32> to vector<8x32xf32>
    %35 = arith.subf %3, %34 : vector<8x32xf32>
    %cst_13 = arith.constant 9.99999974E-6 : f32
    %36 = vector.broadcast %cst_13 : f32 to vector<8x1xf32>
    %37 = arith.addf %33, %36 : vector<8x1xf32>
    %38 = math.rsqrt %37 : vector<8x1xf32>
    %39 = vector.broadcast %38 : vector<8x1xf32> to vector<8x32xf32>
    %40 = arith.mulf %35, %39 : vector<8x32xf32>
    %41 = arith.truncf %40 : vector<8x32xf32> to vector<8x32xbf16>
    %cst_14 = arith.constant 0.000000e+00 : f32
    %42 = vector.broadcast %cst_14 : f32 to vector<8x32xf32>
    %c0_15 = arith.constant 0 : index
    %c0_16 = arith.constant 0 : index
    %c0_17 = arith.constant 0 : index
    %43 = vector.load %arg4[%c0_15, %c0_16, %c0_17] : memref<4x32x8xbf16, #tpu.memory_space<vmem>>, vector<1x32x8xbf16>
    %44 = vector.shape_cast %43 : vector<1x32x8xbf16> to vector<32x8xbf16>
    %cst_18 = arith.constant dense<0.000000e+00> : vector<8x8xf32>
    %45 = tpu.matmul %22, %44, %cst_18 {dimension_numbers = #tpu.dot_dimension_numbers<[1], [0], [0], [1], [0, 0, 1, 1], [], []>} : vector<8x32xbf16>, vector<32x8xbf16>, vector<8x8xf32> -> vector<8x8xf32>
    %46 = arith.truncf %45 : vector<8x8xf32> to vector<8x8xbf16>
    %c0_19 = arith.constant 0 : index
    %c0_20 = arith.constant 0 : index
    %c0_21 = arith.constant 0 : index
    %47 = vector.load %arg5[%c0_19, %c0_20, %c0_21] : memref<4x32x8xbf16, #tpu.memory_space<vmem>>, vector<1x32x8xbf16>
    %48 = vector.shape_cast %47 : vector<1x32x8xbf16> to vector<32x8xbf16>
    %cst_22 = arith.constant dense<0.000000e+00> : vector<8x8xf32>
    %49 = tpu.matmul %41, %48, %cst_22 {dimension_numbers = #tpu.dot_dimension_numbers<[1], [0], [0], [1], [0, 0, 1, 1], [], []>} : vector<8x32xbf16>, vector<32x8xbf16>, vector<8x8xf32> -> vector<8x8xf32>
    %50 = arith.truncf %49 : vector<8x8xf32> to vector<8x8xbf16>
    %c0_23 = arith.constant 0 : index
    %c0_24 = arith.constant 0 : index
    %c0_25 = arith.constant 0 : index
    %51 = vector.load %arg6[%c0_23, %c0_24, %c0_25] : memref<4x32x8xbf16, #tpu.memory_space<vmem>>, vector<1x32x8xbf16>
    %52 = vector.shape_cast %51 : vector<1x32x8xbf16> to vector<32x8xbf16>
    %cst_26 = arith.constant dense<0.000000e+00> : vector<8x8xf32>
    %53 = tpu.matmul %41, %52, %cst_26 {dimension_numbers = #tpu.dot_dimension_numbers<[1], [0], [0], [1], [0, 0, 1, 1], [], []>} : vector<8x32xbf16>, vector<32x8xbf16>, vector<8x8xf32> -> vector<8x8xf32>
    %54 = arith.truncf %53 : vector<8x8xf32> to vector<8x8xbf16>
    "tpu.trace_start"() <{level = 10 : i32, message = "qd,kd->qk"}> : () -> ()
    %cst_27 = arith.constant dense<0.000000e+00> : vector<8x8xf32>
    %55 = tpu.matmul %46, %50, %cst_27 {dimension_numbers = #tpu.dot_dimension_numbers<[1], [1], [0], [0], [0, 0, 1, 0], [], []>} : vector<8x8xbf16>, vector<8x8xbf16>, vector<8x8xf32> -> vector<8x8xf32>
    "tpu.trace_stop"() : () -> ()
    %cst_28 = arith.constant dense<0xFF800000> : vector<8xf32>
    %56 = vector.multi_reduction <maximumf>, %55, %cst_28 [1] : vector<8x8xf32> to vector<8xf32>
    %57 = vector.shape_cast %56 : vector<8xf32> to vector<8x1xf32>
    %58 = vector.broadcast %57 : vector<8x1xf32> to vector<8x8xf32>
    %59 = arith.subf %55, %58 : vector<8x8xf32>
    %60 = math.exp %59 : vector<8x8xf32>
    %cst_29 = arith.constant dense<0.000000e+00> : vector<8xf32>
    %61 = vector.multi_reduction <add>, %60, %cst_29 [1] : vector<8x8xf32> to vector<8xf32>
    %62 = vector.shape_cast %61 : vector<8xf32> to vector<8x1xf32>
    %63 = tpu.reciprocal %62 {approx = true} : vector<8x1xf32> -> vector<8x1xf32>
    %64 = vector.broadcast %63 : vector<8x1xf32> to vector<8x8xf32>
    %65 = arith.mulf %60, %64 : vector<8x8xf32>
    %66 = arith.truncf %65 : vector<8x8xf32> to vector<8x8xbf16>
    %cst_30 = arith.constant dense<0.000000e+00> : vector<8x8xf32>
    %67 = tpu.matmul %66, %54, %cst_30 {dimension_numbers = #tpu.dot_dimension_numbers<[1], [0], [0], [1], [0, 0, 1, 1], [], []>} : vector<8x8xbf16>, vector<8x8xbf16>, vector<8x8xf32> -> vector<8x8xf32>
    %68 = arith.truncf %67 : vector<8x8xf32> to vector<8x8xbf16>
    %c0_31 = arith.constant 0 : index
    %c0_32 = arith.constant 0 : index
    %c0_33 = arith.constant 0 : index
    %69 = vector.load %arg7[%c0_31, %c0_32, %c0_33] : memref<4x8x32xbf16, #tpu.memory_space<vmem>>, vector<1x8x32xbf16>
    %70 = vector.shape_cast %69 : vector<1x8x32xbf16> to vector<8x32xbf16>
    %cst_34 = arith.constant dense<0.000000e+00> : vector<8x32xf32>
    %71 = tpu.matmul %68, %70, %cst_34 {dimension_numbers = #tpu.dot_dimension_numbers<[1], [0], [0], [1], [0, 0, 1, 1], [], []>} : vector<8x8xbf16>, vector<8x32xbf16>, vector<8x32xf32> -> vector<8x32xf32>
    %72 = arith.addf %42, %71 : vector<8x32xf32>
    %c1 = arith.constant 1 : index
    %c0_35 = arith.constant 0 : index
    %c0_36 = arith.constant 0 : index
    %73 = vector.load %arg4[%c1, %c0_35, %c0_36] : memref<4x32x8xbf16, #tpu.memory_space<vmem>>, vector<1x32x8xbf16>
    %74 = vector.shape_cast %73 : vector<1x32x8xbf16> to vector<32x8xbf16>
    %cst_37 = arith.constant dense<0.000000e+00> : vector<8x8xf32>
    %75 = tpu.matmul %22, %74, %cst_37 {dimension_numbers = #tpu.dot_dimension_numbers<[1], [0], [0], [1], [0, 0, 1, 1], [], []>} : vector<8x32xbf16>, vector<32x8xbf16>, vector<8x8xf32> -> vector<8x8xf32>
    %76 = arith.truncf %75 : vector<8x8xf32> to vector<8x8xbf16>
    %c1_38 = arith.constant 1 : index
    %c0_39 = arith.constant 0 : index
    %c0_40 = arith.constant 0 : index
    %77 = vector.load %arg5[%c1_38, %c0_39, %c0_40] : memref<4x32x8xbf16, #tpu.memory_space<vmem>>, vector<1x32x8xbf16>
    %78 = vector.shape_cast %77 : vector<1x32x8xbf16> to vector<32x8xbf16>
    %cst_41 = arith.constant dense<0.000000e+00> : vector<8x8xf32>
    %79 = tpu.matmul %41, %78, %cst_41 {dimension_numbers = #tpu.dot_dimension_numbers<[1], [0], [0], [1], [0, 0, 1, 1], [], []>} : vector<8x32xbf16>, vector<32x8xbf16>, vector<8x8xf32> -> vector<8x8xf32>
    %80 = arith.truncf %79 : vector<8x8xf32> to vector<8x8xbf16>
    %c1_42 = arith.constant 1 : index
    %c0_43 = arith.constant 0 : index
    %c0_44 = arith.constant 0 : index
    %81 = vector.load %arg6[%c1_42, %c0_43, %c0_44] : memref<4x32x8xbf16, #tpu.memory_space<vmem>>, vector<1x32x8xbf16>
    %82 = vector.shape_cast %81 : vector<1x32x8xbf16> to vector<32x8xbf16>
    %cst_45 = arith.constant dense<0.000000e+00> : vector<8x8xf32>
    %83 = tpu.matmul %41, %82, %cst_45 {dimension_numbers = #tpu.dot_dimension_numbers<[1], [0], [0], [1], [0, 0, 1, 1], [], []>} : vector<8x32xbf16>, vector<32x8xbf16>, vector<8x8xf32> -> vector<8x8xf32>
    %84 = arith.truncf %83 : vector<8x8xf32> to vector<8x8xbf16>
    "tpu.trace_start"() <{level = 10 : i32, message = "qd,kd->qk"}> : () -> ()
    %cst_46 = arith.constant dense<0.000000e+00> : vector<8x8xf32>
    %85 = tpu.matmul %76, %80, %cst_46 {dimension_numbers = #tpu.dot_dimension_numbers<[1], [1], [0], [0], [0, 0, 1, 0], [], []>} : vector<8x8xbf16>, vector<8x8xbf16>, vector<8x8xf32> -> vector<8x8xf32>
    "tpu.trace_stop"() : () -> ()
    %cst_47 = arith.constant dense<0xFF800000> : vector<8xf32>
    %86 = vector.multi_reduction <maximumf>, %85, %cst_47 [1] : vector<8x8xf32> to vector<8xf32>
    %87 = vector.shape_cast %86 : vector<8xf32> to vector<8x1xf32>
    %88 = vector.broadcast %87 : vector<8x1xf32> to vector<8x8xf32>
    %89 = arith.subf %85, %88 : vector<8x8xf32>
    %90 = math.exp %89 : vector<8x8xf32>
    %cst_48 = arith.constant dense<0.000000e+00> : vector<8xf32>
    %91 = vector.multi_reduction <add>, %90, %cst_48 [1] : vector<8x8xf32> to vector<8xf32>
    %92 = vector.shape_cast %91 : vector<8xf32> to vector<8x1xf32>
    %93 = tpu.reciprocal %92 {approx = true} : vector<8x1xf32> -> vector<8x1xf32>
    %94 = vector.broadcast %93 : vector<8x1xf32> to vector<8x8xf32>
    %95 = arith.mulf %90, %94 : vector<8x8xf32>
    %96 = arith.truncf %95 : vector<8x8xf32> to vector<8x8xbf16>
    %cst_49 = arith.constant dense<0.000000e+00> : vector<8x8xf32>
    %97 = tpu.matmul %96, %84, %cst_49 {dimension_numbers = #tpu.dot_dimension_numbers<[1], [0], [0], [1], [0, 0, 1, 1], [], []>} : vector<8x8xbf16>, vector<8x8xbf16>, vector<8x8xf32> -> vector<8x8xf32>
    %98 = arith.truncf %97 : vector<8x8xf32> to vector<8x8xbf16>
    %c1_50 = arith.constant 1 : index
    %c0_51 = arith.constant 0 : index
    %c0_52 = arith.constant 0 : index
    %99 = vector.load %arg7[%c1_50, %c0_51, %c0_52] : memref<4x8x32xbf16, #tpu.memory_space<vmem>>, vector<1x8x32xbf16>
    %100 = vector.shape_cast %99 : vector<1x8x32xbf16> to vector<8x32xbf16>
    %cst_53 = arith.constant dense<0.000000e+00> : vector<8x32xf32>
    %101 = tpu.matmul %98, %100, %cst_53 {dimension_numbers = #tpu.dot_dimension_numbers<[1], [0], [0], [1], [0, 0, 1, 1], [], []>} : vector<8x8xbf16>, vector<8x32xbf16>, vector<8x32xf32> -> vector<8x32xf32>
    %102 = arith.addf %72, %101 : vector<8x32xf32>
    %c2 = arith.constant 2 : index
    %c0_54 = arith.constant 0 : index
    %c0_55 = arith.constant 0 : index
    %103 = vector.load %arg4[%c2, %c0_54, %c0_55] : memref<4x32x8xbf16, #tpu.memory_space<vmem>>, vector<1x32x8xbf16>
    %104 = vector.shape_cast %103 : vector<1x32x8xbf16> to vector<32x8xbf16>
    %cst_56 = arith.constant dense<0.000000e+00> : vector<8x8xf32>
    %105 = tpu.matmul %22, %104, %cst_56 {dimension_numbers = #tpu.dot_dimension_numbers<[1], [0], [0], [1], [0, 0, 1, 1], [], []>} : vector<8x32xbf16>, vector<32x8xbf16>, vector<8x8xf32> -> vector<8x8xf32>
    %106 = arith.truncf %105 : vector<8x8xf32> to vector<8x8xbf16>
    %c2_57 = arith.constant 2 : index
    %c0_58 = arith.constant 0 : index
    %c0_59 = arith.constant 0 : index
    %107 = vector.load %arg5[%c2_57, %c0_58, %c0_59] : memref<4x32x8xbf16, #tpu.memory_space<vmem>>, vector<1x32x8xbf16>
    %108 = vector.shape_cast %107 : vector<1x32x8xbf16> to vector<32x8xbf16>
    %cst_60 = arith.constant dense<0.000000e+00> : vector<8x8xf32>
    %109 = tpu.matmul %41, %108, %cst_60 {dimension_numbers = #tpu.dot_dimension_numbers<[1], [0], [0], [1], [0, 0, 1, 1], [], []>} : vector<8x32xbf16>, vector<32x8xbf16>, vector<8x8xf32> -> vector<8x8xf32>
    %110 = arith.truncf %109 : vector<8x8xf32> to vector<8x8xbf16>
    %c2_61 = arith.constant 2 : index
    %c0_62 = arith.constant 0 : index
    %c0_63 = arith.constant 0 : index
    %111 = vector.load %arg6[%c2_61, %c0_62, %c0_63] : memref<4x32x8xbf16, #tpu.memory_space<vmem>>, vector<1x32x8xbf16>
    %112 = vector.shape_cast %111 : vector<1x32x8xbf16> to vector<32x8xbf16>
    %cst_64 = arith.constant dense<0.000000e+00> : vector<8x8xf32>
    %113 = tpu.matmul %41, %112, %cst_64 {dimension_numbers = #tpu.dot_dimension_numbers<[1], [0], [0], [1], [0, 0, 1, 1], [], []>} : vector<8x32xbf16>, vector<32x8xbf16>, vector<8x8xf32> -> vector<8x8xf32>
    %114 = arith.truncf %113 : vector<8x8xf32> to vector<8x8xbf16>
    "tpu.trace_start"() <{level = 10 : i32, message = "qd,kd->qk"}> : () -> ()
    %cst_65 = arith.constant dense<0.000000e+00> : vector<8x8xf32>
    %115 = tpu.matmul %106, %110, %cst_65 {dimension_numbers = #tpu.dot_dimension_numbers<[1], [1], [0], [0], [0, 0, 1, 0], [], []>} : vector<8x8xbf16>, vector<8x8xbf16>, vector<8x8xf32> -> vector<8x8xf32>
    "tpu.trace_stop"() : () -> ()
    %cst_66 = arith.constant dense<0xFF800000> : vector<8xf32>
    %116 = vector.multi_reduction <maximumf>, %115, %cst_66 [1] : vector<8x8xf32> to vector<8xf32>
    %117 = vector.shape_cast %116 : vector<8xf32> to vector<8x1xf32>
    %118 = vector.broadcast %117 : vector<8x1xf32> to vector<8x8xf32>
    %119 = arith.subf %115, %118 : vector<8x8xf32>
    %120 = math.exp %119 : vector<8x8xf32>
    %cst_67 = arith.constant dense<0.000000e+00> : vector<8xf32>
    %121 = vector.multi_reduction <add>, %120, %cst_67 [1] : vector<8x8xf32> to vector<8xf32>
    %122 = vector.shape_cast %121 : vector<8xf32> to vector<8x1xf32>
    %123 = tpu.reciprocal %122 {approx = true} : vector<8x1xf32> -> vector<8x1xf32>
    %124 = vector.broadcast %123 : vector<8x1xf32> to vector<8x8xf32>
    %125 = arith.mulf %120, %124 : vector<8x8xf32>
    %126 = arith.truncf %125 : vector<8x8xf32> to vector<8x8xbf16>
    %cst_68 = arith.constant dense<0.000000e+00> : vector<8x8xf32>
    %127 = tpu.matmul %126, %114, %cst_68 {dimension_numbers = #tpu.dot_dimension_numbers<[1], [0], [0], [1], [0, 0, 1, 1], [], []>} : vector<8x8xbf16>, vector<8x8xbf16>, vector<8x8xf32> -> vector<8x8xf32>
    %128 = arith.truncf %127 : vector<8x8xf32> to vector<8x8xbf16>
    %c2_69 = arith.constant 2 : index
    %c0_70 = arith.constant 0 : index
    %c0_71 = arith.constant 0 : index
    %129 = vector.load %arg7[%c2_69, %c0_70, %c0_71] : memref<4x8x32xbf16, #tpu.memory_space<vmem>>, vector<1x8x32xbf16>
    %130 = vector.shape_cast %129 : vector<1x8x32xbf16> to vector<8x32xbf16>
    %cst_72 = arith.constant dense<0.000000e+00> : vector<8x32xf32>
    %131 = tpu.matmul %128, %130, %cst_72 {dimension_numbers = #tpu.dot_dimension_numbers<[1], [0], [0], [1], [0, 0, 1, 1], [], []>} : vector<8x8xbf16>, vector<8x32xbf16>, vector<8x32xf32> -> vector<8x32xf32>
    %132 = arith.addf %102, %131 : vector<8x32xf32>
    %c3 = arith.constant 3 : index
    %c0_73 = arith.constant 0 : index
    %c0_74 = arith.constant 0 : index
    %133 = vector.load %arg4[%c3, %c0_73, %c0_74] : memref<4x32x8xbf16, #tpu.memory_space<vmem>>, vector<1x32x8xbf16>
    %134 = vector.shape_cast %133 : vector<1x32x8xbf16> to vector<32x8xbf16>
    %cst_75 = arith.constant dense<0.000000e+00> : vector<8x8xf32>
    %135 = tpu.matmul %22, %134, %cst_75 {dimension_numbers = #tpu.dot_dimension_numbers<[1], [0], [0], [1], [0, 0, 1, 1], [], []>} : vector<8x32xbf16>, vector<32x8xbf16>, vector<8x8xf32> -> vector<8x8xf32>
    %136 = arith.truncf %135 : vector<8x8xf32> to vector<8x8xbf16>
    %c3_76 = arith.constant 3 : index
    %c0_77 = arith.constant 0 : index
    %c0_78 = arith.constant 0 : index
    %137 = vector.load %arg5[%c3_76, %c0_77, %c0_78] : memref<4x32x8xbf16, #tpu.memory_space<vmem>>, vector<1x32x8xbf16>
    %138 = vector.shape_cast %137 : vector<1x32x8xbf16> to vector<32x8xbf16>
    %cst_79 = arith.constant dense<0.000000e+00> : vector<8x8xf32>
    %139 = tpu.matmul %41, %138, %cst_79 {dimension_numbers = #tpu.dot_dimension_numbers<[1], [0], [0], [1], [0, 0, 1, 1], [], []>} : vector<8x32xbf16>, vector<32x8xbf16>, vector<8x8xf32> -> vector<8x8xf32>
    %140 = arith.truncf %139 : vector<8x8xf32> to vector<8x8xbf16>
    %c3_80 = arith.constant 3 : index
    %c0_81 = arith.constant 0 : index
    %c0_82 = arith.constant 0 : index
    %141 = vector.load %arg6[%c3_80, %c0_81, %c0_82] : memref<4x32x8xbf16, #tpu.memory_space<vmem>>, vector<1x32x8xbf16>
    %142 = vector.shape_cast %141 : vector<1x32x8xbf16> to vector<32x8xbf16>
    %cst_83 = arith.constant dense<0.000000e+00> : vector<8x8xf32>
    %143 = tpu.matmul %41, %142, %cst_83 {dimension_numbers = #tpu.dot_dimension_numbers<[1], [0], [0], [1], [0, 0, 1, 1], [], []>} : vector<8x32xbf16>, vector<32x8xbf16>, vector<8x8xf32> -> vector<8x8xf32>
    %144 = arith.truncf %143 : vector<8x8xf32> to vector<8x8xbf16>
    "tpu.trace_start"() <{level = 10 : i32, message = "qd,kd->qk"}> : () -> ()
    %cst_84 = arith.constant dense<0.000000e+00> : vector<8x8xf32>
    %145 = tpu.matmul %136, %140, %cst_84 {dimension_numbers = #tpu.dot_dimension_numbers<[1], [1], [0], [0], [0, 0, 1, 0], [], []>} : vector<8x8xbf16>, vector<8x8xbf16>, vector<8x8xf32> -> vector<8x8xf32>
    "tpu.trace_stop"() : () -> ()
    %cst_85 = arith.constant dense<0xFF800000> : vector<8xf32>
    %146 = vector.multi_reduction <maximumf>, %145, %cst_85 [1] : vector<8x8xf32> to vector<8xf32>
    %147 = vector.shape_cast %146 : vector<8xf32> to vector<8x1xf32>
    %148 = vector.broadcast %147 : vector<8x1xf32> to vector<8x8xf32>
    %149 = arith.subf %145, %148 : vector<8x8xf32>
    %150 = math.exp %149 : vector<8x8xf32>
    %cst_86 = arith.constant dense<0.000000e+00> : vector<8xf32>
    %151 = vector.multi_reduction <add>, %150, %cst_86 [1] : vector<8x8xf32> to vector<8xf32>
    %152 = vector.shape_cast %151 : vector<8xf32> to vector<8x1xf32>
    %153 = tpu.reciprocal %152 {approx = true} : vector<8x1xf32> -> vector<8x1xf32>
    %154 = vector.broadcast %153 : vector<8x1xf32> to vector<8x8xf32>
    %155 = arith.mulf %150, %154 : vector<8x8xf32>
    %156 = arith.truncf %155 : vector<8x8xf32> to vector<8x8xbf16>
    %cst_87 = arith.constant dense<0.000000e+00> : vector<8x8xf32>
    %157 = tpu.matmul %156, %144, %cst_87 {dimension_numbers = #tpu.dot_dimension_numbers<[1], [0], [0], [1], [0, 0, 1, 1], [], []>} : vector<8x8xbf16>, vector<8x8xbf16>, vector<8x8xf32> -> vector<8x8xf32>
    %158 = arith.truncf %157 : vector<8x8xf32> to vector<8x8xbf16>
    %c3_88 = arith.constant 3 : index
    %c0_89 = arith.constant 0 : index
    %c0_90 = arith.constant 0 : index
    %159 = vector.load %arg7[%c3_88, %c0_89, %c0_90] : memref<4x8x32xbf16, #tpu.memory_space<vmem>>, vector<1x8x32xbf16>
    %160 = vector.shape_cast %159 : vector<1x8x32xbf16> to vector<8x32xbf16>
    %cst_91 = arith.constant dense<0.000000e+00> : vector<8x32xf32>
    %161 = tpu.matmul %158, %160, %cst_91 {dimension_numbers = #tpu.dot_dimension_numbers<[1], [0], [0], [1], [0, 0, 1, 1], [], []>} : vector<8x8xbf16>, vector<8x32xbf16>, vector<8x32xf32> -> vector<8x32xf32>
    %162 = arith.addf %132, %161 : vector<8x32xf32>
    %163 = arith.addf %1, %162 : vector<8x32xf32>
    %cst_92 = arith.constant dense<0.000000e+00> : vector<8xf32>
    %164 = vector.multi_reduction <add>, %163, %cst_92 [1] : vector<8x32xf32> to vector<8xf32>
    %165 = vector.shape_cast %164 : vector<8xf32> to vector<8x1xf32>
    %cst_93 = arith.constant 3.200000e+01 : f32
    %166 = vector.broadcast %cst_93 : f32 to vector<8x1xf32>
    %167 = arith.divf %165, %166 : vector<8x1xf32>
    %168 = vector.broadcast %167 : vector<8x1xf32> to vector<8x32xf32>
    %169 = arith.subf %163, %168 : vector<8x32xf32>
    %170 = arith.mulf %169, %169 : vector<8x32xf32>
    %cst_94 = arith.constant dense<0.000000e+00> : vector<8xf32>
    %171 = vector.multi_reduction <add>, %170, %cst_94 [1] : vector<8x32xf32> to vector<8xf32>
    %172 = vector.shape_cast %171 : vector<8xf32> to vector<8x1xf32>
    %cst_95 = arith.constant 3.200000e+01 : f32
    %173 = vector.broadcast %cst_95 : f32 to vector<8x1xf32>
    %174 = arith.divf %172, %173 : vector<8x1xf32>
    %175 = vector.broadcast %167 : vector<8x1xf32> to vector<8x32xf32>
    %176 = arith.subf %163, %175 : vector<8x32xf32>
    %cst_96 = arith.constant 9.99999974E-6 : f32
    %177 = vector.broadcast %cst_96 : f32 to vector<8x1xf32>
    %178 = arith.addf %174, %177 : vector<8x1xf32>
    %179 = math.rsqrt %178 : vector<8x1xf32>
    %180 = vector.broadcast %179 : vector<8x1xf32> to vector<8x32xf32>
    %181 = arith.mulf %176, %180 : vector<8x32xf32>
    %182 = arith.truncf %181 : vector<8x32xf32> to vector<8x32xbf16>
    %c0_97 = arith.constant 0 : index
    %c0_98 = arith.constant 0 : index
    %183 = vector.load %arg8[%c0_97, %c0_98] : memref<32x128xbf16, #tpu.memory_space<vmem>>, vector<32x128xbf16>
    %cst_99 = arith.constant dense<0.000000e+00> : vector<8x128xf32>
    %184 = tpu.matmul %182, %183, %cst_99 {dimension_numbers = #tpu.dot_dimension_numbers<[1], [0], [0], [1], [0, 0, 1, 1], [], []>} : vector<8x32xbf16>, vector<32x128xbf16>, vector<8x128xf32> -> vector<8x128xf32>
    %c0_100 = arith.constant 0 : index
    %c0_101 = arith.constant 0 : index
    %185 = vector.load %arg9[%c0_100, %c0_101] : memref<1x128xf32, #tpu.memory_space<vmem>>, vector<1x128xf32>
    %186 = vector.broadcast %185 : vector<1x128xf32> to vector<8x128xf32>
    %187 = arith.addf %184, %186 : vector<8x128xf32>
    %cst_102 = arith.constant 5.000000e-01 : f32
    %188 = vector.broadcast %cst_102 : f32 to vector<8x128xf32>
    %189 = arith.mulf %188, %187 : vector<8x128xf32>
    %cst_103 = arith.constant 4.471500e-02 : f32
    %190 = vector.broadcast %cst_103 : f32 to vector<8x128xf32>
    %191 = arith.mulf %190, %187 : vector<8x128xf32>
    %192 = arith.mulf %191, %187 : vector<8x128xf32>
    %193 = arith.mulf %192, %187 : vector<8x128xf32>
    %194 = arith.addf %187, %193 : vector<8x128xf32>
    %cst_104 = arith.constant 0.797884583 : f32
    %195 = vector.broadcast %cst_104 : f32 to vector<8x128xf32>
    %196 = arith.mulf %195, %194 : vector<8x128xf32>
    %197 = math.tanh %196 : vector<8x128xf32>
    %cst_105 = arith.constant 1.000000e+00 : f32
    %198 = vector.broadcast %cst_105 : f32 to vector<8x128xf32>
    %199 = arith.addf %198, %197 : vector<8x128xf32>
    %200 = arith.mulf %189, %199 : vector<8x128xf32>
    %201 = arith.truncf %200 : vector<8x128xf32> to vector<8x128xbf16>
    %c0_106 = arith.constant 0 : index
    %c0_107 = arith.constant 0 : index
    %202 = vector.load %arg10[%c0_106, %c0_107] : memref<128x32xbf16, #tpu.memory_space<vmem>>, vector<128x32xbf16>
    %cst_108 = arith.constant dense<0.000000e+00> : vector<8x32xf32>
    %203 = tpu.matmul %201, %202, %cst_108 {dimension_numbers = #tpu.dot_dimension_numbers<[1], [0], [0], [1], [0, 0, 1, 1], [], []>} : vector<8x128xbf16>, vector<128x32xbf16>, vector<8x32xf32> -> vector<8x32xf32>
    %204 = arith.addf %163, %203 : vector<8x32xf32>
    %c0_109 = arith.constant 0 : index
    %c0_110 = arith.constant 0 : index
    %205 = vector.load %arg11[%c0_109, %c0_110] : memref<1x32xf32, #tpu.memory_space<vmem>>, vector<1x32xf32>
    %206 = vector.broadcast %205 : vector<1x32xf32> to vector<8x32xf32>
    %207 = arith.addf %204, %206 : vector<8x32xf32>
    %208 = vector.shape_cast %207 : vector<8x32xf32> to vector<1x8x32xf32>
    %c0_111 = arith.constant 0 : index
    %c0_112 = arith.constant 0 : index
    %c0_113 = arith.constant 0 : index
    %209 = vector.load %arg12[%c0_111, %c0_112, %c0_113] : memref<1x8x32xf32, #tpu.memory_space<vmem>>, vector<1x8x32xf32>
    tpu.vector_store %arg12[%c0_111, %c0_112, %c0_113], %208 {strides = array<i32>} : memref<1x8x32xf32, #tpu.memory_space<vmem>>, vector<1x8x32xf32>,
    return
  }
  func.func @transform_0(%arg0: i32, %arg1: i32) -> (i32, i32, i32) {
    %c0_i32 = arith.constant 0 : i32
    %c0_i32_0 = arith.constant 0 : i32
    return %arg0, %arg1, %c0_i32 : i32, i32, i32
  }
  func.func @transform_1(%arg0: i32, %arg1: i32) -> (i32, i32, i32) {
    %c0_i32 = arith.constant 0 : i32
    %c0_i32_0 = arith.constant 0 : i32
    %c0_i32_1 = arith.constant 0 : i32
    return %arg0, %c0_i32, %c0_i32_0 : i32, i32, i32
  }
  func.func @transform_2(%arg0: i32, %arg1: i32) -> (i32, i32, i32) {
    %c0_i32 = arith.constant 0 : i32
    %c0_i32_0 = arith.constant 0 : i32
    %c0_i32_1 = arith.constant 0 : i32
    %c0_i32_2 = arith.constant 0 : i32
    return %c0_i32, %c0_i32_0, %c0_i32_1 : i32, i32, i32
  }
  func.func @transform_3(%arg0: i32, %arg1: i32) -> (i32, i32, i32) {
    %c0_i32 = arith.constant 0 : i32
    %c0_i32_0 = arith.constant 0 : i32
    %c0_i32_1 = arith.constant 0 : i32
    %c0_i32_2 = arith.constant 0 : i32
    return %c0_i32, %c0_i32_0, %c0_i32_1 : i32, i32, i32
  }
  func.func @transform_4(%arg0: i32, %arg1: i32) -> (i32, i32, i32) {
    %c0_i32 = arith.constant 0 : i32
    %c0_i32_0 = arith.constant 0 : i32
    %c0_i32_1 = arith.constant 0 : i32
    %c0_i32_2 = arith.constant 0 : i32
    return %c0_i32, %c0_i32_0, %c0_i32_1 : i32, i32, i32
  }
  func.func @transform_5(%arg0: i32, %arg1: i32) -> (i32, i32, i32) {
    %c0_i32 = arith.constant 0 : i32
    %c0_i32_0 = arith.constant 0 : i32
    %c0_i32_1 = arith.constant 0 : i32
    %c0_i32_2 = arith.constant 0 : i32
    return %c0_i32, %c0_i32_0, %c0_i32_1 : i32, i32, i32
  }
  func.func @transform_6(%arg0: i32, %arg1: i32) -> (i32, i32) {
    %c0_i32 = arith.constant 0 : i32
    %c0_i32_0 = arith.constant 0 : i32
    %c0_i32_1 = arith.constant 0 : i32
    return %c0_i32, %c0_i32_0 : i32, i32
  }
  func.func @transform_7(%arg0: i32, %arg1: i32) -> (i32, i32) {
    %c0_i32 = arith.constant 0 : i32
    %c0_i32_0 = arith.constant 0 : i32
    %c0_i32_1 = arith.constant 0 : i32
    return %c0_i32, %c0_i32_0 : i32, i32
  }
  func.func @transform_8(%arg0: i32, %arg1: i32) -> (i32, i32) {
    %c0_i32 = arith.constant 0 : i32
    %c0_i32_0 = arith.constant 0 : i32
    %c0_i32_1 = arith.constant 0 : i32
    return %c0_i32, %c0_i32_0 : i32, i32
  }
  func.func @transform_9(%arg0: i32, %arg1: i32) -> (i32, i32) {
    %c0_i32 = arith.constant 0 : i32
    %c0_i32_0 = arith.constant 0 : i32
    %c0_i32_1 = arith.constant 0 : i32
    return %c0_i32, %c0_i32_0 : i32, i32
  }
  func.func @transform_10(%arg0: i32, %arg1: i32) -> (i32, i32, i32) {
    %c0_i32 = arith.constant 0 : i32
    %c0_i32_0 = arith.constant 0 : i32
    return %arg0, %arg1, %c0_i32 : i32, i32, i32
  }
}

module attributes {stable_mosaic.version = 11 : i64} {
  func.func @transformer_layer_kernel(%arg0: i32, %arg1: i32, %arg2: memref<1x8x32xf32, #tpu.memory_space<vmem>>, %arg3: memref<1x8x32xf32, #tpu.memory_space<vmem>>, %arg4: memref<4x32x8xbf16, #tpu.memory_space<vmem>>, %arg5: memref<4x32x8xbf16, #tpu.memory_space<vmem>>, %arg6: memref<4x32x8xbf16, #tpu.memory_space<vmem>>, %arg7: memref<4x8x32xbf16, #tpu.memory_space<vmem>>, %arg8: memref<32x128xbf16, #tpu.memory_space<vmem>>, %arg9: memref<1x128xf32, #tpu.memory_space<vmem>>, %arg10: memref<128x32xbf16, #tpu.memory_space<vmem>>, %arg11: memref<1x32xf32, #tpu.memory_space<vmem>>, %arg12: memref<1x8x32xf32, #tpu.memory_space<vmem>>) attributes {dimension_semantics = [#tpu.dimension_semantics<parallel>, #tpu.dimension_semantics<parallel>], iteration_bounds = array<i64: 2, 1>, scalar_prefetch = 0 : i64, scratch_operands = 0 : i64, tpu.core_type = #tpu.core_type<tc>, window_params = [{transform_indices = @transform_0, window_bounds = array<i64: 1, 8, 32>}, {transform_indices = @transform_1, window_bounds = array<i64: 1, 8, 32>}, {pipeline_mode = #tpu.pipeline_mode<synchronous>, transform_indices = @transform_2, window_bounds = array<i64: 4, 32, 8>}, {pipeline_mode = #tpu.pipeline_mode<synchronous>, transform_indices = @transform_3, window_bounds = array<i64: 4, 32, 8>}, {pipeline_mode = #tpu.pipeline_mode<synchronous>, transform_indices = @transform_4, window_bounds = array<i64: 4, 32, 8>}, {pipeline_mode = #tpu.pipeline_mode<synchronous>, transform_indices = @transform_5, window_bounds = array<i64: 4, 8, 32>}, {pipeline_mode = #tpu.pipeline_mode<synchronous>, transform_indices = @transform_6, window_bounds = array<i64: 32, 128>}, {pipeline_mode = #tpu.pipeline_mode<synchronous>, transform_indices = @transform_7, window_bounds = array<i64: 1, 128>}, {pipeline_mode = #tpu.pipeline_mode<synchronous>, transform_indices = @transform_8, window_bounds = array<i64: 128, 32>}, {pipeline_mode = #tpu.pipeline_mode<synchronous>, transform_indices = @transform_9, window_bounds = array<i64: 1, 32>}, {transform_indices = @transform_10, window_bounds = array<i64: 1, 8, 32>}]} {
    %c0 = arith.constant 0 : index
    %c0_0 = arith.constant 0 : index
    %c0_1 = arith.constant 0 : index
    %0 = vector.load %arg2[%c0, %c0_0, %c0_1] : memref<1x8x32xf32, #tpu.memory_space<vmem>>, vector<1x8x32xf32>
    %1 = vector.shape_cast %0 : vector<1x8x32xf32> to vector<8x32xf32>
    %c0_2 = arith.constant 0 : index
    %c0_3 = arith.constant 0 : index
    %c0_4 = arith.constant 0 : index
    %2 = vector.load %arg3[%c0_2, %c0_3, %c0_4] : memref<1x8x32xf32, #tpu.memory_space<vmem>>, vector<1x8x32xf32>
    %3 = vector.shape_cast %2 : vector<1x8x32xf32> to vector<8x32xf32>
    %cst = arith.constant dense<0.000000e+00> : vector<8xf32>
    %4 = vector.multi_reduction <add>, %1, %cst [1] : vector<8x32xf32> to vector<8xf32>
    %5 = vector.shape_cast %4 : vector<8xf32> to vector<8x1xf32>
    %cst_5 = arith.constant 3.200000e+01 : f32
    %6 = vector.broadcast %cst_5 : f32 to vector<8x1xf32>
    %7 = arith.divf %5, %6 : vector<8x1xf32>
    %8 = vector.broadcast %7 : vector<8x1xf32> to vector<8x32xf32>
    %9 = arith.subf %1, %8 : vector<8x32xf32>
    %10 = arith.mulf %9, %9 : vector<8x32xf32>
    %cst_6 = arith.constant dense<0.000000e+00> : vector<8xf32>
    %11 = vector.multi_reduction <add>, %10, %cst_6 [1] : vector<8x32xf32> to vector<8xf32>
    %12 = vector.shape_cast %11 : vector<8xf32> to vector<8x1xf32>
    %cst_7 = arith.constant 3.200000e+01 : f32
    %13 = vector.broadcast %cst_7 : f32 to vector<8x1xf32>
    %14 = arith.divf %12, %13 : vector<8x1xf32>
    %15 = vector.broadcast %7 : vector<8x1xf32> to vector<8x32xf32>
    %16 = arith.subf %1, %15 : vector<8x32xf32>
    %cst_8 = arith.constant 9.99999974E-6 : f32
    %17 = vector.broadcast %cst_8 : f32 to vector<8x1xf32>
    %18 = arith.addf %14, %17 : vector<8x1xf32>
    %19 = math.rsqrt %18 : vector<8x1xf32>
    %20 = vector.broadcast %19 : vector<8x1xf32> to vector<8x32xf32>
    %21 = arith.mulf %16, %20 : vector<8x32xf32>
    %22 = arith.truncf %21 : vector<8x32xf32> to vector<8x32xbf16>
    %cst_9 = arith.constant dense<0.000000e+00> : vector<8xf32>
    %23 = vector.multi_reduction <add>, %3, %cst_9 [1] : vector<8x32xf32> to vector<8xf32>
    %24 = vector.shape_cast %23 : vector<8xf32> to vector<8x1xf32>
    %cst_10 = arith.constant 3.200000e+01 : f32
    %25 = vector.broadcast %cst_10 : f32 to vector<8x1xf32>
    %26 = arith.divf %24, %25 : vector<8x1xf32>
    %27 = vector.broadcast %26 : vector<8x1xf32> to vector<8x32xf32>
    %28 = arith.subf %3, %27 : vector<8x32xf32>
    %29 = arith.mulf %28, %28 : vector<8x32xf32>
    %cst_11 = arith.constant dense<0.000000e+00> : vector<8xf32>
    %30 = vector.multi_reduction <add>, %29, %cst_11 [1] : vector<8x32xf32> to vector<8xf32>
    %31 = vector.shape_cast %30 : vector<8xf32> to vector<8x1xf32>
    %cst_12 = arith.constant 3.200000e+01 : f32
    %32 = vector.broadcast %cst_12 : f32 to vector<8x1xf32>
    %33 = arith.divf %31, %32 : vector<8x1xf32>
    %34 = vector.broadcast %26 : vector<8x1xf32> to vector<8x32xf32>
    %35 = arith.subf %3, %34 : vector<8x32xf32>
    %cst_13 = arith.constant 9.99999974E-6 : f32
    %36 = vector.broadcast %cst_13 : f32 to vector<8x1xf32>
    %37 = arith.addf %33, %36 : vector<8x1xf32>
    %38 = math.rsqrt %37 : vector<8x1xf32>
    %39 = vector.broadcast %38 : vector<8x1xf32> to vector<8x32xf32>
    %40 = arith.mulf %35, %39 : vector<8x32xf32>
    %41 = arith.truncf %40 : vector<8x32xf32> to vector<8x32xbf16>
    %cst_14 = arith.constant 0.000000e+00 : f32
    %42 = vector.broadcast %cst_14 : f32 to vector<8x32xf32>
    %c0_15 = arith.constant 0 : index
    %c0_16 = arith.constant 0 : index
    %c0_17 = arith.constant 0 : index
    %43 = vector.load %arg4[%c0_15, %c0_16, %c0_17] : memref<4x32x8xbf16, #tpu.memory_space<vmem>>, vector<1x32x8xbf16>
    %44 = vector.shape_cast %43 : vector<1x32x8xbf16> to vector<32x8xbf16>
    %cst_18 = arith.constant dense<0.000000e+00> : vector<8x8xf32>
    %45 = tpu.matmul %22, %44, %cst_18 {dimension_numbers = #tpu.dot_dimension_numbers<[1], [0], [0], [1], [0, 0, 1, 1], [], []>} : vector<8x32xbf16>, vector<32x8xbf16>, vector<8x8xf32> -> vector<8x8xf32>
    %46 = arith.truncf %45 : vector<8x8xf32> to vector<8x8xbf16>
    %c0_19 = arith.constant 0 : index
    %c0_20 = arith.constant 0 : index
    %c0_21 = arith.constant 0 : index
    %47 = vector.load %arg5[%c0_19, %c0_20, %c0_21] : memref<4x32x8xbf16, #tpu.memory_space<vmem>>, vector<1x32x8xbf16>
    %48 = vector.shape_cast %47 : vector<1x32x8xbf16> to vector<32x8xbf16>
    %cst_22 = arith.constant dense<0.000000e+00> : vector<8x8xf32>
    %49 = tpu.matmul %41, %48, %cst_22 {dimension_numbers = #tpu.dot_dimension_numbers<[1], [0], [0], [1], [0, 0, 1, 1], [], []>} : vector<8x32xbf16>, vector<32x8xbf16>, vector<8x8xf32> -> vector<8x8xf32>
    %50 = arith.truncf %49 : vector<8x8xf32> to vector<8x8xbf16>
    %c0_23 = arith.constant 0 : index
    %c0_24 = arith.constant 0 : index
    %c0_25 = arith.constant 0 : index
    %51 = vector.load %arg6[%c0_23, %c0_24, %c0_25] : memref<4x32x8xbf16, #tpu.memory_space<vmem>>, vector<1x32x8xbf16>
    %52 = vector.shape_cast %51 : vector<1x32x8xbf16> to vector<32x8xbf16>
    %cst_26 = arith.constant dense<0.000000e+00> : vector<8x8xf32>
    %53 = tpu.matmul %41, %52, %cst_26 {dimension_numbers = #tpu.dot_dimension_numbers<[1], [0], [0], [1], [0, 0, 1, 1], [], []>} : vector<8x32xbf16>, vector<32x8xbf16>, vector<8x8xf32> -> vector<8x8xf32>
    %54 = arith.truncf %53 : vector<8x8xf32> to vector<8x8xbf16>
    "tpu.trace_start"() <{level = 10 : i32, message = "qd,kd->qk"}> : () -> ()
    %cst_27 = arith.constant dense<0.000000e+00> : vector<8x8xf32>
    %55 = tpu.matmul %46, %50, %cst_27 {dimension_numbers = #tpu.dot_dimension_numbers<[1], [1], [0], [0], [0, 0, 1, 0], [], []>} : vector<8x8xbf16>, vector<8x8xbf16>, vector<8x8xf32> -> vector<8x8xf32>
    "tpu.trace_stop"() : () -> ()
    %cst_28 = arith.constant dense<0xFF800000> : vector<8xf32>
    %56 = vector.multi_reduction <maximumf>, %55, %cst_28 [1] : vector<8x8xf32> to vector<8xf32>
    %57 = vector.shape_cast %56 : vector<8xf32> to vector<8x1xf32>
    %58 = vector.broadcast %57 : vector<8x1xf32> to vector<8x8xf32>
    %59 = arith.subf %55, %58 : vector<8x8xf32>
    %60 = math.exp %59 : vector<8x8xf32>
    %cst_29 = arith.constant dense<0.000000e+00> : vector<8xf32>
    %61 = vector.multi_reduction <add>, %60, %cst_29 [1] : vector<8x8xf32> to vector<8xf32>
    %62 = vector.shape_cast %61 : vector<8xf32> to vector<8x1xf32>
    %63 = tpu.reciprocal %62 {approx = true} : vector<8x1xf32> -> vector<8x1xf32>
    %64 = vector.broadcast %63 : vector<8x1xf32> to vector<8x8xf32>
    %65 = arith.mulf %60, %64 : vector<8x8xf32>
    %66 = arith.truncf %65 : vector<8x8xf32> to vector<8x8xbf16>
    %cst_30 = arith.constant dense<0.000000e+00> : vector<8x8xf32>
    %67 = tpu.matmul %66, %54, %cst_30 {dimension_numbers = #tpu.dot_dimension_numbers<[1], [0], [0], [1], [0, 0, 1, 1], [], []>} : vector<8x8xbf16>, vector<8x8xbf16>, vector<8x8xf32> -> vector<8x8xf32>
    %68 = arith.truncf %67 : vector<8x8xf32> to vector<8x8xbf16>
    %c0_31 = arith.constant 0 : index
    %c0_32 = arith.constant 0 : index
    %c0_33 = arith.constant 0 : index
    %69 = vector.load %arg7[%c0_31, %c0_32, %c0_33] : memref<4x8x32xbf16, #tpu.memory_space<vmem>>, vector<1x8x32xbf16>
    %70 = vector.shape_cast %69 : vector<1x8x32xbf16> to vector<8x32xbf16>
    %cst_34 = arith.constant dense<0.000000e+00> : vector<8x32xf32>
    %71 = tpu.matmul %68, %70, %cst_34 {dimension_numbers = #tpu.dot_dimension_numbers<[1], [0], [0], [1], [0, 0, 1, 1], [], []>} : vector<8x8xbf16>, vector<8x32xbf16>, vector<8x32xf32> -> vector<8x32xf32>
    %72 = arith.addf %42, %71 : vector<8x32xf32>
    %c1 = arith.constant 1 : index
    %c0_35 = arith.constant 0 : index
    %c0_36 = arith.constant 0 : index
    %73 = vector.load %arg4[%c1, %c0_35, %c0_36] : memref<4x32x8xbf16, #tpu.memory_space<vmem>>, vector<1x32x8xbf16>
    %74 = vector.shape_cast %73 : vector<1x32x8xbf16> to vector<32x8xbf16>
    %cst_37 = arith.constant dense<0.000000e+00> : vector<8x8xf32>
    %75 = tpu.matmul %22, %74, %cst_37 {dimension_numbers = #tpu.dot_dimension_numbers<[1], [0], [0], [1], [0, 0, 1, 1], [], []>} : vector<8x32xbf16>, vector<32x8xbf16>, vector<8x8xf32> -> vector<8x8xf32>
    %76 = arith.truncf %75 : vector<8x8xf32> to vector<8x8xbf16>
    %c1_38 = arith.constant 1 : index
    %c0_39 = arith.constant 0 : index
    %c0_40 = arith.constant 0 : index
    %77 = vector.load %arg5[%c1_38, %c0_39, %c0_40] : memref<4x32x8xbf16, #tpu.memory_space<vmem>>, vector<1x32x8xbf16>
    %78 = vector.shape_cast %77 : vector<1x32x8xbf16> to vector<32x8xbf16>
    %cst_41 = arith.constant dense<0.000000e+00> : vector<8x8xf32>
    %79 = tpu.matmul %41, %78, %cst_41 {dimension_numbers = #tpu.dot_dimension_numbers<[1], [0], [0], [1], [0, 0, 1, 1], [], []>} : vector<8x32xbf16>, vector<32x8xbf16>, vector<8x8xf32> -> vector<8x8xf32>
    %80 = arith.truncf %79 : vector<8x8xf32> to vector<8x8xbf16>
    %c1_42 = arith.constant 1 : index
    %c0_43 = arith.constant 0 : index
    %c0_44 = arith.constant 0 : index
    %81 = vector.load %arg6[%c1_42, %c0_43, %c0_44] : memref<4x32x8xbf16, #tpu.memory_space<vmem>>, vector<1x32x8xbf16>
    %82 = vector.shape_cast %81 : vector<1x32x8xbf16> to vector<32x8xbf16>
    %cst_45 = arith.constant dense<0.000000e+00> : vector<8x8xf32>
    %83 = tpu.matmul %41, %82, %cst_45 {dimension_numbers = #tpu.dot_dimension_numbers<[1], [0], [0], [1], [0, 0, 1, 1], [], []>} : vector<8x32xbf16>, vector<32x8xbf16>, vector<8x8xf32> -> vector<8x8xf32>
    %84 = arith.truncf %83 : vector<8x8xf32> to vector<8x8xbf16>
    "tpu.trace_start"() <{level = 10 : i32, message = "qd,kd->qk"}> : () -> ()
    %cst_46 = arith.constant dense<0.000000e+00> : vector<8x8xf32>
    %85 = tpu.matmul %76, %80, %cst_46 {dimension_numbers = #tpu.dot_dimension_numbers<[1], [1], [0], [0], [0, 0, 1, 0], [], []>} : vector<8x8xbf16>, vector<8x8xbf16>, vector<8x8xf32> -> vector<8x8xf32>
    "tpu.trace_stop"() : () -> ()
    %cst_47 = arith.constant dense<0xFF800000> : vector<8xf32>
    %86 = vector.multi_reduction <maximumf>, %85, %cst_47 [1] : vector<8x8xf32> to vector<8xf32>
    %87 = vector.shape_cast %86 : vector<8xf32> to vector<8x1xf32>
    %88 = vector.broadcast %87 : vector<8x1xf32> to vector<8x8xf32>
    %89 = arith.subf %85, %88 : vector<8x8xf32>
    %90 = math.exp %89 : vector<8x8xf32>
    %cst_48 = arith.constant dense<0.000000e+00> : vector<8xf32>
    %91 = vector.multi_reduction <add>, %90, %cst_48 [1] : vector<8x8xf32> to vector<8xf32>
    %92 = vector.shape_cast %91 : vector<8xf32> to vector<8x1xf32>
    %93 = tpu.reciprocal %92 {approx = true} : vector<8x1xf32> -> vector<8x1xf32>
    %94 = vector.broadcast %93 : vector<8x1xf32> to vector<8x8xf32>
    %95 = arith.mulf %90, %94 : vector<8x8xf32>
    %96 = arith.truncf %95 : vector<8x8xf32> to vector<8x8xbf16>
    %cst_49 = arith.constant dense<0.000000e+00> : vector<8x8xf32>
    %97 = tpu.matmul %96, %84, %cst_49 {dimension_numbers = #tpu.dot_dimension_numbers<[1], [0], [0], [1], [0, 0, 1, 1], [], []>} : vector<8x8xbf16>, vector<8x8xbf16>, vector<8x8xf32> -> vector<8x8xf32>
    %98 = arith.truncf %97 : vector<8x8xf32> to vector<8x8xbf16>
    %c1_50 = arith.constant 1 : index
    %c0_51 = arith.constant 0 : index
    %c0_52 = arith.constant 0 : index
    %99 = vector.load %arg7[%c1_50, %c0_51, %c0_52] : memref<4x8x32xbf16, #tpu.memory_space<vmem>>, vector<1x8x32xbf16>
    %100 = vector.shape_cast %99 : vector<1x8x32xbf16> to vector<8x32xbf16>
    %cst_53 = arith.constant dense<0.000000e+00> : vector<8x32xf32>
    %101 = tpu.matmul %98, %100, %cst_53 {dimension_numbers = #tpu.dot_dimension_numbers<[1], [0], [0], [1], [0, 0, 1, 1], [], []>} : vector<8x8xbf16>, vector<8x32xbf16>, vector<8x32xf32> -> vector<8x32xf32>
    %102 = arith.addf %72, %101 : vector<8x32xf32>
    %c2 = arith.constant 2 : index
    %c0_54 = arith.constant 0 : index
    %c0_55 = arith.constant 0 : index
    %103 = vector.load %arg4[%c2, %c0_54, %c0_55] : memref<4x32x8xbf16, #tpu.memory_space<vmem>>, vector<1x32x8xbf16>
    %104 = vector.shape_cast %103 : vector<1x32x8xbf16> to vector<32x8xbf16>
    %cst_56 = arith.constant dense<0.000000e+00> : vector<8x8xf32>
    %105 = tpu.matmul %22, %104, %cst_56 {dimension_numbers = #tpu.dot_dimension_numbers<[1], [0], [0], [1], [0, 0, 1, 1], [], []>} : vector<8x32xbf16>, vector<32x8xbf16>, vector<8x8xf32> -> vector<8x8xf32>
    %106 = arith.truncf %105 : vector<8x8xf32> to vector<8x8xbf16>
    %c2_57 = arith.constant 2 : index
    %c0_58 = arith.constant 0 : index
    %c0_59 = arith.constant 0 : index
    %107 = vector.load %arg5[%c2_57, %c0_58, %c0_59] : memref<4x32x8xbf16, #tpu.memory_space<vmem>>, vector<1x32x8xbf16>
    %108 = vector.shape_cast %107 : vector<1x32x8xbf16> to vector<32x8xbf16>
    %cst_60 = arith.constant dense<0.000000e+00> : vector<8x8xf32>
    %109 = tpu.matmul %41, %108, %cst_60 {dimension_numbers = #tpu.dot_dimension_numbers<[1], [0], [0], [1], [0, 0, 1, 1], [], []>} : vector<8x32xbf16>, vector<32x8xbf16>, vector<8x8xf32> -> vector<8x8xf32>
    %110 = arith.truncf %109 : vector<8x8xf32> to vector<8x8xbf16>
    %c2_61 = arith.constant 2 : index
    %c0_62 = arith.constant 0 : index
    %c0_63 = arith.constant 0 : index
    %111 = vector.load %arg6[%c2_61, %c0_62, %c0_63] : memref<4x32x8xbf16, #tpu.memory_space<vmem>>, vector<1x32x8xbf16>
    %112 = vector.shape_cast %111 : vector<1x32x8xbf16> to vector<32x8xbf16>
    %cst_64 = arith.constant dense<0.000000e+00> : vector<8x8xf32>
    %113 = tpu.matmul %41, %112, %cst_64 {dimension_numbers = #tpu.dot_dimension_numbers<[1], [0], [0], [1], [0, 0, 1, 1], [], []>} : vector<8x32xbf16>, vector<32x8xbf16>, vector<8x8xf32> -> vector<8x8xf32>
    %114 = arith.truncf %113 : vector<8x8xf32> to vector<8x8xbf16>
    "tpu.trace_start"() <{level = 10 : i32, message = "qd,kd->qk"}> : () -> ()
    %cst_65 = arith.constant dense<0.000000e+00> : vector<8x8xf32>
    %115 = tpu.matmul %106, %110, %cst_65 {dimension_numbers = #tpu.dot_dimension_numbers<[1], [1], [0], [0], [0, 0, 1, 0], [], []>} : vector<8x8xbf16>, vector<8x8xbf16>, vector<8x8xf32> -> vector<8x8xf32>
    "tpu.trace_stop"() : () -> ()
    %cst_66 = arith.constant dense<0xFF800000> : vector<8xf32>
    %116 = vector.multi_reduction <maximumf>, %115, %cst_66 [1] : vector<8x8xf32> to vector<8xf32>
    %117 = vector.shape_cast %116 : vector<8xf32> to vector<8x1xf32>
    %118 = vector.broadcast %117 : vector<8x1xf32> to vector<8x8xf32>
    %119 = arith.subf %115, %118 : vector<8x8xf32>
    %120 = math.exp %119 : vector<8x8xf32>
    %cst_67 = arith.constant dense<0.000000e+00> : vector<8xf32>
    %121 = vector.multi_reduction <add>, %120, %cst_67 [1] : vector<8x8xf32> to vector<8xf32>
    %122 = vector.shape_cast %121 : vector<8xf32> to vector<8x1xf32>
    %123 = tpu.reciprocal %122 {approx = true} : vector<8x1xf32> -> vector<8x1xf32>
    %124 = vector.broadcast %123 : vector<8x1xf32> to vector<8x8xf32>
    %125 = arith.mulf %120, %124 : vector<8x8xf32>
    %126 = arith.truncf %125 : vector<8x8xf32> to vector<8x8xbf16>
    %cst_68 = arith.constant dense<0.000000e+00> : vector<8x8xf32>
    %127 = tpu.matmul %126, %114, %cst_68 {dimension_numbers = #tpu.dot_dimension_numbers<[1], [0], [0], [1], [0, 0, 1, 1], [], []>} : vector<8x8xbf16>, vector<8x8xbf16>, vector<8x8xf32> -> vector<8x8xf32>
    %128 = arith.truncf %127 : vector<8x8xf32> to vector<8x8xbf16>
    %c2_69 = arith.constant 2 : index
    %c0_70 = arith.constant 0 : index
    %c0_71 = arith.constant 0 : index
    %129 = vector.load %arg7[%c2_69, %c0_70, %c0_71] : memref<4x8x32xbf16, #tpu.memory_space<vmem>>, vector<1x8x32xbf16>
    %130 = vector.shape_cast %129 : vector<1x8x32xbf16> to vector<8x32xbf16>
    %cst_72 = arith.constant dense<0.000000e+00> : vector<8x32xf32>
    %131 = tpu.matmul %128, %130, %cst_72 {dimension_numbers = #tpu.dot_dimension_numbers<[1], [0], [0], [1], [0, 0, 1, 1], [], []>} : vector<8x8xbf16>, vector<8x32xbf16>, vector<8x32xf32> -> vector<8x32xf32>
    %132 = arith.addf %102, %131 : vector<8x32xf32>
    %c3 = arith.constant 3 : index
    %c0_73 = arith.constant 0 : index
    %c0_74 = arith.constant 0 : index
    %133 = vector.load %arg4[%c3, %c0_73, %c0_74] : memref<4x32x8xbf16, #tpu.memory_space<vmem>>, vector<1x32x8xbf16>
    %134 = vector.shape_cast %133 : vector<1x32x8xbf16> to vector<32x8xbf16>
    %cst_75 = arith.constant dense<0.000000e+00> : vector<8x8xf32>
    %135 = tpu.matmul %22, %134, %cst_75 {dimension_numbers = #tpu.dot_dimension_numbers<[1], [0], [0], [1], [0, 0, 1, 1], [], []>} : vector<8x32xbf16>, vector<32x8xbf16>, vector<8x8xf32> -> vector<8x8xf32>
    %136 = arith.truncf %135 : vector<8x8xf32> to vector<8x8xbf16>
    %c3_76 = arith.constant 3 : index
    %c0_77 = arith.constant 0 : index
    %c0_78 = arith.constant 0 : index
    %137 = vector.load %arg5[%c3_76, %c0_77, %c0_78] : memref<4x32x8xbf16, #tpu.memory_space<vmem>>, vector<1x32x8xbf16>
    %138 = vector.shape_cast %137 : vector<1x32x8xbf16> to vector<32x8xbf16>
    %cst_79 = arith.constant dense<0.000000e+00> : vector<8x8xf32>
    %139 = tpu.matmul %41, %138, %cst_79 {dimension_numbers = #tpu.dot_dimension_numbers<[1], [0], [0], [1], [0, 0, 1, 1], [], []>} : vector<8x32xbf16>, vector<32x8xbf16>, vector<8x8xf32> -> vector<8x8xf32>
    %140 = arith.truncf %139 : vector<8x8xf32> to vector<8x8xbf16>
    %c3_80 = arith.constant 3 : index
    %c0_81 = arith.constant 0 : index
    %c0_82 = arith.constant 0 : index
    %141 = vector.load %arg6[%c3_80, %c0_81, %c0_82] : memref<4x32x8xbf16, #tpu.memory_space<vmem>>, vector<1x32x8xbf16>
    %142 = vector.shape_cast %141 : vector<1x32x8xbf16> to vector<32x8xbf16>
    %cst_83 = arith.constant dense<0.000000e+00> : vector<8x8xf32>
    %143 = tpu.matmul %41, %142, %cst_83 {dimension_numbers = #tpu.dot_dimension_numbers<[1], [0], [0], [1], [0, 0, 1, 1], [], []>} : vector<8x32xbf16>, vector<32x8xbf16>, vector<8x8xf32> -> vector<8x8xf32>
    %144 = arith.truncf %143 : vector<8x8xf32> to vector<8x8xbf16>
    "tpu.trace_start"() <{level = 10 : i32, message = "qd,kd->qk"}> : () -> ()
    %cst_84 = arith.constant dense<0.000000e+00> : vector<8x8xf32>
    %145 = tpu.matmul %136, %140, %cst_84 {dimension_numbers = #tpu.dot_dimension_numbers<[1], [1], [0], [0], [0, 0, 1, 0], [], []>} : vector<8x8xbf16>, vector<8x8xbf16>, vector<8x8xf32> -> vector<8x8xf32>
    "tpu.trace_stop"() : () -> ()
    %cst_85 = arith.constant dense<0xFF800000> : vector<8xf32>
    %146 = vector.multi_reduction <maximumf>, %145, %cst_85 [1] : vector<8x8xf32> to vector<8xf32>
    %147 = vector.shape_cast %146 : vector<8xf32> to vector<8x1xf32>
    %148 = vector.broadcast %147 : vector<8x1xf32> to vector<8x8xf32>
    %149 = arith.subf %145, %148 : vector<8x8xf32>
    %150 = math.exp %149 : vector<8x8xf32>
    %cst_86 = arith.constant dense<0.000000e+00> : vector<8xf32>
    %151 = vector.multi_reduction <add>, %150, %cst_86 [1] : vector<8x8xf32> to vector<8xf32>
    %152 = vector.shape_cast %151 : vector<8xf32> to vector<8x1xf32>
    %153 = tpu.reciprocal %152 {approx = true} : vector<8x1xf32> -> vector<8x1xf32>
    %154 = vector.broadcast %153 : vector<8x1xf32> to vector<8x8xf32>
    %155 = arith.mulf %150, %154 : vector<8x8xf32>
    %156 = arith.truncf %155 : vector<8x8xf32> to vector<8x8xbf16>
    %cst_87 = arith.constant dense<0.000000e+00> : vector<8x8xf32>
    %157 = tpu.matmul %156, %144, %cst_87 {dimension_numbers = #tpu.dot_dimension_numbers<[1], [0], [0], [1], [0, 0, 1, 1], [], []>} : vector<8x8xbf16>, vector<8x8xbf16>, vector<8x8xf32> -> vector<8x8xf32>
    %158 = arith.truncf %157 : vector<8x8xf32> to vector<8x8xbf16>
    %c3_88 = arith.constant 3 : index
    %c0_89 = arith.constant 0 : index
    %c0_90 = arith.constant 0 : index
    %159 = vector.load %arg7[%c3_88, %c0_89, %c0_90] : memref<4x8x32xbf16, #tpu.memory_space<vmem>>, vector<1x8x32xbf16>
    %160 = vector.shape_cast %159 : vector<1x8x32xbf16> to vector<8x32xbf16>
    %cst_91 = arith.constant dense<0.000000e+00> : vector<8x32xf32>
    %161 = tpu.matmul %158, %160, %cst_91 {dimension_numbers = #tpu.dot_dimension_numbers<[1], [0], [0], [1], [0, 0, 1, 1], [], []>} : vector<8x8xbf16>, vector<8x32xbf16>, vector<8x32xf32> -> vector<8x32xf32>
    %162 = arith.addf %132, %161 : vector<8x32xf32>
    %163 = arith.addf %1, %162 : vector<8x32xf32>
    %cst_92 = arith.constant dense<0.000000e+00> : vector<8xf32>
    %164 = vector.multi_reduction <add>, %163, %cst_92 [1] : vector<8x32xf32> to vector<8xf32>
    %165 = vector.shape_cast %164 : vector<8xf32> to vector<8x1xf32>
    %cst_93 = arith.constant 3.200000e+01 : f32
    %166 = vector.broadcast %cst_93 : f32 to vector<8x1xf32>
    %167 = arith.divf %165, %166 : vector<8x1xf32>
    %168 = vector.broadcast %167 : vector<8x1xf32> to vector<8x32xf32>
    %169 = arith.subf %163, %168 : vector<8x32xf32>
    %170 = arith.mulf %169, %169 : vector<8x32xf32>
    %cst_94 = arith.constant dense<0.000000e+00> : vector<8xf32>
    %171 = vector.multi_reduction <add>, %170, %cst_94 [1] : vector<8x32xf32> to vector<8xf32>
    %172 = vector.shape_cast %171 : vector<8xf32> to vector<8x1xf32>
    %cst_95 = arith.constant 3.200000e+01 : f32
    %173 = vector.broadcast %cst_95 : f32 to vector<8x1xf32>
    %174 = arith.divf %172, %173 : vector<8x1xf32>
    %175 = vector.broadcast %167 : vector<8x1xf32> to vector<8x32xf32>
    %176 = arith.subf %163, %175 : vector<8x32xf32>
    %cst_96 = arith.constant 9.99999974E-6 : f32
    %177 = vector.broadcast %cst_96 : f32 to vector<8x1xf32>
    %178 = arith.addf %174, %177 : vector<8x1xf32>
    %179 = math.rsqrt %178 : vector<8x1xf32>
    %180 = vector.broadcast %179 : vector<8x1xf32> to vector<8x32xf32>
    %181 = arith.mulf %176, %180 : vector<8x32xf32>
    %182 = arith.truncf %181 : vector<8x32xf32> to vector<8x32xbf16>
    %c0_97 = arith.constant 0 : index
    %c0_98 = arith.constant 0 : index
    %183 = vector.load %arg8[%c0_97, %c0_98] : memref<32x128xbf16, #tpu.memory_space<vmem>>, vector<32x128xbf16>
    %cst_99 = arith.constant dense<0.000000e+00> : vector<8x128xf32>
    %184 = tpu.matmul %182, %183, %cst_99 {dimension_numbers = #tpu.dot_dimension_numbers<[1], [0], [0], [1], [0, 0, 1, 1], [], []>} : vector<8x32xbf16>, vector<32x128xbf16>, vector<8x128xf32> -> vector<8x128xf32>
    %c0_100 = arith.constant 0 : index
    %c0_101 = arith.constant 0 : index
    %185 = vector.load %arg9[%c0_100, %c0_101] : memref<1x128xf32, #tpu.memory_space<vmem>>, vector<1x128xf32>
    %186 = vector.broadcast %185 : vector<1x128xf32> to vector<8x128xf32>
    %187 = arith.addf %184, %186 : vector<8x128xf32>
    %cst_102 = arith.constant 5.000000e-01 : f32
    %188 = vector.broadcast %cst_102 : f32 to vector<8x128xf32>
    %189 = arith.mulf %188, %187 : vector<8x128xf32>
    %cst_103 = arith.constant 4.471500e-02 : f32
    %190 = vector.broadcast %cst_103 : f32 to vector<8x128xf32>
    %191 = arith.mulf %190, %187 : vector<8x128xf32>
    %192 = arith.mulf %191, %187 : vector<8x128xf32>
    %193 = arith.mulf %192, %187 : vector<8x128xf32>
    %194 = arith.addf %187, %193 : vector<8x128xf32>
    %cst_104 = arith.constant 0.797884583 : f32
    %195 = vector.broadcast %cst_104 : f32 to vector<8x128xf32>
    %196 = arith.mulf %195, %194 : vector<8x128xf32>
    %197 = math.tanh %196 : vector<8x128xf32>
    %cst_105 = arith.constant 1.000000e+00 : f32
    %198 = vector.broadcast %cst_105 : f32 to vector<8x128xf32>
    %199 = arith.addf %198, %197 : vector<8x128xf32>
    %200 = arith.mulf %189, %199 : vector<8x128xf32>
    %201 = arith.truncf %200 : vector<8x128xf32> to vector<8x128xbf16>
    %c0_106 = arith.constant 0 : index
    %c0_107 = arith.constant 0 : index
    %202 = vector.load %arg10[%c0_106, %c0_107] : memref<128x32xbf16, #tpu.memory_space<vmem>>, vector<128x32xbf16>
    %cst_108 = arith.constant dense<0.000000e+00> : vector<8x32xf32>
    %203 = tpu.matmul %201, %202, %cst_108 {dimension_numbers = #tpu.dot_dimension_numbers<[1], [0], [0], [1], [0, 0, 1, 1], [], []>} : vector<8x128xbf16>, vector<128x32xbf16>, vector<8x32xf32> -> vector<8x32xf32>
    %204 = arith.addf %163, %203 : vector<8x32xf32>
    %c0_109 = arith.constant 0 : index
    %c0_110 = arith.constant 0 : index
    %205 = vector.load %arg11[%c0_109, %c0_110] : memref<1x32xf32, #tpu.memory_space<vmem>>, vector<1x32xf32>
    %206 = vector.broadcast %205 : vector<1x32xf32> to vector<8x32xf32>
    %207 = arith.addf %204, %206 : vector<8x32xf32>
    %208 = vector.shape_cast %207 : vector<8x32xf32> to vector<1x8x32xf32>
    %c0_111 = arith.constant 0 : index
    %c0_112 = arith.constant 0 : index
    %c0_113 = arith.constant 0 : index
    %209 = vector.load %arg12[%c0_111, %c0_112, %c0_113] : memref<1x8x32xf32, #tpu.memory_space<vmem>>, vector<1x8x32xf32>
    tpu.vector_store %arg12[%c0_111, %c0_112, %c0_113], %208 {strides = array<i32>} : memref<1x8x32xf32, #tpu.memory_space<vmem>>, vector<1x8x32xf32>,
    return
  }
  func.func @transform_0(%arg0: i32, %arg1: i32) -> (i32, i32, i32) {
    %c0_i32 = arith.constant 0 : i32
    %c0_i32_0 = arith.constant 0 : i32
    return %arg0, %arg1, %c0_i32 : i32, i32, i32
  }
  func.func @transform_1(%arg0: i32, %arg1: i32) -> (i32, i32, i32) {
    %c0_i32 = arith.constant 0 : i32
    %c0_i32_0 = arith.constant 0 : i32
    %c0_i32_1 = arith.constant 0 : i32
    return %arg0, %c0_i32, %c0_i32_0 : i32, i32, i32
  }
  func.func @transform_2(%arg0: i32, %arg1: i32) -> (i32, i32, i32) {
    %c0_i32 = arith.constant 0 : i32
    %c0_i32_0 = arith.constant 0 : i32
    %c0_i32_1 = arith.constant 0 : i32
    %c0_i32_2 = arith.constant 0 : i32
    return %c0_i32, %c0_i32_0, %c0_i32_1 : i32, i32, i32
  }
  func.func @transform_3(%arg0: i32, %arg1: i32) -> (i32, i32, i32) {
    %c0_i32 = arith.constant 0 : i32
    %c0_i32_0 = arith.constant 0 : i32
    %c0_i32_1 = arith.constant 0 : i32
    %c0_i32_2 = arith.constant 0 : i32
    return %c0_i32, %c0_i32_0, %c0_i32_1 : i32, i32, i32
  }
  func.func @transform_4(%arg0: i32, %arg1: i32) -> (i32, i32, i32) {
    %c0_i32 = arith.constant 0 : i32
    %c0_i32_0 = arith.constant 0 : i32
    %c0_i32_1 = arith.constant 0 : i32
    %c0_i32_2 = arith.constant 0 : i32
    return %c0_i32, %c0_i32_0, %c0_i32_1 : i32, i32, i32
  }
  func.func @transform_5(%arg0: i32, %arg1: i32) -> (i32, i32, i32) {
    %c0_i32 = arith.constant 0 : i32
    %c0_i32_0 = arith.constant 0 : i32
    %c0_i32_1 = arith.constant 0 : i32
    %c0_i32_2 = arith.constant 0 : i32
    return %c0_i32, %c0_i32_0, %c0_i32_1 : i32, i32, i32
  }
  func.func @transform_6(%arg0: i32, %arg1: i32) -> (i32, i32) {
    %c0_i32 = arith.constant 0 : i32
    %c0_i32_0 = arith.constant 0 : i32
    %c0_i32_1 = arith.constant 0 : i32
    return %c0_i32, %c0_i32_0 : i32, i32
  }
  func.func @transform_7(%arg0: i32, %arg1: i32) -> (i32, i32) {
    %c0_i32 = arith.constant 0 : i32
    %c0_i32_0 = arith.constant 0 : i32
    %c0_i32_1 = arith.constant 0 : i32
    return %c0_i32, %c0_i32_0 : i32, i32
  }
  func.func @transform_8(%arg0: i32, %arg1: i32) -> (i32, i32) {
    %c0_i32 = arith.constant 0 : i32
    %c0_i32_0 = arith.constant 0 : i32
    %c0_i32_1 = arith.constant 0 : i32
    return %c0_i32, %c0_i32_0 : i32, i32
  }
  func.func @transform_9(%arg0: i32, %arg1: i32) -> (i32, i32) {
    %c0_i32 = arith.constant 0 : i32
    %c0_i32_0 = arith.constant 0 : i32
    %c0_i32_1 = arith.constant 0 : i32
    return %c0_i32, %c0_i32_0 : i32, i32
  }
  func.func @transform_10(%arg0: i32, %arg1: i32) -> (i32, i32, i32) {
    %c0_i32 = arith.constant 0 : i32
    %c0_i32_0 = arith.constant 0 : i32
    return %arg0, %arg1, %c0_i32 : i32, i32, i32
  }
}

</mosaic_0001>

<llo_original>
// kernel: tpu_custom_call.1
$region0: #{tpu_custom_call.1}
  #allocation0 [shape = 'u32[]', space=smem, size = 0x4, offset = 0x4, fixed_abs, tag = 'smem constant byte address 0x4 - core index']
  #allocation1 [shape = 'u32[144,128]{1,0:T(1,128)}', space=vmem, size = 0x12000, scoped, tag = 'internal scratch']
  %s0 = inlined_call_operand.hbm [shape: f32[2,8,32], index: 0, kind: input, shape index: {}]
  %s1 = inlined_call_operand.hbm [shape: f32[2,8,32], index: 1, kind: input, shape index: {}]
  %s2 = inlined_call_operand.hbm [shape: bf16[4,32,8], index: 2, kind: input, shape index: {}]
  %s3 = inlined_call_operand.hbm [shape: bf16[4,32,8], index: 3, kind: input, shape index: {}]
  %s4 = inlined_call_operand.hbm [shape: bf16[4,32,8], index: 4, kind: input, shape index: {}]
  %s5 = inlined_call_operand.hbm [shape: bf16[4,8,32], index: 5, kind: input, shape index: {}]
  %s6 = inlined_call_operand.hbm [shape: bf16[32,128], index: 6, kind: input, shape index: {}]
  %s7 = inlined_call_operand.hbm [shape: f32[1,128], index: 7, kind: input, shape index: {}]
  %s8 = inlined_call_operand.hbm [shape: bf16[128,32], index: 8, kind: input, shape index: {}]
  %s9 = inlined_call_operand.hbm [shape: f32[1,32], index: 9, kind: input, shape index: {}]
  %s10 = inlined_call_operand.hbm [shape: f32[2,8,32], index: 10, kind: output, shape index: {}]
  %s11 = sld [smem:[#allocation0]]
  $region113: #{tpu_custom_call.1} parent=0
    _
  %s13 = ssub.s32 1, %s11
  %s14 = scalar_select 0, %s13, %s11
  $region1: #{tpu_custom_call.1} parent=0
    #allocation2 [shape = 'u8[8192]{0}', space=vmem, size = 0x2000, scoped, tag = 'input window, operand 0']
    #allocation3 [shape = 's32[2]{0}', space=sflag, size = 0x8, scoped, tag = 'scoped memory for tpu_custom_call.1']
    #allocation4 [shape = 's32[2]{0}', space=sflag, size = 0x8, scoped, tag = 'scoped memory for tpu_custom_call.1']
    #allocation5 [shape = 'u8[8192]{0}', space=vmem, size = 0x2000, scoped, tag = 'input window, operand 1']
    #allocation6 [shape = 's32[2]{0}', space=sflag, size = 0x8, scoped, tag = 'scoped memory for tpu_custom_call.1']
    #allocation7 [shape = 'u8[32768]{0}', space=vmem, size = 0x8000, scoped, tag = 'input window, operand 2, single buffered']
    #allocation8 [shape = 'u8[32768]{0}', space=vmem, size = 0x8000, scoped, tag = 'input window, operand 3, single buffered']
    #allocation9 [shape = 's32[1]{0}', space=sflag, size = 0x4, scoped, tag = 'scoped memory for tpu_custom_call.1']
    #allocation10 [shape = 'u8[32768]{0}', space=vmem, size = 0x8000, scoped, tag = 'input window, operand 4, single buffered']
    #allocation11 [shape = 'u8[8192]{0}', space=vmem, size = 0x2000, scoped, tag = 'input window, operand 5, single buffered']
    #allocation12 [shape = 's32[1]{0}', space=sflag, size = 0x4, scoped, tag = 'scoped memory for tpu_custom_call.1']
    #allocation13 [shape = 'u8[8192]{0}', space=vmem, size = 0x2000, scoped, tag = 'input window, operand 6, single buffered']
    #allocation14 [shape = 'u8[512]{0}', space=vmem, size = 0x400, scoped, tag = 'input window, operand 7, single buffered']
    #allocation15 [shape = 's32[1]{0}', space=sflag, size = 0x4, scoped, tag = 'scoped memory for tpu_custom_call.1']
    #allocation16 [shape = 'u8[32768]{0}', space=vmem, size = 0x8000, scoped, tag = 'input window, operand 8, single buffered']
    #allocation17 [shape = 'u8[512]{0}', space=vmem, size = 0x400, scoped, tag = 'input window, operand 9, single buffered']
    #allocation18 [shape = 's32[1]{0}', space=sflag, size = 0x4, scoped, tag = 'scoped memory for tpu_custom_call.1']
    #allocation19 [shape = 'u8[8192]{0}', space=vmem, size = 0x2000, scoped, tag = 'output window, operand 0']
    %15 = vsyncpa [#allocation3], 0
    %s16 = scalar_lea.sflag [#allocation3], 1
    %17 = vsyncpa %s16, 0
    %18 = vsyncpa [#allocation6], 0
    %s19 = scalar_lea.sflag [#allocation6], 1
    %20 = vsyncpa %s19, 0
    %21 = vsyncpa [#allocation9], 0
    %22 = vsyncpa [#allocation12], 0
    %23 = vsyncpa [#allocation15], 0
    %24 = vsyncpa [#allocation18], 0
    %25 = vsyncpa [#allocation4], 0
    %s26 = scalar_lea.sflag [#allocation4], 1
    %27 = vsyncpa %s26, 0
    loop: start=0, step=1, limit=4
    $region2: #{tpu_custom_call.1} parent=1 // loop_pre_header
      _
    $region3: #{tpu_custom_call.1} parent=1 // loop_header
      %s29 = sphi 0, %s33
      %p30 = scmp.ge.s32.totalorder %s29, 4
      %s36 = sphi 0, %s48
      %s37 = sphi 0, %s44
      %s38 = sphi 0, %s36
      %s39 = sphi 0, %s37
      %s40 = sphi 0, %s38
      %s41 = sphi 0, %s39
      %s53 = sphi 0, %s55
      %s56 = sphi 0, %s53
      %s57 = sphi 0, %s56
      %s73 = sphi 0, %s57
      %s79 = sphi 0, %s81
      %s82 = sphi 0, %s79
      %s83 = sphi 0, %s82
      %s99 = sphi 0, %s83
      %s103 = sphi 0, %s103
      %s105 = sphi 0, %s103
      %s106 = sphi 0, %s105
      %s120 = sphi 0, %s106
      %s124 = sphi 0, %s124
      %s126 = sphi 0, %s124
      %s127 = sphi 0, %s126
      %s141 = sphi 0, %s127
      %s145 = sphi 0, %s145
      %s147 = sphi 0, %s145
      %s148 = sphi 0, %s147
      %s162 = sphi 0, %s148
      %s166 = sphi 0, %s166
      %s168 = sphi 0, %s166
      %s169 = sphi 0, %s168
      %s183 = sphi 0, %s169
      %s187 = sphi 0, %s187
      %s189 = sphi 0, %s187
      %s190 = sphi 0, %s189
      %s204 = sphi 0, %s190
      %s208 = sphi 0, %s208
      %s210 = sphi 0, %s208
      %s211 = sphi 0, %s210
      %s225 = sphi 0, %s211
      %s229 = sphi 0, %s229
      %s231 = sphi 0, %s229
      %s232 = sphi 0, %s231
      %s246 = sphi 0, %s232
      %s250 = sphi 0, %s250
      %s252 = sphi 0, %s250
      %s253 = sphi 0, %s252
      %s267 = sphi 0, %s253
      %s275 = sphi 0, %s277
      %s278 = sphi 0, %s275
      %s279 = sphi 0, %s278
      %s295 = sphi 0, %s279
    $region4: #{tpu_custom_call.1} parent=1 // loop_header_branch
      %32 = sbr.rel (%p30) target = $region8
    $region5: #{tpu_custom_call.1} parent=1 // loop_body
      %s34 = ssub.s32 %s29, 1
      %s35 = ssub.s32 %s29, 2
      %s42 = sadd.s32 1, %s37
      %p43 = scmp.ge.s32.totalorder %s42, 1
      %s44 = scalar_select %p43, 0, %s42
      %s45 = sadd.s32 1, %s36
      %s46 = scalar_select %p43, %s45, %s36
      %p47 = scmp.ge.s32.totalorder %s46, 2
      %s48 = scalar_select %p47, 0, %s46
      %s49 = ssub.s32 %s36, %s48
      %s50 = ssub.s32 %s37, %s44
      %s51 = sor.u32 %s49, %s50
      %p52 = scmp.eq.s32.totalorder %s51, 0
      %s54 = sadd.s32 %s53, 1
      %s55 = scalar_select %p52, %s53, %s54
      %p58 = pneg %p52
      %p59 = scmp.eq.s32.totalorder %s29, 1
      %p60 = por %p58, %p59
      %p61 = scmp.ne.s32.totalorder %s53, %s56
      %p62 = scmp.eq.s32.totalorder %s29, 0
      %p63 = por %p61, %p62
      %p64 = scmp.ne.s32.totalorder %s53, %s56
      %p65 = scmp.eq.s32.totalorder %s34, 1
      %p66 = por %p64, %p65
      %p67 = scmp.ne.s32.totalorder %s56, %s57
      %p68 = scmp.eq.s32.totalorder %s34, 0
      %p69 = por %p67, %p68
      %p70 = scmp.ne.s32.totalorder %s56, %s57
      %p71 = scmp.eq.s32.totalorder %s35, 1
      %p72 = por %p70, %p71
      %p74 = scmp.ne.s32.totalorder %s57, %s73
      %p75 = scmp.eq.s32.totalorder %s35, 0
      %p76 = por %p74, %p75
      %s77 = ssub.s32 %s36, %s48
      %p78 = scmp.eq.s32.totalorder %s77, 0
      %s80 = sadd.s32 %s79, 1
      %s81 = scalar_select %p78, %s79, %s80
      %p84 = pneg %p78
      %p85 = scmp.eq.s32.totalorder %s29, 1
      %p86 = por %p84, %p85
      %p87 = scmp.ne.s32.totalorder %s79, %s82
      %p88 = scmp.eq.s32.totalorder %s29, 0
      %p89 = por %p87, %p88
      %p90 = scmp.ne.s32.totalorder %s79, %s82
      %p91 = scmp.eq.s32.totalorder %s34, 1
      %p92 = por %p90, %p91
      %p93 = scmp.ne.s32.totalorder %s82, %s83
      %p94 = scmp.eq.s32.totalorder %s34, 0
      %p95 = por %p93, %p94
      %p96 = scmp.ne.s32.totalorder %s82, %s83
      %p97 = scmp.eq.s32.totalorder %s35, 1
      %p98 = por %p96, %p97
      %p100 = scmp.ne.s32.totalorder %s83, %s99
      %p101 = scmp.eq.s32.totalorder %s35, 0
      %p102 = por %p100, %p101
      %s104 = sadd.s32 %s103, 1
      %p107 = scmp.eq.s32.totalorder %s29, 1
      %p108 = scmp.ne.s32.totalorder %s103, %s105
      %p109 = scmp.eq.s32.totalorder %s29, 0
      %p110 = por %p108, %p109
      %p111 = scmp.ne.s32.totalorder %s103, %s105
      %p112 = scmp.eq.s32.totalorder %s34, 1
      %p113 = por %p111, %p112
      %p114 = scmp.ne.s32.totalorder %s105, %s106
      %p115 = scmp.eq.s32.totalorder %s34, 0
      %p116 = por %p114, %p115
      %p117 = scmp.ne.s32.totalorder %s105, %s106
      %p118 = scmp.eq.s32.totalorder %s35, 1
      %p119 = por %p117, %p118
      %p121 = scmp.ne.s32.totalorder %s106, %s120
      %p122 = scmp.eq.s32.totalorder %s35, 0
      %p123 = por %p121, %p122
      %s125 = sadd.s32 %s124, 1
      %p128 = scmp.eq.s32.totalorder %s29, 1
      %p129 = scmp.ne.s32.totalorder %s124, %s126
      %p130 = scmp.eq.s32.totalorder %s29, 0
      %p131 = por %p129, %p130
      %p132 = scmp.ne.s32.totalorder %s124, %s126
      %p133 = scmp.eq.s32.totalorder %s34, 1
      %p134 = por %p132, %p133
      %p135 = scmp.ne.s32.totalorder %s126, %s127
      %p136 = scmp.eq.s32.totalorder %s34, 0
      %p137 = por %p135, %p136
      %p138 = scmp.ne.s32.totalorder %s126, %s127
      %p139 = scmp.eq.s32.totalorder %s35, 1
      %p140 = por %p138, %p139
      %p142 = scmp.ne.s32.totalorder %s127, %s141
      %p143 = scmp.eq.s32.totalorder %s35, 0
      %p144 = por %p142, %p143
      %s146 = sadd.s32 %s145, 1
      %p149 = scmp.eq.s32.totalorder %s29, 1
      %p150 = scmp.ne.s32.totalorder %s145, %s147
      %p151 = scmp.eq.s32.totalorder %s29, 0
      %p152 = por %p150, %p151
      %p153 = scmp.ne.s32.totalorder %s145, %s147
      %p154 = scmp.eq.s32.totalorder %s34, 1
      %p155 = por %p153, %p154
      %p156 = scmp.ne.s32.totalorder %s147, %s148
      %p157 = scmp.eq.s32.totalorder %s34, 0
      %p158 = por %p156, %p157
      %p159 = scmp.ne.s32.totalorder %s147, %s148
      %p160 = scmp.eq.s32.totalorder %s35, 1
      %p161 = por %p159, %p160
      %p163 = scmp.ne.s32.totalorder %s148, %s162
      %p164 = scmp.eq.s32.totalorder %s35, 0
      %p165 = por %p163, %p164
      %s167 = sadd.s32 %s166, 1
      %p170 = scmp.eq.s32.totalorder %s29, 1
      %p171 = scmp.ne.s32.totalorder %s166, %s168
      %p172 = scmp.eq.s32.totalorder %s29, 0
      %p173 = por %p171, %p172
      %p174 = scmp.ne.s32.totalorder %s166, %s168
      %p175 = scmp.eq.s32.totalorder %s34, 1
      %p176 = por %p174, %p175
      %p177 = scmp.ne.s32.totalorder %s168, %s169
      %p178 = scmp.eq.s32.totalorder %s34, 0
      %p179 = por %p177, %p178
      %p180 = scmp.ne.s32.totalorder %s168, %s169
      %p181 = scmp.eq.s32.totalorder %s35, 1
      %p182 = por %p180, %p181
      %p184 = scmp.ne.s32.totalorder %s169, %s183
      %p185 = scmp.eq.s32.totalorder %s35, 0
      %p186 = por %p184, %p185
      %s188 = sadd.s32 %s187, 1
      %p191 = scmp.eq.s32.totalorder %s29, 1
      %p192 = scmp.ne.s32.totalorder %s187, %s189
      %p193 = scmp.eq.s32.totalorder %s29, 0
      %p194 = por %p192, %p193
      %p195 = scmp.ne.s32.totalorder %s187, %s189
      %p196 = scmp.eq.s32.totalorder %s34, 1
      %p197 = por %p195, %p196
      %p198 = scmp.ne.s32.totalorder %s189, %s190
      %p199 = scmp.eq.s32.totalorder %s34, 0
      %p200 = por %p198, %p199
      %p201 = scmp.ne.s32.totalorder %s189, %s190
      %p202 = scmp.eq.s32.totalorder %s35, 1
      %p203 = por %p201, %p202
      %p205 = scmp.ne.s32.totalorder %s190, %s204
      %p206 = scmp.eq.s32.totalorder %s35, 0
      %p207 = por %p205, %p206
      %s209 = sadd.s32 %s208, 1
      %p212 = scmp.eq.s32.totalorder %s29, 1
      %p213 = scmp.ne.s32.totalorder %s208, %s210
      %p214 = scmp.eq.s32.totalorder %s29, 0
      %p215 = por %p213, %p214
      %p216 = scmp.ne.s32.totalorder %s208, %s210
      %p217 = scmp.eq.s32.totalorder %s34, 1
      %p218 = por %p216, %p217
      %p219 = scmp.ne.s32.totalorder %s210, %s211
      %p220 = scmp.eq.s32.totalorder %s34, 0
      %p221 = por %p219, %p220
      %p222 = scmp.ne.s32.totalorder %s210, %s211
      %p223 = scmp.eq.s32.totalorder %s35, 1
      %p224 = por %p222, %p223
      %p226 = scmp.ne.s32.totalorder %s211, %s225
      %p227 = scmp.eq.s32.totalorder %s35, 0
      %p228 = por %p226, %p227
      %s230 = sadd.s32 %s229, 1
      %p233 = scmp.eq.s32.totalorder %s29, 1
      %p234 = scmp.ne.s32.totalorder %s229, %s231
      %p235 = scmp.eq.s32.totalorder %s29, 0
      %p236 = por %p234, %p235
      %p237 = scmp.ne.s32.totalorder %s229, %s231
      %p238 = scmp.eq.s32.totalorder %s34, 1
      %p239 = por %p237, %p238
      %p240 = scmp.ne.s32.totalorder %s231, %s232
      %p241 = scmp.eq.s32.totalorder %s34, 0
      %p242 = por %p240, %p241
      %p243 = scmp.ne.s32.totalorder %s231, %s232
      %p244 = scmp.eq.s32.totalorder %s35, 1
      %p245 = por %p243, %p244
      %p247 = scmp.ne.s32.totalorder %s232, %s246
      %p248 = scmp.eq.s32.totalorder %s35, 0
      %p249 = por %p247, %p248
      %s251 = sadd.s32 %s250, 1
      %p254 = scmp.eq.s32.totalorder %s29, 1
      %p255 = scmp.ne.s32.totalorder %s250, %s252
      %p256 = scmp.eq.s32.totalorder %s29, 0
      %p257 = por %p255, %p256
      %p258 = scmp.ne.s32.totalorder %s250, %s252
      %p259 = scmp.eq.s32.totalorder %s34, 1
      %p260 = por %p258, %p259
      %p261 = scmp.ne.s32.totalorder %s252, %s253
      %p262 = scmp.eq.s32.totalorder %s34, 0
      %p263 = por %p261, %p262
      %p264 = scmp.ne.s32.totalorder %s252, %s253
      %p265 = scmp.eq.s32.totalorder %s35, 1
      %p266 = por %p264, %p265
      %p268 = scmp.ne.s32.totalorder %s253, %s267
      %p269 = scmp.eq.s32.totalorder %s35, 0
      %p270 = por %p268, %p269
      %s271 = ssub.s32 %s36, %s48
      %s272 = ssub.s32 %s37, %s44
      %s273 = sor.u32 %s271, %s272
      %p274 = scmp.eq.s32.totalorder %s273, 0
      %s276 = sadd.s32 %s275, 1
      %s277 = scalar_select %p274, %s275, %s276
      %p280 = pneg %p274
      %p281 = scmp.eq.s32.totalorder %s29, 1
      %p282 = por %p280, %p281
      %p283 = scmp.ne.s32.totalorder %s275, %s278
      %p284 = scmp.eq.s32.totalorder %s29, 0
      %p285 = por %p283, %p284
      %p286 = scmp.ne.s32.totalorder %s275, %s278
      %p287 = scmp.eq.s32.totalorder %s34, 1
      %p288 = por %p286, %p287
      %p289 = scmp.ne.s32.totalorder %s278, %s279
      %p290 = scmp.eq.s32.totalorder %s34, 0
      %p291 = por %p289, %p290
      %p292 = scmp.ne.s32.totalorder %s278, %s279
      %p293 = scmp.eq.s32.totalorder %s35, 1
      %p294 = por %p292, %p293
      %p296 = scmp.ne.s32.totalorder %s279, %s295
      %p297 = scmp.eq.s32.totalorder %s35, 0
      %p298 = por %p296, %p297
      %p299 = scmp.le.s32.totalorder 1, %s29
      %p300 = scmp.lt.s32.totalorder %s29, 3
      %p301 = pnand %p299, %p300
      %p302 = pneg %p301
      // Predicated region
      $region9: #{tpu_custom_call.1} parent=5 // pred_check
        _
      $region10: #{tpu_custom_call.1} parent=5 // pred_check_branch
        %304 = sbr.rel (%p301) target = $region12
      $region11: #{tpu_custom_call.1} parent=5 // pred_region
        %s305 = ssub.s32 %s29, 1
        // Predicated region
        $region13: #{tpu_custom_call.1} parent=11 // pred_check
          %p306 = pneg %p116
        $region14: #{tpu_custom_call.1} parent=11 // pred_check_branch
          %308 = sbr.rel (%p306) target = $region16
        $region15: #{tpu_custom_call.1} parent=11 // pred_region
          %s310 = ssub.s32 1024, 1024
          %311 = vsyncadd [#allocation6], %s310
          %s312 = sshll.u32 [#allocation7], 4
          %s313 = int_to_ptr.vmem [resolvable:$true] %s312
          %318 = dma.hbm_to_vmem [thread:$0]  %s2, 1024, %s313, [#allocation6], 64, 64, 4
        $region16: #{tpu_custom_call.1} parent=11 // pred_fallthru
          _
        // Predicated region
        $region17: #{tpu_custom_call.1} parent=11 // pred_check
          %p319 = pneg %p137
        $region18: #{tpu_custom_call.1} parent=11 // pred_check_branch
          %321 = sbr.rel (%p319) target = $region20
        $region19: #{tpu_custom_call.1} parent=11 // pred_region
          %s323 = ssub.s32 1024, 1024
          %324 = vsyncadd [#allocation9], %s323
          %s325 = sshll.u32 [#allocation8], 4
          %s326 = int_to_ptr.vmem [resolvable:$true] %s325
          %331 = dma.hbm_to_vmem [thread:$0]  %s3, 1024, %s326, [#allocation9], 64, 64, 4
        $region20: #{tpu_custom_call.1} parent=11 // pred_fallthru
          _
        // Predicated region
        $region21: #{tpu_custom_call.1} parent=11 // pred_check
          %p332 = pneg %p158
        $region22: #{tpu_custom_call.1} parent=11 // pred_check_branch
          %334 = sbr.rel (%p332) target = $region24
        $region23: #{tpu_custom_call.1} parent=11 // pred_region
          %s336 = ssub.s32 1024, 1024
          %337 = vsyncadd [#allocation9], %s336
          %s338 = sshll.u32 [#allocation10], 4
          %s339 = int_to_ptr.vmem [resolvable:$true] %s338
          %344 = dma.hbm_to_vmem [thread:$0]  %s4, 1024, %s339, [#allocation9], 64, 64, 4
        $region24: #{tpu_custom_call.1} parent=11 // pred_fallthru
          _
        // Predicated region
        $region25: #{tpu_custom_call.1} parent=11 // pred_check
          %p345 = pneg %p179
        $region26: #{tpu_custom_call.1} parent=11 // pred_check_branch
          %347 = sbr.rel (%p345) target = $region28
        $region27: #{tpu_custom_call.1} parent=11 // pred_region
          %s349 = ssub.s32 256, 256
          %350 = vsyncadd [#allocation12], %s349
          %s351 = sshll.u32 [#allocation11], 4
          %s352 = int_to_ptr.vmem [resolvable:$true] %s351
          %357 = dma.hbm_to_vmem [thread:$0]  %s5, 256, %s352, [#allocation12], 64, 64, 4
        $region28: #{tpu_custom_call.1} parent=11 // pred_fallthru
          _
        // Predicated region
        $region29: #{tpu_custom_call.1} parent=11 // pred_check
          %p358 = pneg %p200
        $region30: #{tpu_custom_call.1} parent=11 // pred_check_branch
          %360 = sbr.rel (%p358) target = $region32
        $region31: #{tpu_custom_call.1} parent=11 // pred_region
          %s362 = ssub.s32 256, 256
          %363 = vsyncadd [#allocation12], %s362
          %s364 = sshll.u32 [#allocation13], 4
          %s365 = int_to_ptr.vmem [resolvable:$true] %s364
          %370 = dma.hbm_to_vmem [thread:$0]  %s6, 256, %s365, [#allocation12], 64, 64, 4
        $region32: #{tpu_custom_call.1} parent=11 // pred_fallthru
          _
        // Predicated region
        $region33: #{tpu_custom_call.1} parent=11 // pred_check
          %p371 = pneg %p221
        $region34: #{tpu_custom_call.1} parent=11 // pred_check_branch
          %373 = sbr.rel (%p371) target = $region36
        $region35: #{tpu_custom_call.1} parent=11 // pred_region
          %s375 = ssub.s32 16, 16
          %376 = vsyncadd [#allocation15], %s375
          %s378 = sshll.u32 [#allocation14], 4
          %s379 = int_to_ptr.vmem [resolvable:$true] %s378
          %381 = dma.hbm_to_vmem [thread:$0]  %s7, 16, %s379, [#allocation15]
        $region36: #{tpu_custom_call.1} parent=11 // pred_fallthru
          _
        // Predicated region
        $region37: #{tpu_custom_call.1} parent=11 // pred_check
          %p382 = pneg %p242
        $region38: #{tpu_custom_call.1} parent=11 // pred_check_branch
          %384 = sbr.rel (%p382) target = $region40
        $region39: #{tpu_custom_call.1} parent=11 // pred_region
          %s386 = ssub.s32 1024, 1024
          %387 = vsyncadd [#allocation15], %s386
          %s388 = sshll.u32 [#allocation16], 4
          %s389 = int_to_ptr.vmem [resolvable:$true] %s388
          %394 = dma.hbm_to_vmem [thread:$0]  %s8, 1024, %s389, [#allocation15], 64, 64, 4
        $region40: #{tpu_custom_call.1} parent=11 // pred_fallthru
          _
        // Predicated region
        $region41: #{tpu_custom_call.1} parent=11 // pred_check
          %p395 = pneg %p263
        $region42: #{tpu_custom_call.1} parent=11 // pred_check_branch
          %397 = sbr.rel (%p395) target = $region44
        $region43: #{tpu_custom_call.1} parent=11 // pred_region
          %s399 = ssub.s32 16, 16
          %400 = vsyncadd [#allocation18], %s399
          %s402 = sshll.u32 [#allocation17], 4
          %s403 = int_to_ptr.vmem [resolvable:$true] %s402
          %405 = dma.hbm_to_vmem [thread:$0]  %s9, 16, %s403, [#allocation18]
        $region44: #{tpu_custom_call.1} parent=11 // pred_fallthru
          _
      $region12: #{tpu_custom_call.1} parent=5 // pred_fallthru
        _
      %p406 = scmp.lt.s32.totalorder %s29, 2
      // Predicated region
      $region45: #{tpu_custom_call.1} parent=5 // pred_check
        %p407 = pneg %p406
      $region46: #{tpu_custom_call.1} parent=5 // pred_check_branch
        %409 = sbr.rel (%p407) target = $region48
      $region47: #{tpu_custom_call.1} parent=5 // pred_region
        // Predicated region
        $region49: #{tpu_custom_call.1} parent=47 // pred_check
          %p410 = pneg %p63
        $region50: #{tpu_custom_call.1} parent=47 // pred_check_branch
          %412 = sbr.rel (%p410) target = $region52
        $region51: #{tpu_custom_call.1} parent=47 // pred_region
          %s413 = sand.u32 %s53, 1
          %s414 = scalar_lea.sflag [#allocation3], %s413
          %s415 = sand.u32 %s53, 1
          %s416 = smul.addr %s415, 8
          %s417 = scalar_lea.vmem [#allocation2], %s416
          %s419 = ssub.s32 128, 128
          %420 = vsyncadd %s414, %s419
          %s421 = sadd.s32 %s37, %s36
          %s422 = smul.addr %s421, 128
          %s423 = scalar_lea.hbm %s0, %s422
          %s425 = sshll.u32 %s417, 4
          %s426 = int_to_ptr.vmem [resolvable:$true] %s425
          %428 = dma.hbm_to_vmem [thread:$0]  %s423, 128, %s426, %s414
        $region52: #{tpu_custom_call.1} parent=47 // pred_fallthru
          _
        // Predicated region
        $region53: #{tpu_custom_call.1} parent=47 // pred_check
          %p429 = pneg %p89
        $region54: #{tpu_custom_call.1} parent=47 // pred_check_branch
          %431 = sbr.rel (%p429) target = $region56
        $region55: #{tpu_custom_call.1} parent=47 // pred_region
          %s432 = sand.u32 %s29, 1
          %s433 = scalar_lea.sflag [#allocation6], %s432
          %s434 = sand.u32 %s79, 1
          %s435 = smul.addr %s434, 8
          %s436 = scalar_lea.vmem [#allocation5], %s435
          %s438 = ssub.s32 128, 128
          %439 = vsyncadd %s433, %s438
          %s440 = smul.addr %s36, 128
          %s441 = scalar_lea.hbm %s1, %s440
          %s443 = sshll.u32 %s436, 4
          %s444 = int_to_ptr.vmem [resolvable:$true] %s443
          %446 = dma.hbm_to_vmem [thread:$0]  %s441, 128, %s444, %s433
        $region56: #{tpu_custom_call.1} parent=47 // pred_fallthru
          _
      $region48: #{tpu_custom_call.1} parent=5 // pred_fallthru
        _
      %p447 = scmp.le.s32.totalorder 1, %s29
      %p448 = scmp.lt.s32.totalorder %s29, 3
      %p449 = pnand %p447, %p448
      %p450 = pneg %p449
      // Predicated region
      $region57: #{tpu_custom_call.1} parent=5 // pred_check
        _
      $region58: #{tpu_custom_call.1} parent=5 // pred_check_branch
        %452 = sbr.rel (%p449) target = $region60
      $region59: #{tpu_custom_call.1} parent=5 // pred_region
        %s453 = ssub.s32 %s29, 1
        %s454 = sand.u32 %s56, 1
        %s455 = scalar_lea.sflag [#allocation3], %s454
        %s456 = sand.u32 %s56, 1
        %s457 = smul.addr %s456, 8
        %s458 = scalar_lea.vmem [#allocation2], %s457
        // Predicated region
        $region61: #{tpu_custom_call.1} parent=59 // pred_check
          %p459 = pneg %p69
        $region62: #{tpu_custom_call.1} parent=59 // pred_check_branch
          %461 = sbr.rel (%p459) target = $region64
        $region63: #{tpu_custom_call.1} parent=59 // pred_region
          %462 = dma.done %s455, 128
        $region64: #{tpu_custom_call.1} parent=59 // pred_fallthru
          _
        %s463 = sand.u32 %s34, 1
        %s464 = scalar_lea.sflag [#allocation6], %s463
        %s465 = sand.u32 %s82, 1
        %s466 = smul.addr %s465, 8
        %s467 = scalar_lea.vmem [#allocation5], %s466
        // Predicated region
        $region65: #{tpu_custom_call.1} parent=59 // pred_check
          %p468 = pneg %p95
        $region66: #{tpu_custom_call.1} parent=59 // pred_check_branch
          %470 = sbr.rel (%p468) target = $region68
        $region67: #{tpu_custom_call.1} parent=59 // pred_region
          %471 = dma.done %s464, 128
        $region68: #{tpu_custom_call.1} parent=59 // pred_fallthru
          _
        // Predicated region
        $region69: #{tpu_custom_call.1} parent=59 // pred_check
          %p472 = pneg %p116
        $region70: #{tpu_custom_call.1} parent=59 // pred_check_branch
          %474 = sbr.rel (%p472) target = $region72
        $region71: #{tpu_custom_call.1} parent=59 // pred_region
          %475 = dma.done [#allocation6], 1024
        $region72: #{tpu_custom_call.1} parent=59 // pred_fallthru
          _
        // Predicated region
        $region73: #{tpu_custom_call.1} parent=59 // pred_check
          %p476 = pneg %p137
        $region74: #{tpu_custom_call.1} parent=59 // pred_check_branch
          %478 = sbr.rel (%p476) target = $region76
        $region75: #{tpu_custom_call.1} parent=59 // pred_region
          %479 = dma.done [#allocation9], 1024
        $region76: #{tpu_custom_call.1} parent=59 // pred_fallthru
          _
        // Predicated region
        $region77: #{tpu_custom_call.1} parent=59 // pred_check
          %p480 = pneg %p158
        $region78: #{tpu_custom_call.1} parent=59 // pred_check_branch
          %482 = sbr.rel (%p480) target = $region80
        $region79: #{tpu_custom_call.1} parent=59 // pred_region
          %483 = dma.done [#allocation9], 1024
        $region80: #{tpu_custom_call.1} parent=59 // pred_fallthru
          _
        // Predicated region
        $region81: #{tpu_custom_call.1} parent=59 // pred_check
          %p484 = pneg %p179
        $region82: #{tpu_custom_call.1} parent=59 // pred_check_branch
          %486 = sbr.rel (%p484) target = $region84
        $region83: #{tpu_custom_call.1} parent=59 // pred_region
          %487 = dma.done [#allocation12], 256
        $region84: #{tpu_custom_call.1} parent=59 // pred_fallthru
          _
        // Predicated region
        $region85: #{tpu_custom_call.1} parent=59 // pred_check
          %p488 = pneg %p200
        $region86: #{tpu_custom_call.1} parent=59 // pred_check_branch
          %490 = sbr.rel (%p488) target = $region88
        $region87: #{tpu_custom_call.1} parent=59 // pred_region
          %491 = dma.done [#allocation12], 256
        $region88: #{tpu_custom_call.1} parent=59 // pred_fallthru
          _
        // Predicated region
        $region89: #{tpu_custom_call.1} parent=59 // pred_check
          %p492 = pneg %p221
        $region90: #{tpu_custom_call.1} parent=59 // pred_check_branch
          %494 = sbr.rel (%p492) target = $region92
        $region91: #{tpu_custom_call.1} parent=59 // pred_region
          %495 = dma.done [#allocation15], 16
        $region92: #{tpu_custom_call.1} parent=59 // pred_fallthru
          _
        // Predicated region
        $region93: #{tpu_custom_call.1} parent=59 // pred_check
          %p496 = pneg %p242
        $region94: #{tpu_custom_call.1} parent=59 // pred_check_branch
          %498 = sbr.rel (%p496) target = $region96
        $region95: #{tpu_custom_call.1} parent=59 // pred_region
          %499 = dma.done [#allocation15], 1024
        $region96: #{tpu_custom_call.1} parent=59 // pred_fallthru
          _
        // Predicated region
        $region97: #{tpu_custom_call.1} parent=59 // pred_check
          %p500 = pneg %p263
        $region98: #{tpu_custom_call.1} parent=59 // pred_check_branch
          %502 = sbr.rel (%p500) target = $region100
        $region99: #{tpu_custom_call.1} parent=59 // pred_region
          %503 = dma.done [#allocation18], 16
        $region100: #{tpu_custom_call.1} parent=59 // pred_fallthru
          _
        %s504 = sand.u32 %s56, 1
        %s505 = scalar_lea.sflag [#allocation3], %s504
        %s506 = sand.u32 %s56, 1
        %s507 = smul.addr %s506, 8
        %s508 = scalar_lea.vmem [#allocation2], %s507
        %p509 = pneg %p69
        %p510 = pneg %p66
        %s511 = sand.u32 %s34, 1
        %s512 = scalar_lea.sflag [#allocation6], %s511
        %s513 = sand.u32 %s82, 1
        %s514 = smul.addr %s513, 8
        %s515 = scalar_lea.vmem [#allocation5], %s514
        %p516 = pneg %p95
        %p517 = pneg %p92
        %p518 = pneg %p116
        %p519 = pneg %p113
        %p520 = pneg %p137
        %p521 = pneg %p134
        %p522 = pneg %p158
        %p523 = pneg %p155
        %p524 = pneg %p179
        %p525 = pneg %p176
        %p526 = pneg %p200
        %p527 = pneg %p197
        %p528 = pneg %p221
        %p529 = pneg %p218
        %p530 = pneg %p242
        %p531 = pneg %p239
        %p532 = pneg %p263
        %p533 = pneg %p260
        %p534 = pneg %p291
        %p535 = pneg %p288
        %s536 = sand.u32 %s278, 1
        %s537 = scalar_lea.sflag [#allocation4], %s536
        %s538 = sand.u32 %s278, 1
        %s539 = smul.addr %s538, 8
        %s540 = scalar_lea.vmem [#allocation19], %s539
        %v542 = vld [vmem:[%s458] sm:$0xff]
        %v543 = vld [vmem:[%s467] sm:$0xff]
        %vm544 = vcmask 261120
        %v545 = vsel %vm544, %v542, 0.0
        %546 = vadd.xlane.f32.xlu0 %v545
        %v547 = vpop.xlane.xlu0 %546
        %v548 = vrcp.pop 32.0
        %v549 = vmul.f32 %v547, %v548
        %v550 = vsub.f32 %v542, %v549
        %v551 = vmul.f32 %v550, %v550
        %v552 = vsel %vm544, %v551, 0.0
        %553 = vadd.xlane.f32.xlu0 %v552
        %v554 = vpop.xlane.xlu0 %553
        %v555 = vmul.f32 %v554, %v548
        %v556 = vadd.f32 %v555, 1e-05
        %v557 = vrsqrt.pop %v556
        %v558 = vmul.f32 %v550, %v557
        %v559 = vpack.c.bf16 %v558, %v558
        %v560 = vsel %vm544, %v543, 0.0
        %561 = vadd.xlane.f32.xlu0 %v560
        %v562 = vpop.xlane.xlu0 %561
        %v563 = vmul.f32 %v562, %v548
        %v564 = vsub.f32 %v543, %v563
        %v565 = vmul.f32 %v564, %v564
        %v566 = vsel %vm544, %v565, 0.0
        %567 = vadd.xlane.f32.xlu0 %v566
        %v568 = vpop.xlane.xlu0 %567
        %v569 = vmul.f32 %v568, %v548
        %v570 = vadd.f32 %v569, 1e-05
        %v571 = vrsqrt.pop %v570
        %v572 = vmul.f32 %v564, %v571
        %v573 = vpack.c.bf16 %v572, %v572
        %v574 = vld [vmem:[#allocation7] sm:$0xf]
        %v575 = vld [vmem:[#allocation7 + $0x4] sm:$0xf]
        %v576 = vld [vmem:[#allocation7 + $0x8] sm:$0xf]
        %v577 = vld [vmem:[#allocation7 + $0xc] sm:$0xf]
        %v582 = vunpack.c.l.b16 %v574
        %v583 = vunpack.c.l.b16 %v575
        %v584 = vunpack.c.l.b16 %v576
        %v585 = vunpack.c.l.b16 %v577
        %v586 = vpack.c.b16 %v583, %v582
        %v587 = vpack.c.b16 %v585, %v584
        %v591 = vsel %vm544, %v559, 0
        %593 = vmatprep.subr.bf16.mxu0 0
        %594 = vmatpush1.bf16.msra.mxu0 %v586
        %595 = vmatprep.subr.bf16.mxu0 0
        %596 = vmatpush1.bf16.msra.mxu0 %v587
        %597 = vmatprep.subr.bf16.mxu0 0
        %598 = vmatpush1.bf16.msra.mxu0 0
        %599 = vmatprep.subr.bf16.mxu0 0
        %600 = vmatpush1.bf16.msra.mxu0 0
        %601 = vmatprep.subr.bf16.mxu0 0
        %602 = vmatpush1.bf16.msra.mxu0 0
        %603 = vmatprep.subr.bf16.mxu0 0
        %604 = vmatpush1.bf16.msra.mxu0 0
        %605 = vmatprep.subr.bf16.mxu0 0
        %606 = vmatpush1.bf16.msra.mxu0 0
        %607 = vmatprep.subr.bf16.mxu0 0
        %608 = vmatpush1.bf16.msra.mxu0 0
        %609 = vmatprep.subr.bf16.mxu0 0
        %610 = vmatpush1.bf16.msra.mxu0 0
        %611 = vmatprep.subr.bf16.mxu0 0
        %612 = vmatpush1.bf16.msra.mxu0 0
        %613 = vmatprep.subr.bf16.mxu0 0
        %614 = vmatpush1.bf16.msra.mxu0 0
        %615 = vmatprep.subr.bf16.mxu0 0
        %616 = vmatpush1.bf16.msra.mxu0 0
        %617 = vmatprep.subr.bf16.mxu0 0
        %618 = vmatpush1.bf16.msra.mxu0 0
        %619 = vmatprep.subr.bf16.mxu0 0
        %620 = vmatpush1.bf16.msra.mxu0 0
        %621 = vmatprep.subr.bf16.mxu0 0
        %622 = vmatpush1.bf16.msra.mxu0 0
        %623 = vmatprep.subr.bf16.mxu0 0
        %624 = vmatpush1.bf16.msra.mxu0 0
        %625 = vmatprep.mubr.bf16.mxu0 0
        %626 = vmatmul.mubr.bf16.gmra.mrb[0].mxu0 %v591
        %v627 = vpop.f32.mrb[0].mxu0
        %v628 = vadd.f32 0.0, %v627
        %v629 = vpop.f32.mrb[0].mxu0
        %v630 = vpop.f32.mrb[0].mxu0
        %v631 = vpop.f32.mrb[0].mxu0
        %632 = vdwg.mxu0
        %v633 = vpack.c.bf16 %v628, %v628
        %v634 = vld [vmem:[#allocation8] sm:$0xf]
        %v635 = vld [vmem:[#allocation8 + $0x4] sm:$0xf]
        %v636 = vld [vmem:[#allocation8 + $0x8] sm:$0xf]
        %v637 = vld [vmem:[#allocation8 + $0xc] sm:$0xf]
        %v642 = vunpack.c.l.b16 %v634
        %v643 = vunpack.c.l.b16 %v635
        %v644 = vunpack.c.l.b16 %v636
        %v645 = vunpack.c.l.b16 %v637
        %v646 = vpack.c.b16 %v643, %v642
        %v647 = vpack.c.b16 %v645, %v644
        %v651 = vsel %vm544, %v573, 0
        %653 = vmatprep.subr.bf16.mxu0 0
        %654 = vmatpush1.bf16.msra.mxu0 %v646
        %655 = vmatprep.subr.bf16.mxu0 0
        %656 = vmatpush1.bf16.msra.mxu0 %v647
        %657 = vmatprep.subr.bf16.mxu0 0
        %658 = vmatpush1.bf16.msra.mxu0 0
        %659 = vmatprep.subr.bf16.mxu0 0
        %660 = vmatpush1.bf16.msra.mxu0 0
        %661 = vmatprep.subr.bf16.mxu0 0
        %662 = vmatpush1.bf16.msra.mxu0 0
        %663 = vmatprep.subr.bf16.mxu0 0
        %664 = vmatpush1.bf16.msra.mxu0 0
        %665 = vmatprep.subr.bf16.mxu0 0
        %666 = vmatpush1.bf16.msra.mxu0 0
        %667 = vmatprep.subr.bf16.mxu0 0
        %668 = vmatpush1.bf16.msra.mxu0 0
        %669 = vmatprep.subr.bf16.mxu0 0
        %670 = vmatpush1.bf16.msra.mxu0 0
        %671 = vmatprep.subr.bf16.mxu0 0
        %672 = vmatpush1.bf16.msra.mxu0 0
        %673 = vmatprep.subr.bf16.mxu0 0
        %674 = vmatpush1.bf16.msra.mxu0 0
        %675 = vmatprep.subr.bf16.mxu0 0
        %676 = vmatpush1.bf16.msra.mxu0 0
        %677 = vmatprep.subr.bf16.mxu0 0
        %678 = vmatpush1.bf16.msra.mxu0 0
        %679 = vmatprep.subr.bf16.mxu0 0
        %680 = vmatpush1.bf16.msra.mxu0 0
        %681 = vmatprep.subr.bf16.mxu0 0
        %682 = vmatpush1.bf16.msra.mxu0 0
        %683 = vmatprep.subr.bf16.mxu0 0
        %684 = vmatpush1.bf16.msra.mxu0 0
        %685 = vmatprep.mubr.bf16.mxu0 0
        %686 = vmatmul.mubr.bf16.gmra.mrb[0].mxu0 %v651
        %v687 = vpop.f32.mrb[0].mxu0
        %v688 = vadd.f32 0.0, %v687
        %v689 = vpop.f32.mrb[0].mxu0
        %v690 = vpop.f32.mrb[0].mxu0
        %v691 = vpop.f32.mrb[0].mxu0
        %692 = vdwg.mxu0
        %v693 = vpack.c.bf16 %v688, %v688
        %v694 = vld [vmem:[#allocation10] sm:$0xf]
        %v695 = vld [vmem:[#allocation10 + $0x4] sm:$0xf]
        %v696 = vld [vmem:[#allocation10 + $0x8] sm:$0xf]
        %v697 = vld [vmem:[#allocation10 + $0xc] sm:$0xf]
        %v702 = vunpack.c.l.b16 %v694
        %v703 = vunpack.c.l.b16 %v695
        %v704 = vunpack.c.l.b16 %v696
        %v705 = vunpack.c.l.b16 %v697
        %v706 = vpack.c.b16 %v703, %v702
        %v707 = vpack.c.b16 %v705, %v704
        %710 = vmatprep.subr.bf16.mxu0 0
        %711 = vmatpush1.bf16.msra.mxu0 %v706
        %712 = vmatprep.subr.bf16.mxu0 0
        %713 = vmatpush1.bf16.msra.mxu0 %v707
        %714 = vmatprep.subr.bf16.mxu0 0
        %715 = vmatpush1.bf16.msra.mxu0 0
        %716 = vmatprep.subr.bf16.mxu0 0
        %717 = vmatpush1.bf16.msra.mxu0 0
        %718 = vmatprep.subr.bf16.mxu0 0
        %719 = vmatpush1.bf16.msra.mxu0 0
        %720 = vmatprep.subr.bf16.mxu0 0
        %721 = vmatpush1.bf16.msra.mxu0 0
        %722 = vmatprep.subr.bf16.mxu0 0
        %723 = vmatpush1.bf16.msra.mxu0 0
        %724 = vmatprep.subr.bf16.mxu0 0
        %725 = vmatpush1.bf16.msra.mxu0 0
        %726 = vmatprep.subr.bf16.mxu0 0
        %727 = vmatpush1.bf16.msra.mxu0 0
        %728 = vmatprep.subr.bf16.mxu0 0
        %729 = vmatpush1.bf16.msra.mxu0 0
        %730 = vmatprep.subr.bf16.mxu0 0
        %731 = vmatpush1.bf16.msra.mxu0 0
        %732 = vmatprep.subr.bf16.mxu0 0
        %733 = vmatpush1.bf16.msra.mxu0 0
        %734 = vmatprep.subr.bf16.mxu0 0
        %735 = vmatpush1.bf16.msra.mxu0 0
        %736 = vmatprep.subr.bf16.mxu0 0
        %737 = vmatpush1.bf16.msra.mxu0 0
        %738 = vmatprep.subr.bf16.mxu0 0
        %739 = vmatpush1.bf16.msra.mxu0 0
        %740 = vmatprep.subr.bf16.mxu0 0
        %741 = vmatpush1.bf16.msra.mxu0 0
        %742 = vmatprep.mubr.bf16.mxu0 0
        %743 = vmatmul.mubr.bf16.gmra.mrb[0].mxu0 %v651
        %v744 = vpop.f32.mrb[0].mxu0
        %v745 = vadd.f32 0.0, %v744
        %v746 = vpop.f32.mrb[0].mxu0
        %v747 = vpop.f32.mrb[0].mxu0
        %v748 = vpop.f32.mrb[0].mxu0
        %749 = vdwg.mxu0
        %v750 = vpack.c.bf16 %v745, %v745
        %vm751 = vcmask 64512
        %v753 = vsel %vm751, %v633, 0
        %v756 = vsel %vm751, %v693, 0
        %758 = vmatprep.subr.bf16.mxu0 0
        %759 = vmatpush1.bf16.xpose.msra.mxu0 %v756
        %760 = vmatprep.subr.bf16.mxu0 0
        %761 = vmatpush1.bf16.xpose.msra.mxu0 0
        %762 = vmatprep.subr.bf16.mxu0 0
        %763 = vmatpush1.bf16.xpose.msra.mxu0 0
        %764 = vmatprep.subr.bf16.mxu0 0
        %765 = vmatpush1.bf16.xpose.msra.mxu0 0
        %766 = vmatprep.subr.bf16.mxu0 0
        %767 = vmatpush1.bf16.xpose.msra.mxu0 0
        %768 = vmatprep.subr.bf16.mxu0 0
        %769 = vmatpush1.bf16.xpose.msra.mxu0 0
        %770 = vmatprep.subr.bf16.mxu0 0
        %771 = vmatpush1.bf16.xpose.msra.mxu0 0
        %772 = vmatprep.subr.bf16.mxu0 0
        %773 = vmatpush1.bf16.xpose.msra.mxu0 0
        %774 = vmatprep.subr.bf16.mxu0 0
        %775 = vmatpush1.bf16.xpose.msra.mxu0 0
        %776 = vmatprep.subr.bf16.mxu0 0
        %777 = vmatpush1.bf16.xpose.msra.mxu0 0
        %778 = vmatprep.subr.bf16.mxu0 0
        %779 = vmatpush1.bf16.xpose.msra.mxu0 0
        %780 = vmatprep.subr.bf16.mxu0 0
        %781 = vmatpush1.bf16.xpose.msra.mxu0 0
        %782 = vmatprep.subr.bf16.mxu0 0
        %783 = vmatpush1.bf16.xpose.msra.mxu0 0
        %784 = vmatprep.subr.bf16.mxu0 0
        %785 = vmatpush1.bf16.xpose.msra.mxu0 0
        %786 = vmatprep.subr.bf16.mxu0 0
        %787 = vmatpush1.bf16.xpose.msra.mxu0 0
        %788 = vmatprep.subr.bf16.mxu0 0
        %789 = vmatpush1.bf16.xpose.msra.mxu0 0
        %790 = vmatprep.mubr.bf16.mxu0 0
        %791 = vmatmul.mubr.bf16.gmra.mrb[0].mxu0 %v753
        %v792 = vpop.f32.mrb[0].mxu0
        %v793 = vadd.f32 0.0, %v792
        %v794 = vpop.f32.mrb[0].mxu0
        %v795 = vpop.f32.mrb[0].mxu0
        %v796 = vpop.f32.mrb[0].mxu0
        %797 = vdwg.mxu0
        %v798 = vsel %vm751, %v793, -inf
        %799 = vmax.xlane.f32.xlu0 %v798
        %v800 = vpop.xlane.xlu0 %799
        %v801 = vsub.f32 %v793, %v800
        %v802 = vmul.f32 %v801, 1.442695
        %v803 = vpow.pop %v802
        %v804 = vsel %vm751, %v803, 0.0
        %805 = vadd.xlane.f32.xlu0 %v804
        %v806 = vpop.xlane.xlu0 %805
        %v807 = vrcp.pop %v806
        %v808 = vmul.f32 %v803, %v807
        %v809 = vpack.c.bf16 %v808, %v808
        %v811 = vsel %vm751, %v809, 0
        %vm813 = vcmask 1043456
        %v815 = vsel %vm813, %v750, 0
        %817 = vmatprep.subr.bf16.mxu0 0
        %818 = vmatpush1.bf16.msra.mxu0 %v815
        %819 = vmatprep.subr.bf16.mxu0 0
        %820 = vmatpush1.bf16.msra.mxu0 0
        %821 = vmatprep.subr.bf16.mxu0 0
        %822 = vmatpush1.bf16.msra.mxu0 0
        %823 = vmatprep.subr.bf16.mxu0 0
        %824 = vmatpush1.bf16.msra.mxu0 0
        %825 = vmatprep.subr.bf16.mxu0 0
        %826 = vmatpush1.bf16.msra.mxu0 0
        %827 = vmatprep.subr.bf16.mxu0 0
        %828 = vmatpush1.bf16.msra.mxu0 0
        %829 = vmatprep.subr.bf16.mxu0 0
        %830 = vmatpush1.bf16.msra.mxu0 0
        %831 = vmatprep.subr.bf16.mxu0 0
        %832 = vmatpush1.bf16.msra.mxu0 0
        %833 = vmatprep.subr.bf16.mxu0 0
        %834 = vmatpush1.bf16.msra.mxu0 0
        %835 = vmatprep.subr.bf16.mxu0 0
        %836 = vmatpush1.bf16.msra.mxu0 0
        %837 = vmatprep.subr.bf16.mxu0 0
        %838 = vmatpush1.bf16.msra.mxu0 0
        %839 = vmatprep.subr.bf16.mxu0 0
        %840 = vmatpush1.bf16.msra.mxu0 0
        %841 = vmatprep.subr.bf16.mxu0 0
        %842 = vmatpush1.bf16.msra.mxu0 0
        %843 = vmatprep.subr.bf16.mxu0 0
        %844 = vmatpush1.bf16.msra.mxu0 0
        %845 = vmatprep.subr.bf16.mxu0 0
        %846 = vmatpush1.bf16.msra.mxu0 0
        %847 = vmatprep.subr.bf16.mxu0 0
        %848 = vmatpush1.bf16.msra.mxu0 0
        %849 = vmatprep.mubr.bf16.mxu0 0
        %850 = vmatmul.mubr.bf16.gmra.mrb[0].mxu0 %v811
        %v851 = vpop.f32.mrb[0].mxu0
        %v852 = vadd.f32 0.0, %v851
        %v853 = vpop.f32.mrb[0].mxu0
        %v854 = vpop.f32.mrb[0].mxu0
        %v855 = vpop.f32.mrb[0].mxu0
        %856 = vdwg.mxu0
        %v857 = vpack.c.bf16 %v852, %v852
        %v858 = vld [vmem:[#allocation11] sm:$0xf]
        %s859 = scalar_lea.vmem [#allocation7], 16
        %v860 = vld [vmem:[%s859] sm:$0xf]
        %v861 = vld [vmem:[%s859 + $0x4] sm:$0xf]
        %v862 = vld [vmem:[%s859 + $0x8] sm:$0xf]
        %v863 = vld [vmem:[%s859 + $0xc] sm:$0xf]
        %v868 = vunpack.c.l.b16 %v860
        %v869 = vunpack.c.l.b16 %v861
        %v870 = vunpack.c.l.b16 %v862
        %v871 = vunpack.c.l.b16 %v863
        %v872 = vpack.c.b16 %v869, %v868
        %v873 = vpack.c.b16 %v871, %v870
        %876 = vmatprep.subr.bf16.mxu0 0
        %877 = vmatpush1.bf16.msra.mxu0 %v872
        %878 = vmatprep.subr.bf16.mxu0 0
        %879 = vmatpush1.bf16.msra.mxu0 %v873
        %880 = vmatprep.subr.bf16.mxu0 0
        %881 = vmatpush1.bf16.msra.mxu0 0
        %882 = vmatprep.subr.bf16.mxu0 0
        %883 = vmatpush1.bf16.msra.mxu0 0
        %884 = vmatprep.subr.bf16.mxu0 0
        %885 = vmatpush1.bf16.msra.mxu0 0
        %886 = vmatprep.subr.bf16.mxu0 0
        %887 = vmatpush1.bf16.msra.mxu0 0
        %888 = vmatprep.subr.bf16.mxu0 0
        %889 = vmatpush1.bf16.msra.mxu0 0
        %890 = vmatprep.subr.bf16.mxu0 0
        %891 = vmatpush1.bf16.msra.mxu0 0
        %892 = vmatprep.subr.bf16.mxu0 0
        %893 = vmatpush1.bf16.msra.mxu0 0
        %894 = vmatprep.subr.bf16.mxu0 0
        %895 = vmatpush1.bf16.msra.mxu0 0
        %896 = vmatprep.subr.bf16.mxu0 0
        %897 = vmatpush1.bf16.msra.mxu0 0
        %898 = vmatprep.subr.bf16.mxu0 0
        %899 = vmatpush1.bf16.msra.mxu0 0
        %900 = vmatprep.subr.bf16.mxu0 0
        %901 = vmatpush1.bf16.msra.mxu0 0
        %902 = vmatprep.subr.bf16.mxu0 0
        %903 = vmatpush1.bf16.msra.mxu0 0
        %904 = vmatprep.subr.bf16.mxu0 0
        %905 = vmatpush1.bf16.msra.mxu0 0
        %906 = vmatprep.subr.bf16.mxu0 0
        %907 = vmatpush1.bf16.msra.mxu0 0
        %908 = vmatprep.mubr.bf16.mxu0 0
        %909 = vmatmul.mubr.bf16.gmra.mrb[0].mxu0 %v591
        %v910 = vpop.f32.mrb[0].mxu0
        %v911 = vadd.f32 0.0, %v910
        %v912 = vpop.f32.mrb[0].mxu0
        %v913 = vpop.f32.mrb[0].mxu0
        %v914 = vpop.f32.mrb[0].mxu0
        %915 = vdwg.mxu0
        %v916 = vpack.c.bf16 %v911, %v911
        %s917 = scalar_lea.vmem [#allocation8], 16
        %v918 = vld [vmem:[%s917] sm:$0xf]
        %v919 = vld [vmem:[%s917 + $0x4] sm:$0xf]
        %v920 = vld [vmem:[%s917 + $0x8] sm:$0xf]
        %v921 = vld [vmem:[%s917 + $0xc] sm:$0xf]
        %v926 = vunpack.c.l.b16 %v918
        %v927 = vunpack.c.l.b16 %v919
        %v928 = vunpack.c.l.b16 %v920
        %v929 = vunpack.c.l.b16 %v921
        %v930 = vpack.c.b16 %v927, %v926
        %v931 = vpack.c.b16 %v929, %v928
        %934 = vmatprep.subr.bf16.mxu0 0
        %935 = vmatpush1.bf16.msra.mxu0 %v930
        %936 = vmatprep.subr.bf16.mxu0 0
        %937 = vmatpush1.bf16.msra.mxu0 %v931
        %938 = vmatprep.subr.bf16.mxu0 0
        %939 = vmatpush1.bf16.msra.mxu0 0
        %940 = vmatprep.subr.bf16.mxu0 0
        %941 = vmatpush1.bf16.msra.mxu0 0
        %942 = vmatprep.subr.bf16.mxu0 0
        %943 = vmatpush1.bf16.msra.mxu0 0
        %944 = vmatprep.subr.bf16.mxu0 0
        %945 = vmatpush1.bf16.msra.mxu0 0
        %946 = vmatprep.subr.bf16.mxu0 0
        %947 = vmatpush1.bf16.msra.mxu0 0
        %948 = vmatprep.subr.bf16.mxu0 0
        %949 = vmatpush1.bf16.msra.mxu0 0
        %950 = vmatprep.subr.bf16.mxu0 0
        %951 = vmatpush1.bf16.msra.mxu0 0
        %952 = vmatprep.subr.bf16.mxu0 0
        %953 = vmatpush1.bf16.msra.mxu0 0
        %954 = vmatprep.subr.bf16.mxu0 0
        %955 = vmatpush1.bf16.msra.mxu0 0
        %956 = vmatprep.subr.bf16.mxu0 0
        %957 = vmatpush1.bf16.msra.mxu0 0
        %958 = vmatprep.subr.bf16.mxu0 0
        %959 = vmatpush1.bf16.msra.mxu0 0
        %960 = vmatprep.subr.bf16.mxu0 0
        %961 = vmatpush1.bf16.msra.mxu0 0
        %962 = vmatprep.subr.bf16.mxu0 0
        %963 = vmatpush1.bf16.msra.mxu0 0
        %964 = vmatprep.subr.bf16.mxu0 0
        %965 = vmatpush1.bf16.msra.mxu0 0
        %966 = vmatprep.mubr.bf16.mxu0 0
        %967 = vmatmul.mubr.bf16.gmra.mrb[0].mxu0 %v651
        %v968 = vpop.f32.mrb[0].mxu0
        %v969 = vadd.f32 0.0, %v968
        %v970 = vpop.f32.mrb[0].mxu0
        %v971 = vpop.f32.mrb[0].mxu0
        %v972 = vpop.f32.mrb[0].mxu0
        %973 = vdwg.mxu0
        %v974 = vpack.c.bf16 %v969, %v969
        %s975 = scalar_lea.vmem [#allocation10], 16
        %v976 = vld [vmem:[%s975] sm:$0xf]
        %v977 = vld [vmem:[%s975 + $0x4] sm:$0xf]
        %v978 = vld [vmem:[%s975 + $0x8] sm:$0xf]
        %v979 = vld [vmem:[%s975 + $0xc] sm:$0xf]
        %v984 = vunpack.c.l.b16 %v976
        %v985 = vunpack.c.l.b16 %v977
        %v986 = vunpack.c.l.b16 %v978
        %v987 = vunpack.c.l.b16 %v979
        %v988 = vpack.c.b16 %v985, %v984
        %v989 = vpack.c.b16 %v987, %v986
        %992 = vmatprep.subr.bf16.mxu0 0
        %993 = vmatpush1.bf16.msra.mxu0 %v988
        %994 = vmatprep.subr.bf16.mxu0 0
        %995 = vmatpush1.bf16.msra.mxu0 %v989
        %996 = vmatprep.subr.bf16.mxu0 0
        %997 = vmatpush1.bf16.msra.mxu0 0
        %998 = vmatprep.subr.bf16.mxu0 0
        %999 = vmatpush1.bf16.msra.mxu0 0
        %1000 = vmatprep.subr.bf16.mxu0 0
        %1001 = vmatpush1.bf16.msra.mxu0 0
        %1002 = vmatprep.subr.bf16.mxu0 0
        %1003 = vmatpush1.bf16.msra.mxu0 0
        %1004 = vmatprep.subr.bf16.mxu0 0
        %1005 = vmatpush1.bf16.msra.mxu0 0
        %1006 = vmatprep.subr.bf16.mxu0 0
        %1007 = vmatpush1.bf16.msra.mxu0 0
        %1008 = vmatprep.subr.bf16.mxu0 0
        %1009 = vmatpush1.bf16.msra.mxu0 0
        %1010 = vmatprep.subr.bf16.mxu0 0
        %1011 = vmatpush1.bf16.msra.mxu0 0
        %1012 = vmatprep.subr.bf16.mxu0 0
        %1013 = vmatpush1.bf16.msra.mxu0 0
        %1014 = vmatprep.subr.bf16.mxu0 0
        %1015 = vmatpush1.bf16.msra.mxu0 0
        %1016 = vmatprep.subr.bf16.mxu0 0
        %1017 = vmatpush1.bf16.msra.mxu0 0
        %1018 = vmatprep.subr.bf16.mxu0 0
        %1019 = vmatpush1.bf16.msra.mxu0 0
        %1020 = vmatprep.subr.bf16.mxu0 0
        %1021 = vmatpush1.bf16.msra.mxu0 0
        %1022 = vmatprep.subr.bf16.mxu0 0
        %1023 = vmatpush1.bf16.msra.mxu0 0
        %1024 = vmatprep.mubr.bf16.mxu0 0
        %1025 = vmatmul.mubr.bf16.gmra.mrb[0].mxu0 %v651
        %v1026 = vpop.f32.mrb[0].mxu0
        %v1027 = vadd.f32 0.0, %v1026
        %v1028 = vpop.f32.mrb[0].mxu0
        %v1029 = vpop.f32.mrb[0].mxu0
        %v1030 = vpop.f32.mrb[0].mxu0
        %1031 = vdwg.mxu0
        %v1032 = vpack.c.bf16 %v1027, %v1027
        %v1034 = vsel %vm751, %v916, 0
        %v1037 = vsel %vm751, %v974, 0
        %1039 = vmatprep.subr.bf16.mxu0 0
        %1040 = vmatpush1.bf16.xpose.msra.mxu0 %v1037
        %1041 = vmatprep.subr.bf16.mxu0 0
        %1042 = vmatpush1.bf16.xpose.msra.mxu0 0
        %1043 = vmatprep.subr.bf16.mxu0 0
        %1044 = vmatpush1.bf16.xpose.msra.mxu0 0
        %1045 = vmatprep.subr.bf16.mxu0 0
        %1046 = vmatpush1.bf16.xpose.msra.mxu0 0
        %1047 = vmatprep.subr.bf16.mxu0 0
        %1048 = vmatpush1.bf16.xpose.msra.mxu0 0
        %1049 = vmatprep.subr.bf16.mxu0 0
        %1050 = vmatpush1.bf16.xpose.msra.mxu0 0
        %1051 = vmatprep.subr.bf16.mxu0 0
        %1052 = vmatpush1.bf16.xpose.msra.mxu0 0
        %1053 = vmatprep.subr.bf16.mxu0 0
        %1054 = vmatpush1.bf16.xpose.msra.mxu0 0
        %1055 = vmatprep.subr.bf16.mxu0 0
        %1056 = vmatpush1.bf16.xpose.msra.mxu0 0
        %1057 = vmatprep.subr.bf16.mxu0 0
        %1058 = vmatpush1.bf16.xpose.msra.mxu0 0
        %1059 = vmatprep.subr.bf16.mxu0 0
        %1060 = vmatpush1.bf16.xpose.msra.mxu0 0
        %1061 = vmatprep.subr.bf16.mxu0 0
        %1062 = vmatpush1.bf16.xpose.msra.mxu0 0
        %1063 = vmatprep.subr.bf16.mxu0 0
        %1064 = vmatpush1.bf16.xpose.msra.mxu0 0
        %1065 = vmatprep.subr.bf16.mxu0 0
        %1066 = vmatpush1.bf16.xpose.msra.mxu0 0
        %1067 = vmatprep.subr.bf16.mxu0 0
        %1068 = vmatpush1.bf16.xpose.msra.mxu0 0
        %1069 = vmatprep.subr.bf16.mxu0 0
        %1070 = vmatpush1.bf16.xpose.msra.mxu0 0
        %1071 = vmatprep.mubr.bf16.mxu0 0
        %1072 = vmatmul.mubr.bf16.gmra.mrb[0].mxu0 %v1034
        %v1073 = vpop.f32.mrb[0].mxu0
        %v1074 = vadd.f32 0.0, %v1073
        %v1075 = vpop.f32.mrb[0].mxu0
        %v1076 = vpop.f32.mrb[0].mxu0
        %v1077 = vpop.f32.mrb[0].mxu0
        %1078 = vdwg.mxu0
        %v1079 = vsel %vm751, %v1074, -inf
        %1080 = vmax.xlane.f32.xlu0 %v1079
        %v1081 = vpop.xlane.xlu0 %1080
        %v1082 = vsub.f32 %v1074, %v1081
        %v1083 = vmul.f32 %v1082, 1.442695
        %v1084 = vpow.pop %v1083
        %v1085 = vsel %vm751, %v1084, 0.0
        %1086 = vadd.xlane.f32.xlu0 %v1085
        %v1087 = vpop.xlane.xlu0 %1086
        %v1088 = vrcp.pop %v1087
        %v1089 = vmul.f32 %v1084, %v1088
        %v1090 = vpack.c.bf16 %v1089, %v1089
        %v1092 = vsel %vm751, %v1090, 0
        %v1095 = vsel %vm813, %v1032, 0
        %1097 = vmatprep.subr.bf16.mxu0 0
        %1098 = vmatpush1.bf16.msra.mxu0 %v1095
        %1099 = vmatprep.subr.bf16.mxu0 0
        %1100 = vmatpush1.bf16.msra.mxu0 0
        %1101 = vmatprep.subr.bf16.mxu0 0
        %1102 = vmatpush1.bf16.msra.mxu0 0
        %1103 = vmatprep.subr.bf16.mxu0 0
        %1104 = vmatpush1.bf16.msra.mxu0 0
        %1105 = vmatprep.subr.bf16.mxu0 0
        %1106 = vmatpush1.bf16.msra.mxu0 0
        %1107 = vmatprep.subr.bf16.mxu0 0
        %1108 = vmatpush1.bf16.msra.mxu0 0
        %1109 = vmatprep.subr.bf16.mxu0 0
        %1110 = vmatpush1.bf16.msra.mxu0 0
        %1111 = vmatprep.subr.bf16.mxu0 0
        %1112 = vmatpush1.bf16.msra.mxu0 0
        %1113 = vmatprep.subr.bf16.mxu0 0
        %1114 = vmatpush1.bf16.msra.mxu0 0
        %1115 = vmatprep.subr.bf16.mxu0 0
        %1116 = vmatpush1.bf16.msra.mxu0 0
        %1117 = vmatprep.subr.bf16.mxu0 0
        %1118 = vmatpush1.bf16.msra.mxu0 0
        %1119 = vmatprep.subr.bf16.mxu0 0
        %1120 = vmatpush1.bf16.msra.mxu0 0
        %1121 = vmatprep.subr.bf16.mxu0 0
        %1122 = vmatpush1.bf16.msra.mxu0 0
        %1123 = vmatprep.subr.bf16.mxu0 0
        %1124 = vmatpush1.bf16.msra.mxu0 0
        %1125 = vmatprep.subr.bf16.mxu0 0
        %1126 = vmatpush1.bf16.msra.mxu0 0
        %1127 = vmatprep.subr.bf16.mxu0 0
        %1128 = vmatpush1.bf16.msra.mxu0 0
        %1129 = vmatprep.mubr.bf16.mxu0 0
        %1130 = vmatmul.mubr.bf16.gmra.mrb[0].mxu0 %v1092
        %v1131 = vpop.f32.mrb[0].mxu0
        %v1132 = vadd.f32 0.0, %v1131
        %v1133 = vpop.f32.mrb[0].mxu0
        %v1134 = vpop.f32.mrb[0].mxu0
        %v1135 = vpop.f32.mrb[0].mxu0
        %1136 = vdwg.mxu0
        %v1137 = vpack.c.bf16 %v1132, %v1132
        %s1138 = scalar_lea.vmem [#allocation11], 4
        %v1139 = vld [vmem:[%s1138] sm:$0xf]
        %v1141 = vsel %vm751, %v1137, 0
        %v1144 = vsel %vm813, %v1139, 0
        %1146 = vmatprep.subr.bf16.mxu0 0
        %1147 = vmatpush1.bf16.msra.mxu0 %v1144
        %1148 = vmatprep.subr.bf16.mxu0 0
        %1149 = vmatpush1.bf16.msra.mxu0 0
        %1150 = vmatprep.subr.bf16.mxu0 0
        %1151 = vmatpush1.bf16.msra.mxu0 0
        %1152 = vmatprep.subr.bf16.mxu0 0
        %1153 = vmatpush1.bf16.msra.mxu0 0
        %1154 = vmatprep.subr.bf16.mxu0 0
        %1155 = vmatpush1.bf16.msra.mxu0 0
        %1156 = vmatprep.subr.bf16.mxu0 0
        %1157 = vmatpush1.bf16.msra.mxu0 0
        %1158 = vmatprep.subr.bf16.mxu0 0
        %1159 = vmatpush1.bf16.msra.mxu0 0
        %1160 = vmatprep.subr.bf16.mxu0 0
        %1161 = vmatpush1.bf16.msra.mxu0 0
        %1162 = vmatprep.subr.bf16.mxu0 0
        %1163 = vmatpush1.bf16.msra.mxu0 0
        %1164 = vmatprep.subr.bf16.mxu0 0
        %1165 = vmatpush1.bf16.msra.mxu0 0
        %1166 = vmatprep.subr.bf16.mxu0 0
        %1167 = vmatpush1.bf16.msra.mxu0 0
        %1168 = vmatprep.subr.bf16.mxu0 0
        %1169 = vmatpush1.bf16.msra.mxu0 0
        %1170 = vmatprep.subr.bf16.mxu0 0
        %1171 = vmatpush1.bf16.msra.mxu0 0
        %1172 = vmatprep.subr.bf16.mxu0 0
        %1173 = vmatpush1.bf16.msra.mxu0 0
        %1174 = vmatprep.subr.bf16.mxu0 0
        %1175 = vmatpush1.bf16.msra.mxu0 0
        %1176 = vmatprep.subr.bf16.mxu0 0
        %1177 = vmatpush1.bf16.msra.mxu0 0
        %1178 = vmatprep.mubr.bf16.mxu0 0
        %1179 = vmatmul.mubr.bf16.gmra.mrb[0].mxu0 %v1141
        %v1180 = vpop.f32.mrb[0].mxu0
        %v1181 = vadd.f32 0.0, %v1180
        %v1182 = vpop.f32.mrb[0].mxu0
        %v1183 = vpop.f32.mrb[0].mxu0
        %v1184 = vpop.f32.mrb[0].mxu0
        %1185 = vdwg.mxu0
        %v1187 = vsel %vm751, %v857, 0
        %v1190 = vsel %vm813, %v858, 0
        %1192 = vmatprep.subr.bf16.mxu0 0
        %1193 = vmatpush1.bf16.msra.mxu0 %v1190
        %1194 = vmatprep.subr.bf16.mxu0 0
        %1195 = vmatpush1.bf16.msra.mxu0 0
        %1196 = vmatprep.subr.bf16.mxu0 0
        %1197 = vmatpush1.bf16.msra.mxu0 0
        %1198 = vmatprep.subr.bf16.mxu0 0
        %1199 = vmatpush1.bf16.msra.mxu0 0
        %1200 = vmatprep.subr.bf16.mxu0 0
        %1201 = vmatpush1.bf16.msra.mxu0 0
        %1202 = vmatprep.subr.bf16.mxu0 0
        %1203 = vmatpush1.bf16.msra.mxu0 0
        %1204 = vmatprep.subr.bf16.mxu0 0
        %1205 = vmatpush1.bf16.msra.mxu0 0
        %1206 = vmatprep.subr.bf16.mxu0 0
        %1207 = vmatpush1.bf16.msra.mxu0 0
        %1208 = vmatprep.subr.bf16.mxu0 0
        %1209 = vmatpush1.bf16.msra.mxu0 0
        %1210 = vmatprep.subr.bf16.mxu0 0
        %1211 = vmatpush1.bf16.msra.mxu0 0
        %1212 = vmatprep.subr.bf16.mxu0 0
        %1213 = vmatpush1.bf16.msra.mxu0 0
        %1214 = vmatprep.subr.bf16.mxu0 0
        %1215 = vmatpush1.bf16.msra.mxu0 0
        %1216 = vmatprep.subr.bf16.mxu0 0
        %1217 = vmatpush1.bf16.msra.mxu0 0
        %1218 = vmatprep.subr.bf16.mxu0 0
        %1219 = vmatpush1.bf16.msra.mxu0 0
        %1220 = vmatprep.subr.bf16.mxu0 0
        %1221 = vmatpush1.bf16.msra.mxu0 0
        %1222 = vmatprep.subr.bf16.mxu0 0
        %1223 = vmatpush1.bf16.msra.mxu0 0
        %1224 = vmatprep.mubr.bf16.mxu0 0
        %1225 = vmatmul.mubr.bf16.gmra.mrb[0].mxu0 %v1187
        %v1226 = vpop.f32.mrb[0].mxu0
        %v1227 = vadd.f32 %v1181, %v1226
        %v1228 = vpop.f32.mrb[0].mxu0
        %v1229 = vpop.f32.mrb[0].mxu0
        %v1230 = vpop.f32.mrb[0].mxu0
        %1231 = vdwg.mxu0
        %s1232 = scalar_lea.vmem [#allocation7], 32
        %v1233 = vld [vmem:[%s1232] sm:$0xf]
        %v1234 = vld [vmem:[%s1232 + $0x4] sm:$0xf]
        %v1235 = vld [vmem:[%s1232 + $0x8] sm:$0xf]
        %v1236 = vld [vmem:[%s1232 + $0xc] sm:$0xf]
        %v1241 = vunpack.c.l.b16 %v1233
        %v1242 = vunpack.c.l.b16 %v1234
        %v1243 = vunpack.c.l.b16 %v1235
        %v1244 = vunpack.c.l.b16 %v1236
        %v1245 = vpack.c.b16 %v1242, %v1241
        %v1246 = vpack.c.b16 %v1244, %v1243
        %1249 = vmatprep.subr.bf16.mxu0 0
        %1250 = vmatpush1.bf16.msra.mxu0 %v1245
        %1251 = vmatprep.subr.bf16.mxu0 0
        %1252 = vmatpush1.bf16.msra.mxu0 %v1246
        %1253 = vmatprep.subr.bf16.mxu0 0
        %1254 = vmatpush1.bf16.msra.mxu0 0
        %1255 = vmatprep.subr.bf16.mxu0 0
        %1256 = vmatpush1.bf16.msra.mxu0 0
        %1257 = vmatprep.subr.bf16.mxu0 0
        %1258 = vmatpush1.bf16.msra.mxu0 0
        %1259 = vmatprep.subr.bf16.mxu0 0
        %1260 = vmatpush1.bf16.msra.mxu0 0
        %1261 = vmatprep.subr.bf16.mxu0 0
        %1262 = vmatpush1.bf16.msra.mxu0 0
        %1263 = vmatprep.subr.bf16.mxu0 0
        %1264 = vmatpush1.bf16.msra.mxu0 0
        %1265 = vmatprep.subr.bf16.mxu0 0
        %1266 = vmatpush1.bf16.msra.mxu0 0
        %1267 = vmatprep.subr.bf16.mxu0 0
        %1268 = vmatpush1.bf16.msra.mxu0 0
        %1269 = vmatprep.subr.bf16.mxu0 0
        %1270 = vmatpush1.bf16.msra.mxu0 0
        %1271 = vmatprep.subr.bf16.mxu0 0
        %1272 = vmatpush1.bf16.msra.mxu0 0
        %1273 = vmatprep.subr.bf16.mxu0 0
        %1274 = vmatpush1.bf16.msra.mxu0 0
        %1275 = vmatprep.subr.bf16.mxu0 0
        %1276 = vmatpush1.bf16.msra.mxu0 0
        %1277 = vmatprep.subr.bf16.mxu0 0
        %1278 = vmatpush1.bf16.msra.mxu0 0
        %1279 = vmatprep.subr.bf16.mxu0 0
        %1280 = vmatpush1.bf16.msra.mxu0 0
        %1281 = vmatprep.mubr.bf16.mxu0 0
        %1282 = vmatmul.mubr.bf16.gmra.mrb[0].mxu0 %v591
        %v1283 = vpop.f32.mrb[0].mxu0
        %v1284 = vadd.f32 0.0, %v1283
        %v1285 = vpop.f32.mrb[0].mxu0
        %v1286 = vpop.f32.mrb[0].mxu0
        %v1287 = vpop.f32.mrb[0].mxu0
        %1288 = vdwg.mxu0
        %v1289 = vpack.c.bf16 %v1284, %v1284
        %s1290 = scalar_lea.vmem [#allocation8], 32
        %v1291 = vld [vmem:[%s1290] sm:$0xf]
        %v1292 = vld [vmem:[%s1290 + $0x4] sm:$0xf]
        %v1293 = vld [vmem:[%s1290 + $0x8] sm:$0xf]
        %v1294 = vld [vmem:[%s1290 + $0xc] sm:$0xf]
        %v1299 = vunpack.c.l.b16 %v1291
        %v1300 = vunpack.c.l.b16 %v1292
        %v1301 = vunpack.c.l.b16 %v1293
        %v1302 = vunpack.c.l.b16 %v1294
        %v1303 = vpack.c.b16 %v1300, %v1299
        %v1304 = vpack.c.b16 %v1302, %v1301
        %1307 = vmatprep.subr.bf16.mxu0 0
        %1308 = vmatpush1.bf16.msra.mxu0 %v1303
        %1309 = vmatprep.subr.bf16.mxu0 0
        %1310 = vmatpush1.bf16.msra.mxu0 %v1304
        %1311 = vmatprep.subr.bf16.mxu0 0
        %1312 = vmatpush1.bf16.msra.mxu0 0
        %1313 = vmatprep.subr.bf16.mxu0 0
        %1314 = vmatpush1.bf16.msra.mxu0 0
        %1315 = vmatprep.subr.bf16.mxu0 0
        %1316 = vmatpush1.bf16.msra.mxu0 0
        %1317 = vmatprep.subr.bf16.mxu0 0
        %1318 = vmatpush1.bf16.msra.mxu0 0
        %1319 = vmatprep.subr.bf16.mxu0 0
        %1320 = vmatpush1.bf16.msra.mxu0 0
        %1321 = vmatprep.subr.bf16.mxu0 0
        %1322 = vmatpush1.bf16.msra.mxu0 0
        %1323 = vmatprep.subr.bf16.mxu0 0
        %1324 = vmatpush1.bf16.msra.mxu0 0
        %1325 = vmatprep.subr.bf16.mxu0 0
        %1326 = vmatpush1.bf16.msra.mxu0 0
        %1327 = vmatprep.subr.bf16.mxu0 0
        %1328 = vmatpush1.bf16.msra.mxu0 0
        %1329 = vmatprep.subr.bf16.mxu0 0
        %1330 = vmatpush1.bf16.msra.mxu0 0
        %1331 = vmatprep.subr.bf16.mxu0 0
        %1332 = vmatpush1.bf16.msra.mxu0 0
        %1333 = vmatprep.subr.bf16.mxu0 0
        %1334 = vmatpush1.bf16.msra.mxu0 0
        %1335 = vmatprep.subr.bf16.mxu0 0
        %1336 = vmatpush1.bf16.msra.mxu0 0
        %1337 = vmatprep.subr.bf16.mxu0 0
        %1338 = vmatpush1.bf16.msra.mxu0 0
        %1339 = vmatprep.mubr.bf16.mxu0 0
        %1340 = vmatmul.mubr.bf16.gmra.mrb[0].mxu0 %v651
        %v1341 = vpop.f32.mrb[0].mxu0
        %v1342 = vadd.f32 0.0, %v1341
        %v1343 = vpop.f32.mrb[0].mxu0
        %v1344 = vpop.f32.mrb[0].mxu0
        %v1345 = vpop.f32.mrb[0].mxu0
        %1346 = vdwg.mxu0
        %v1347 = vpack.c.bf16 %v1342, %v1342
        %s1348 = scalar_lea.vmem [#allocation10], 32
        %v1349 = vld [vmem:[%s1348] sm:$0xf]
        %v1350 = vld [vmem:[%s1348 + $0x4] sm:$0xf]
        %v1351 = vld [vmem:[%s1348 + $0x8] sm:$0xf]
        %v1352 = vld [vmem:[%s1348 + $0xc] sm:$0xf]
        %v1357 = vunpack.c.l.b16 %v1349
        %v1358 = vunpack.c.l.b16 %v1350
        %v1359 = vunpack.c.l.b16 %v1351
        %v1360 = vunpack.c.l.b16 %v1352
        %v1361 = vpack.c.b16 %v1358, %v1357
        %v1362 = vpack.c.b16 %v1360, %v1359
        %1365 = vmatprep.subr.bf16.mxu0 0
        %1366 = vmatpush1.bf16.msra.mxu0 %v1361
        %1367 = vmatprep.subr.bf16.mxu0 0
        %1368 = vmatpush1.bf16.msra.mxu0 %v1362
        %1369 = vmatprep.subr.bf16.mxu0 0
        %1370 = vmatpush1.bf16.msra.mxu0 0
        %1371 = vmatprep.subr.bf16.mxu0 0
        %1372 = vmatpush1.bf16.msra.mxu0 0
        %1373 = vmatprep.subr.bf16.mxu0 0
        %1374 = vmatpush1.bf16.msra.mxu0 0
        %1375 = vmatprep.subr.bf16.mxu0 0
        %1376 = vmatpush1.bf16.msra.mxu0 0
        %1377 = vmatprep.subr.bf16.mxu0 0
        %1378 = vmatpush1.bf16.msra.mxu0 0
        %1379 = vmatprep.subr.bf16.mxu0 0
        %1380 = vmatpush1.bf16.msra.mxu0 0
        %1381 = vmatprep.subr.bf16.mxu0 0
        %1382 = vmatpush1.bf16.msra.mxu0 0
        %1383 = vmatprep.subr.bf16.mxu0 0
        %1384 = vmatpush1.bf16.msra.mxu0 0
        %1385 = vmatprep.subr.bf16.mxu0 0
        %1386 = vmatpush1.bf16.msra.mxu0 0
        %1387 = vmatprep.subr.bf16.mxu0 0
        %1388 = vmatpush1.bf16.msra.mxu0 0
        %1389 = vmatprep.subr.bf16.mxu0 0
        %1390 = vmatpush1.bf16.msra.mxu0 0
        %1391 = vmatprep.subr.bf16.mxu0 0
        %1392 = vmatpush1.bf16.msra.mxu0 0
        %1393 = vmatprep.subr.bf16.mxu0 0
        %1394 = vmatpush1.bf16.msra.mxu0 0
        %1395 = vmatprep.subr.bf16.mxu0 0
        %1396 = vmatpush1.bf16.msra.mxu0 0
        %1397 = vmatprep.mubr.bf16.mxu0 0
        %1398 = vmatmul.mubr.bf16.gmra.mrb[0].mxu0 %v651
        %v1399 = vpop.f32.mrb[0].mxu0
        %v1400 = vadd.f32 0.0, %v1399
        %v1401 = vpop.f32.mrb[0].mxu0
        %v1402 = vpop.f32.mrb[0].mxu0
        %v1403 = vpop.f32.mrb[0].mxu0
        %1404 = vdwg.mxu0
        %v1405 = vpack.c.bf16 %v1400, %v1400
        %v1407 = vsel %vm751, %v1289, 0
        %v1410 = vsel %vm751, %v1347, 0
        %1412 = vmatprep.subr.bf16.mxu0 0
        %1413 = vmatpush1.bf16.xpose.msra.mxu0 %v1410
        %1414 = vmatprep.subr.bf16.mxu0 0
        %1415 = vmatpush1.bf16.xpose.msra.mxu0 0
        %1416 = vmatprep.subr.bf16.mxu0 0
        %1417 = vmatpush1.bf16.xpose.msra.mxu0 0
        %1418 = vmatprep.subr.bf16.mxu0 0
        %1419 = vmatpush1.bf16.xpose.msra.mxu0 0
        %1420 = vmatprep.subr.bf16.mxu0 0
        %1421 = vmatpush1.bf16.xpose.msra.mxu0 0
        %1422 = vmatprep.subr.bf16.mxu0 0
        %1423 = vmatpush1.bf16.xpose.msra.mxu0 0
        %1424 = vmatprep.subr.bf16.mxu0 0
        %1425 = vmatpush1.bf16.xpose.msra.mxu0 0
        %1426 = vmatprep.subr.bf16.mxu0 0
        %1427 = vmatpush1.bf16.xpose.msra.mxu0 0
        %1428 = vmatprep.subr.bf16.mxu0 0
        %1429 = vmatpush1.bf16.xpose.msra.mxu0 0
        %1430 = vmatprep.subr.bf16.mxu0 0
        %1431 = vmatpush1.bf16.xpose.msra.mxu0 0
        %1432 = vmatprep.subr.bf16.mxu0 0
        %1433 = vmatpush1.bf16.xpose.msra.mxu0 0
        %1434 = vmatprep.subr.bf16.mxu0 0
        %1435 = vmatpush1.bf16.xpose.msra.mxu0 0
        %1436 = vmatprep.subr.bf16.mxu0 0
        %1437 = vmatpush1.bf16.xpose.msra.mxu0 0
        %1438 = vmatprep.subr.bf16.mxu0 0
        %1439 = vmatpush1.bf16.xpose.msra.mxu0 0
        %1440 = vmatprep.subr.bf16.mxu0 0
        %1441 = vmatpush1.bf16.xpose.msra.mxu0 0
        %1442 = vmatprep.subr.bf16.mxu0 0
        %1443 = vmatpush1.bf16.xpose.msra.mxu0 0
        %1444 = vmatprep.mubr.bf16.mxu0 0
        %1445 = vmatmul.mubr.bf16.gmra.mrb[0].mxu0 %v1407
        %v1446 = vpop.f32.mrb[0].mxu0
        %v1447 = vadd.f32 0.0, %v1446
        %v1448 = vpop.f32.mrb[0].mxu0
        %v1449 = vpop.f32.mrb[0].mxu0
        %v1450 = vpop.f32.mrb[0].mxu0
        %1451 = vdwg.mxu0
        %v1452 = vsel %vm751, %v1447, -inf
        %1453 = vmax.xlane.f32.xlu0 %v1452
        %v1454 = vpop.xlane.xlu0 %1453
        %v1455 = vsub.f32 %v1447, %v1454
        %v1456 = vmul.f32 %v1455, 1.442695
        %v1457 = vpow.pop %v1456
        %v1458 = vsel %vm751, %v1457, 0.0
        %1459 = vadd.xlane.f32.xlu0 %v1458
        %v1460 = vpop.xlane.xlu0 %1459
        %v1461 = vrcp.pop %v1460
        %v1462 = vmul.f32 %v1457, %v1461
        %v1463 = vpack.c.bf16 %v1462, %v1462
        %v1465 = vsel %vm751, %v1463, 0
        %v1468 = vsel %vm813, %v1405, 0
        %1470 = vmatprep.subr.bf16.mxu0 0
        %1471 = vmatpush1.bf16.msra.mxu0 %v1468
        %1472 = vmatprep.subr.bf16.mxu0 0
        %1473 = vmatpush1.bf16.msra.mxu0 0
        %1474 = vmatprep.subr.bf16.mxu0 0
        %1475 = vmatpush1.bf16.msra.mxu0 0
        %1476 = vmatprep.subr.bf16.mxu0 0
        %1477 = vmatpush1.bf16.msra.mxu0 0
        %1478 = vmatprep.subr.bf16.mxu0 0
        %1479 = vmatpush1.bf16.msra.mxu0 0
        %1480 = vmatprep.subr.bf16.mxu0 0
        %1481 = vmatpush1.bf16.msra.mxu0 0
        %1482 = vmatprep.subr.bf16.mxu0 0
        %1483 = vmatpush1.bf16.msra.mxu0 0
        %1484 = vmatprep.subr.bf16.mxu0 0
        %1485 = vmatpush1.bf16.msra.mxu0 0
        %1486 = vmatprep.subr.bf16.mxu0 0
        %1487 = vmatpush1.bf16.msra.mxu0 0
        %1488 = vmatprep.subr.bf16.mxu0 0
        %1489 = vmatpush1.bf16.msra.mxu0 0
        %1490 = vmatprep.subr.bf16.mxu0 0
        %1491 = vmatpush1.bf16.msra.mxu0 0
        %1492 = vmatprep.subr.bf16.mxu0 0
        %1493 = vmatpush1.bf16.msra.mxu0 0
        %1494 = vmatprep.subr.bf16.mxu0 0
        %1495 = vmatpush1.bf16.msra.mxu0 0
        %1496 = vmatprep.subr.bf16.mxu0 0
        %1497 = vmatpush1.bf16.msra.mxu0 0
        %1498 = vmatprep.subr.bf16.mxu0 0
        %1499 = vmatpush1.bf16.msra.mxu0 0
        %1500 = vmatprep.subr.bf16.mxu0 0
        %1501 = vmatpush1.bf16.msra.mxu0 0
        %1502 = vmatprep.mubr.bf16.mxu0 0
        %1503 = vmatmul.mubr.bf16.gmra.mrb[0].mxu0 %v1465
        %v1504 = vpop.f32.mrb[0].mxu0
        %v1505 = vadd.f32 0.0, %v1504
        %v1506 = vpop.f32.mrb[0].mxu0
        %v1507 = vpop.f32.mrb[0].mxu0
        %v1508 = vpop.f32.mrb[0].mxu0
        %1509 = vdwg.mxu0
        %v1510 = vpack.c.bf16 %v1505, %v1505
        %s1511 = scalar_lea.vmem [#allocation11], 8
        %v1512 = vld [vmem:[%s1511] sm:$0xf]
        %v1514 = vsel %vm751, %v1510, 0
        %v1517 = vsel %vm813, %v1512, 0
        %1519 = vmatprep.subr.bf16.mxu0 0
        %1520 = vmatpush1.bf16.msra.mxu0 %v1517
        %1521 = vmatprep.subr.bf16.mxu0 0
        %1522 = vmatpush1.bf16.msra.mxu0 0
        %1523 = vmatprep.subr.bf16.mxu0 0
        %1524 = vmatpush1.bf16.msra.mxu0 0
        %1525 = vmatprep.subr.bf16.mxu0 0
        %1526 = vmatpush1.bf16.msra.mxu0 0
        %1527 = vmatprep.subr.bf16.mxu0 0
        %1528 = vmatpush1.bf16.msra.mxu0 0
        %1529 = vmatprep.subr.bf16.mxu0 0
        %1530 = vmatpush1.bf16.msra.mxu0 0
        %1531 = vmatprep.subr.bf16.mxu0 0
        %1532 = vmatpush1.bf16.msra.mxu0 0
        %1533 = vmatprep.subr.bf16.mxu0 0
        %1534 = vmatpush1.bf16.msra.mxu0 0
        %1535 = vmatprep.subr.bf16.mxu0 0
        %1536 = vmatpush1.bf16.msra.mxu0 0
        %1537 = vmatprep.subr.bf16.mxu0 0
        %1538 = vmatpush1.bf16.msra.mxu0 0
        %1539 = vmatprep.subr.bf16.mxu0 0
        %1540 = vmatpush1.bf16.msra.mxu0 0
        %1541 = vmatprep.subr.bf16.mxu0 0
        %1542 = vmatpush1.bf16.msra.mxu0 0
        %1543 = vmatprep.subr.bf16.mxu0 0
        %1544 = vmatpush1.bf16.msra.mxu0 0
        %1545 = vmatprep.subr.bf16.mxu0 0
        %1546 = vmatpush1.bf16.msra.mxu0 0
        %1547 = vmatprep.subr.bf16.mxu0 0
        %1548 = vmatpush1.bf16.msra.mxu0 0
        %1549 = vmatprep.subr.bf16.mxu0 0
        %1550 = vmatpush1.bf16.msra.mxu0 0
        %1551 = vmatprep.mubr.bf16.mxu0 0
        %1552 = vmatmul.mubr.bf16.gmra.mrb[0].mxu0 %v1514
        %v1553 = vpop.f32.mrb[0].mxu0
        %v1554 = vadd.f32 0.0, %v1553
        %v1555 = vpop.f32.mrb[0].mxu0
        %v1556 = vpop.f32.mrb[0].mxu0
        %v1557 = vpop.f32.mrb[0].mxu0
        %1558 = vdwg.mxu0
        %v1559 = vadd.f32 %v1227, %v1554
        %s1560 = scalar_lea.vmem [#allocation7], 48
        %v1561 = vld [vmem:[%s1560] sm:$0xf]
        %v1562 = vld [vmem:[%s1560 + $0x4] sm:$0xf]
        %v1563 = vld [vmem:[%s1560 + $0x8] sm:$0xf]
        %v1564 = vld [vmem:[%s1560 + $0xc] sm:$0xf]
        %v1569 = vunpack.c.l.b16 %v1561
        %v1570 = vunpack.c.l.b16 %v1562
        %v1571 = vunpack.c.l.b16 %v1563
        %v1572 = vunpack.c.l.b16 %v1564
        %v1573 = vpack.c.b16 %v1570, %v1569
        %v1574 = vpack.c.b16 %v1572, %v1571
        %1577 = vmatprep.subr.bf16.mxu0 0
        %1578 = vmatpush1.bf16.msra.mxu0 %v1573
        %1579 = vmatprep.subr.bf16.mxu0 0
        %1580 = vmatpush1.bf16.msra.mxu0 %v1574
        %1581 = vmatprep.subr.bf16.mxu0 0
        %1582 = vmatpush1.bf16.msra.mxu0 0
        %1583 = vmatprep.subr.bf16.mxu0 0
        %1584 = vmatpush1.bf16.msra.mxu0 0
        %1585 = vmatprep.subr.bf16.mxu0 0
        %1586 = vmatpush1.bf16.msra.mxu0 0
        %1587 = vmatprep.subr.bf16.mxu0 0
        %1588 = vmatpush1.bf16.msra.mxu0 0
        %1589 = vmatprep.subr.bf16.mxu0 0
        %1590 = vmatpush1.bf16.msra.mxu0 0
        %1591 = vmatprep.subr.bf16.mxu0 0
        %1592 = vmatpush1.bf16.msra.mxu0 0
        %1593 = vmatprep.subr.bf16.mxu0 0
        %1594 = vmatpush1.bf16.msra.mxu0 0
        %1595 = vmatprep.subr.bf16.mxu0 0
        %1596 = vmatpush1.bf16.msra.mxu0 0
        %1597 = vmatprep.subr.bf16.mxu0 0
        %1598 = vmatpush1.bf16.msra.mxu0 0
        %1599 = vmatprep.subr.bf16.mxu0 0
        %1600 = vmatpush1.bf16.msra.mxu0 0
        %1601 = vmatprep.subr.bf16.mxu0 0
        %1602 = vmatpush1.bf16.msra.mxu0 0
        %1603 = vmatprep.subr.bf16.mxu0 0
        %1604 = vmatpush1.bf16.msra.mxu0 0
        %1605 = vmatprep.subr.bf16.mxu0 0
        %1606 = vmatpush1.bf16.msra.mxu0 0
        %1607 = vmatprep.subr.bf16.mxu0 0
        %1608 = vmatpush1.bf16.msra.mxu0 0
        %1609 = vmatprep.mubr.bf16.mxu0 0
        %1610 = vmatmul.mubr.bf16.gmra.mrb[0].mxu0 %v591
        %v1611 = vpop.f32.mrb[0].mxu0
        %v1612 = vadd.f32 0.0, %v1611
        %v1613 = vpop.f32.mrb[0].mxu0
        %v1614 = vpop.f32.mrb[0].mxu0
        %v1615 = vpop.f32.mrb[0].mxu0
        %1616 = vdwg.mxu0
        %v1617 = vpack.c.bf16 %v1612, %v1612
        %s1618 = scalar_lea.vmem [#allocation8], 48
        %v1619 = vld [vmem:[%s1618] sm:$0xf]
        %v1620 = vld [vmem:[%s1618 + $0x4] sm:$0xf]
        %v1621 = vld [vmem:[%s1618 + $0x8] sm:$0xf]
        %v1622 = vld [vmem:[%s1618 + $0xc] sm:$0xf]
        %v1627 = vunpack.c.l.b16 %v1619
        %v1628 = vunpack.c.l.b16 %v1620
        %v1629 = vunpack.c.l.b16 %v1621
        %v1630 = vunpack.c.l.b16 %v1622
        %v1631 = vpack.c.b16 %v1628, %v1627
        %v1632 = vpack.c.b16 %v1630, %v1629
        %1635 = vmatprep.subr.bf16.mxu0 0
        %1636 = vmatpush1.bf16.msra.mxu0 %v1631
        %1637 = vmatprep.subr.bf16.mxu0 0
        %1638 = vmatpush1.bf16.msra.mxu0 %v1632
        %1639 = vmatprep.subr.bf16.mxu0 0
        %1640 = vmatpush1.bf16.msra.mxu0 0
        %1641 = vmatprep.subr.bf16.mxu0 0
        %1642 = vmatpush1.bf16.msra.mxu0 0
        %1643 = vmatprep.subr.bf16.mxu0 0
        %1644 = vmatpush1.bf16.msra.mxu0 0
        %1645 = vmatprep.subr.bf16.mxu0 0
        %1646 = vmatpush1.bf16.msra.mxu0 0
        %1647 = vmatprep.subr.bf16.mxu0 0
        %1648 = vmatpush1.bf16.msra.mxu0 0
        %1649 = vmatprep.subr.bf16.mxu0 0
        %1650 = vmatpush1.bf16.msra.mxu0 0
        %1651 = vmatprep.subr.bf16.mxu0 0
        %1652 = vmatpush1.bf16.msra.mxu0 0
        %1653 = vmatprep.subr.bf16.mxu0 0
        %1654 = vmatpush1.bf16.msra.mxu0 0
        %1655 = vmatprep.subr.bf16.mxu0 0
        %1656 = vmatpush1.bf16.msra.mxu0 0
        %1657 = vmatprep.subr.bf16.mxu0 0
        %1658 = vmatpush1.bf16.msra.mxu0 0
        %1659 = vmatprep.subr.bf16.mxu0 0
        %1660 = vmatpush1.bf16.msra.mxu0 0
        %1661 = vmatprep.subr.bf16.mxu0 0
        %1662 = vmatpush1.bf16.msra.mxu0 0
        %1663 = vmatprep.subr.bf16.mxu0 0
        %1664 = vmatpush1.bf16.msra.mxu0 0
        %1665 = vmatprep.subr.bf16.mxu0 0
        %1666 = vmatpush1.bf16.msra.mxu0 0
        %1667 = vmatprep.mubr.bf16.mxu0 0
        %1668 = vmatmul.mubr.bf16.gmra.mrb[0].mxu0 %v651
        %v1669 = vpop.f32.mrb[0].mxu0
        %v1670 = vadd.f32 0.0, %v1669
        %v1671 = vpop.f32.mrb[0].mxu0
        %v1672 = vpop.f32.mrb[0].mxu0
        %v1673 = vpop.f32.mrb[0].mxu0
        %1674 = vdwg.mxu0
        %v1675 = vpack.c.bf16 %v1670, %v1670
        %s1676 = scalar_lea.vmem [#allocation10], 48
        %v1677 = vld [vmem:[%s1676] sm:$0xf]
        %v1678 = vld [vmem:[%s1676 + $0x4] sm:$0xf]
        %v1679 = vld [vmem:[%s1676 + $0x8] sm:$0xf]
        %v1680 = vld [vmem:[%s1676 + $0xc] sm:$0xf]
        %v1685 = vunpack.c.l.b16 %v1677
        %v1686 = vunpack.c.l.b16 %v1678
        %v1687 = vunpack.c.l.b16 %v1679
        %v1688 = vunpack.c.l.b16 %v1680
        %v1689 = vpack.c.b16 %v1686, %v1685
        %v1690 = vpack.c.b16 %v1688, %v1687
        %1693 = vmatprep.subr.bf16.mxu0 0
        %1694 = vmatpush1.bf16.msra.mxu0 %v1689
        %1695 = vmatprep.subr.bf16.mxu0 0
        %1696 = vmatpush1.bf16.msra.mxu0 %v1690
        %1697 = vmatprep.subr.bf16.mxu0 0
        %1698 = vmatpush1.bf16.msra.mxu0 0
        %1699 = vmatprep.subr.bf16.mxu0 0
        %1700 = vmatpush1.bf16.msra.mxu0 0
        %1701 = vmatprep.subr.bf16.mxu0 0
        %1702 = vmatpush1.bf16.msra.mxu0 0
        %1703 = vmatprep.subr.bf16.mxu0 0
        %1704 = vmatpush1.bf16.msra.mxu0 0
        %1705 = vmatprep.subr.bf16.mxu0 0
        %1706 = vmatpush1.bf16.msra.mxu0 0
        %1707 = vmatprep.subr.bf16.mxu0 0
        %1708 = vmatpush1.bf16.msra.mxu0 0
        %1709 = vmatprep.subr.bf16.mxu0 0
        %1710 = vmatpush1.bf16.msra.mxu0 0
        %1711 = vmatprep.subr.bf16.mxu0 0
        %1712 = vmatpush1.bf16.msra.mxu0 0
        %1713 = vmatprep.subr.bf16.mxu0 0
        %1714 = vmatpush1.bf16.msra.mxu0 0
        %1715 = vmatprep.subr.bf16.mxu0 0
        %1716 = vmatpush1.bf16.msra.mxu0 0
        %1717 = vmatprep.subr.bf16.mxu0 0
        %1718 = vmatpush1.bf16.msra.mxu0 0
        %1719 = vmatprep.subr.bf16.mxu0 0
        %1720 = vmatpush1.bf16.msra.mxu0 0
        %1721 = vmatprep.subr.bf16.mxu0 0
        %1722 = vmatpush1.bf16.msra.mxu0 0
        %1723 = vmatprep.subr.bf16.mxu0 0
        %1724 = vmatpush1.bf16.msra.mxu0 0
        %1725 = vmatprep.mubr.bf16.mxu0 0
        %1726 = vmatmul.mubr.bf16.gmra.mrb[0].mxu0 %v651
        %v1727 = vpop.f32.mrb[0].mxu0
        %v1728 = vadd.f32 0.0, %v1727
        %v1729 = vpop.f32.mrb[0].mxu0
        %v1730 = vpop.f32.mrb[0].mxu0
        %v1731 = vpop.f32.mrb[0].mxu0
        %1732 = vdwg.mxu0
        %v1733 = vpack.c.bf16 %v1728, %v1728
        %v1735 = vsel %vm751, %v1617, 0
        %v1738 = vsel %vm751, %v1675, 0
        %1740 = vmatprep.subr.bf16.mxu0 0
        %1741 = vmatpush1.bf16.xpose.msra.mxu0 %v1738
        %1742 = vmatprep.subr.bf16.mxu0 0
        %1743 = vmatpush1.bf16.xpose.msra.mxu0 0
        %1744 = vmatprep.subr.bf16.mxu0 0
        %1745 = vmatpush1.bf16.xpose.msra.mxu0 0
        %1746 = vmatprep.subr.bf16.mxu0 0
        %1747 = vmatpush1.bf16.xpose.msra.mxu0 0
        %1748 = vmatprep.subr.bf16.mxu0 0
        %1749 = vmatpush1.bf16.xpose.msra.mxu0 0
        %1750 = vmatprep.subr.bf16.mxu0 0
        %1751 = vmatpush1.bf16.xpose.msra.mxu0 0
        %1752 = vmatprep.subr.bf16.mxu0 0
        %1753 = vmatpush1.bf16.xpose.msra.mxu0 0
        %1754 = vmatprep.subr.bf16.mxu0 0
        %1755 = vmatpush1.bf16.xpose.msra.mxu0 0
        %1756 = vmatprep.subr.bf16.mxu0 0
        %1757 = vmatpush1.bf16.xpose.msra.mxu0 0
        %1758 = vmatprep.subr.bf16.mxu0 0
        %1759 = vmatpush1.bf16.xpose.msra.mxu0 0
        %1760 = vmatprep.subr.bf16.mxu0 0
        %1761 = vmatpush1.bf16.xpose.msra.mxu0 0
        %1762 = vmatprep.subr.bf16.mxu0 0
        %1763 = vmatpush1.bf16.xpose.msra.mxu0 0
        %1764 = vmatprep.subr.bf16.mxu0 0
        %1765 = vmatpush1.bf16.xpose.msra.mxu0 0
        %1766 = vmatprep.subr.bf16.mxu0 0
        %1767 = vmatpush1.bf16.xpose.msra.mxu0 0
        %1768 = vmatprep.subr.bf16.mxu0 0
        %1769 = vmatpush1.bf16.xpose.msra.mxu0 0
        %1770 = vmatprep.subr.bf16.mxu0 0
        %1771 = vmatpush1.bf16.xpose.msra.mxu0 0
        %1772 = vmatprep.mubr.bf16.mxu0 0
        %1773 = vmatmul.mubr.bf16.gmra.mrb[0].mxu0 %v1735
        %v1774 = vpop.f32.mrb[0].mxu0
        %v1775 = vadd.f32 0.0, %v1774
        %v1776 = vpop.f32.mrb[0].mxu0
        %v1777 = vpop.f32.mrb[0].mxu0
        %v1778 = vpop.f32.mrb[0].mxu0
        %1779 = vdwg.mxu0
        %v1780 = vsel %vm751, %v1775, -inf
        %1781 = vmax.xlane.f32.xlu0 %v1780
        %v1782 = vpop.xlane.xlu0 %1781
        %v1783 = vsub.f32 %v1775, %v1782
        %v1784 = vmul.f32 %v1783, 1.442695
        %v1785 = vpow.pop %v1784
        %v1786 = vsel %vm751, %v1785, 0.0
        %1787 = vadd.xlane.f32.xlu0 %v1786
        %v1788 = vpop.xlane.xlu0 %1787
        %v1789 = vrcp.pop %v1788
        %v1790 = vmul.f32 %v1785, %v1789
        %v1791 = vpack.c.bf16 %v1790, %v1790
        %v1793 = vsel %vm751, %v1791, 0
        %v1796 = vsel %vm813, %v1733, 0
        %1798 = vmatprep.subr.bf16.mxu0 0
        %1799 = vmatpush1.bf16.msra.mxu0 %v1796
        %1800 = vmatprep.subr.bf16.mxu0 0
        %1801 = vmatpush1.bf16.msra.mxu0 0
        %1802 = vmatprep.subr.bf16.mxu0 0
        %1803 = vmatpush1.bf16.msra.mxu0 0
        %1804 = vmatprep.subr.bf16.mxu0 0
        %1805 = vmatpush1.bf16.msra.mxu0 0
        %1806 = vmatprep.subr.bf16.mxu0 0
        %1807 = vmatpush1.bf16.msra.mxu0 0
        %1808 = vmatprep.subr.bf16.mxu0 0
        %1809 = vmatpush1.bf16.msra.mxu0 0
        %1810 = vmatprep.subr.bf16.mxu0 0
        %1811 = vmatpush1.bf16.msra.mxu0 0
        %1812 = vmatprep.subr.bf16.mxu0 0
        %1813 = vmatpush1.bf16.msra.mxu0 0
        %1814 = vmatprep.subr.bf16.mxu0 0
        %1815 = vmatpush1.bf16.msra.mxu0 0
        %1816 = vmatprep.subr.bf16.mxu0 0
        %1817 = vmatpush1.bf16.msra.mxu0 0
        %1818 = vmatprep.subr.bf16.mxu0 0
        %1819 = vmatpush1.bf16.msra.mxu0 0
        %1820 = vmatprep.subr.bf16.mxu0 0
        %1821 = vmatpush1.bf16.msra.mxu0 0
        %1822 = vmatprep.subr.bf16.mxu0 0
        %1823 = vmatpush1.bf16.msra.mxu0 0
        %1824 = vmatprep.subr.bf16.mxu0 0
        %1825 = vmatpush1.bf16.msra.mxu0 0
        %1826 = vmatprep.subr.bf16.mxu0 0
        %1827 = vmatpush1.bf16.msra.mxu0 0
        %1828 = vmatprep.subr.bf16.mxu0 0
        %1829 = vmatpush1.bf16.msra.mxu0 0
        %1830 = vmatprep.mubr.bf16.mxu0 0
        %1831 = vmatmul.mubr.bf16.gmra.mrb[0].mxu0 %v1793
        %v1832 = vpop.f32.mrb[0].mxu0
        %v1833 = vadd.f32 0.0, %v1832
        %v1834 = vpop.f32.mrb[0].mxu0
        %v1835 = vpop.f32.mrb[0].mxu0
        %v1836 = vpop.f32.mrb[0].mxu0
        %1837 = vdwg.mxu0
        %v1838 = vpack.c.bf16 %v1833, %v1833
        %s1839 = scalar_lea.vmem [#allocation11], 12
        %v1840 = vld [vmem:[%s1839] sm:$0xf]
        %v1842 = vsel %vm751, %v1838, 0
        %v1845 = vsel %vm813, %v1840, 0
        %1847 = vmatprep.subr.bf16.mxu0 0
        %1848 = vmatpush1.bf16.msra.mxu0 %v1845
        %1849 = vmatprep.subr.bf16.mxu0 0
        %1850 = vmatpush1.bf16.msra.mxu0 0
        %1851 = vmatprep.subr.bf16.mxu0 0
        %1852 = vmatpush1.bf16.msra.mxu0 0
        %1853 = vmatprep.subr.bf16.mxu0 0
        %1854 = vmatpush1.bf16.msra.mxu0 0
        %1855 = vmatprep.subr.bf16.mxu0 0
        %1856 = vmatpush1.bf16.msra.mxu0 0
        %1857 = vmatprep.subr.bf16.mxu0 0
        %1858 = vmatpush1.bf16.msra.mxu0 0
        %1859 = vmatprep.subr.bf16.mxu0 0
        %1860 = vmatpush1.bf16.msra.mxu0 0
        %1861 = vmatprep.subr.bf16.mxu0 0
        %1862 = vmatpush1.bf16.msra.mxu0 0
        %1863 = vmatprep.subr.bf16.mxu0 0
        %1864 = vmatpush1.bf16.msra.mxu0 0
        %1865 = vmatprep.subr.bf16.mxu0 0
        %1866 = vmatpush1.bf16.msra.mxu0 0
        %1867 = vmatprep.subr.bf16.mxu0 0
        %1868 = vmatpush1.bf16.msra.mxu0 0
        %1869 = vmatprep.subr.bf16.mxu0 0
        %1870 = vmatpush1.bf16.msra.mxu0 0
        %1871 = vmatprep.subr.bf16.mxu0 0
        %1872 = vmatpush1.bf16.msra.mxu0 0
        %1873 = vmatprep.subr.bf16.mxu0 0
        %1874 = vmatpush1.bf16.msra.mxu0 0
        %1875 = vmatprep.subr.bf16.mxu0 0
        %1876 = vmatpush1.bf16.msra.mxu0 0
        %1877 = vmatprep.subr.bf16.mxu0 0
        %1878 = vmatpush1.bf16.msra.mxu0 0
        %1879 = vmatprep.mubr.bf16.mxu0 0
        %1880 = vmatmul.mubr.bf16.gmra.mrb[0].mxu0 %v1842
        %v1881 = vpop.f32.mrb[0].mxu0
        %v1882 = vadd.f32 0.0, %v1881
        %v1883 = vpop.f32.mrb[0].mxu0
        %v1884 = vpop.f32.mrb[0].mxu0
        %v1885 = vpop.f32.mrb[0].mxu0
        %1886 = vdwg.mxu0
        %v1887 = vadd.f32 %v1559, %v1882
        %v1888 = vadd.f32 %v542, %v1887
        %v1889 = vsel %vm544, %v1888, 0.0
        %1890 = vadd.xlane.f32.xlu0 %v1889
        %v1891 = vpop.xlane.xlu0 %1890
        %v1892 = vmul.f32 %v1891, %v548
        %v1893 = vsub.f32 %v1888, %v1892
        %v1894 = vmul.f32 %v1893, %v1893
        %v1895 = vsel %vm544, %v1894, 0.0
        %1896 = vadd.xlane.f32.xlu0 %v1895
        %v1897 = vpop.xlane.xlu0 %1896
        %v1898 = vmul.f32 %v1897, %v548
        %v1899 = vadd.f32 %v1898, 1e-05
        %v1900 = vrsqrt.pop %v1899
        %v1901 = vmul.f32 %v1893, %v1900
        %v1902 = vpack.c.bf16 %v1901, %v1901
        %v1903 = vld [vmem:[#allocation13] sm:$0xf]
        %v1904 = vld [vmem:[#allocation13 + $0x4] sm:$0xf]
        %v1905 = vld [vmem:[#allocation13 + $0x8] sm:$0xf]
        %v1906 = vld [vmem:[#allocation13 + $0xc] sm:$0xf]
        %v1907 = vld [vmem:[#allocation14] sm:$0x1]
        %v1909 = vlaneseq
        %v1910 = vshrl.u32 %v1909, 7
        %v1911 = vsub.s32 0, %v1910
        %v1912 = vrot.slane %v1907, %v1911
        %v1918 = vunpack.c.l.b16 %v1903
        %v1919 = vunpack.c.l.b16 %v1904
        %v1920 = vunpack.c.l.b16 %v1905
        %v1921 = vunpack.c.l.b16 %v1906
        %v1922 = vpack.c.b16 %v1919, %v1918
        %v1923 = vpack.c.b16 %v1921, %v1920
        %v1927 = vsel %vm544, %v1902, 0
        %1929 = vmatprep.subr.bf16.mxu0 0
        %1930 = vmatpush1.bf16.msra.mxu0 %v1922
        %1931 = vmatprep.subr.bf16.mxu0 0
        %1932 = vmatpush1.bf16.msra.mxu0 %v1923
        %1933 = vmatprep.subr.bf16.mxu0 0
        %1934 = vmatpush1.bf16.msra.mxu0 0
        %1935 = vmatprep.subr.bf16.mxu0 0
        %1936 = vmatpush1.bf16.msra.mxu0 0
        %1937 = vmatprep.subr.bf16.mxu0 0
        %1938 = vmatpush1.bf16.msra.mxu0 0
        %1939 = vmatprep.subr.bf16.mxu0 0
        %1940 = vmatpush1.bf16.msra.mxu0 0
        %1941 = vmatprep.subr.bf16.mxu0 0
        %1942 = vmatpush1.bf16.msra.mxu0 0
        %1943 = vmatprep.subr.bf16.mxu0 0
        %1944 = vmatpush1.bf16.msra.mxu0 0
        %1945 = vmatprep.subr.bf16.mxu0 0
        %1946 = vmatpush1.bf16.msra.mxu0 0
        %1947 = vmatprep.subr.bf16.mxu0 0
        %1948 = vmatpush1.bf16.msra.mxu0 0
        %1949 = vmatprep.subr.bf16.mxu0 0
        %1950 = vmatpush1.bf16.msra.mxu0 0
        %1951 = vmatprep.subr.bf16.mxu0 0
        %1952 = vmatpush1.bf16.msra.mxu0 0
        %1953 = vmatprep.subr.bf16.mxu0 0
        %1954 = vmatpush1.bf16.msra.mxu0 0
        %1955 = vmatprep.subr.bf16.mxu0 0
        %1956 = vmatpush1.bf16.msra.mxu0 0
        %1957 = vmatprep.subr.bf16.mxu0 0
        %1958 = vmatpush1.bf16.msra.mxu0 0
        %1959 = vmatprep.subr.bf16.mxu0 0
        %1960 = vmatpush1.bf16.msra.mxu0 0
        %1961 = vmatprep.mubr.bf16.mxu0 0
        %1962 = vmatmul.mubr.bf16.gmra.mrb[0].mxu0 %v1927
        %v1963 = vpop.f32.mrb[0].mxu0
        %v1964 = vadd.f32 %v1912, %v1963
        %v1965 = vpop.f32.mrb[0].mxu0
        %v1966 = vpop.f32.mrb[0].mxu0
        %v1967 = vpop.f32.mrb[0].mxu0
        %1968 = vdwg.mxu0
        %v1969 = vmul.f32 %v1964, 0.5
        %v1970 = vmul.f32 %v1964, 0.044715
        %v1971 = vmul.f32 %v1970, %v1964
        %v1972 = vmul.f32 %v1971, %v1964
        %v1973 = vadd.f32 %v1964, %v1972
        %v1974 = vmul.f32 %v1973, 0.7978846
        %v1975 = vtanh.pop %v1974
        %v1976 = vadd.f32 %v1975, 1.0
        %v1977 = vmul.f32 %v1969, %v1976
        %v1978 = vpack.c.bf16 %v1977, %v1977
        %v1979 = vld [vmem:[#allocation16] sm:$0xf]
        %v1980 = vld [vmem:[#allocation16 + $0x4] sm:$0xf]
        %v1981 = vld [vmem:[#allocation16 + $0x8] sm:$0xf]
        %v1982 = vld [vmem:[#allocation16 + $0xc] sm:$0xf]
        %v1983 = vld [vmem:[#allocation16 + $0x10] sm:$0xf]
        %v1984 = vld [vmem:[#allocation16 + $0x14] sm:$0xf]
        %v1985 = vld [vmem:[#allocation16 + $0x18] sm:$0xf]
        %v1986 = vld [vmem:[#allocation16 + $0x1c] sm:$0xf]
        %v1987 = vld [vmem:[#allocation16 + $0x20] sm:$0xf]
        %v1988 = vld [vmem:[#allocation16 + $0x24] sm:$0xf]
        %v1989 = vld [vmem:[#allocation16 + $0x28] sm:$0xf]
        %v1990 = vld [vmem:[#allocation16 + $0x2c] sm:$0xf]
        %v1991 = vld [vmem:[#allocation16 + $0x30] sm:$0xf]
        %v1992 = vld [vmem:[#allocation16 + $0x34] sm:$0xf]
        %v1993 = vld [vmem:[#allocation16 + $0x38] sm:$0xf]
        %v1994 = vld [vmem:[#allocation16 + $0x3c] sm:$0xf]
        %v2011 = vunpack.c.l.b16 %v1979
        %v2012 = vunpack.c.l.b16 %v1980
        %v2013 = vunpack.c.l.b16 %v1981
        %v2014 = vunpack.c.l.b16 %v1982
        %v2015 = vunpack.c.l.b16 %v1983
        %v2016 = vunpack.c.l.b16 %v1984
        %v2017 = vunpack.c.l.b16 %v1985
        %v2018 = vunpack.c.l.b16 %v1986
        %v2019 = vunpack.c.l.b16 %v1987
        %v2020 = vunpack.c.l.b16 %v1988
        %v2021 = vunpack.c.l.b16 %v1989
        %v2022 = vunpack.c.l.b16 %v1990
        %v2023 = vunpack.c.l.b16 %v1991
        %v2024 = vunpack.c.l.b16 %v1992
        %v2025 = vunpack.c.l.b16 %v1993
        %v2026 = vunpack.c.l.b16 %v1994
        %v2027 = vpack.c.b16 %v2012, %v2011
        %v2028 = vpack.c.b16 %v2014, %v2013
        %v2029 = vpack.c.b16 %v2016, %v2015
        %v2030 = vpack.c.b16 %v2018, %v2017
        %v2031 = vpack.c.b16 %v2020, %v2019
        %v2032 = vpack.c.b16 %v2022, %v2021
        %v2033 = vpack.c.b16 %v2024, %v2023
        %v2034 = vpack.c.b16 %v2026, %v2025
        %2043 = vmatprep.subr.bf16.mxu0 0
        %2044 = vmatpush1.bf16.msra.mxu0 %v2027
        %2045 = vmatprep.subr.bf16.mxu0 0
        %2046 = vmatpush1.bf16.msra.mxu0 %v2028
        %2047 = vmatprep.subr.bf16.mxu0 0
        %2048 = vmatpush1.bf16.msra.mxu0 %v2029
        %2049 = vmatprep.subr.bf16.mxu0 0
        %2050 = vmatpush1.bf16.msra.mxu0 %v2030
        %2051 = vmatprep.subr.bf16.mxu0 0
        %2052 = vmatpush1.bf16.msra.mxu0 %v2031
        %2053 = vmatprep.subr.bf16.mxu0 0
        %2054 = vmatpush1.bf16.msra.mxu0 %v2032
        %2055 = vmatprep.subr.bf16.mxu0 0
        %2056 = vmatpush1.bf16.msra.mxu0 %v2033
        %2057 = vmatprep.subr.bf16.mxu0 0
        %2058 = vmatpush1.bf16.msra.mxu0 %v2034
        %2059 = vmatprep.subr.bf16.mxu0 0
        %2060 = vmatpush1.bf16.msra.mxu0 0
        %2061 = vmatprep.subr.bf16.mxu0 0
        %2062 = vmatpush1.bf16.msra.mxu0 0
        %2063 = vmatprep.subr.bf16.mxu0 0
        %2064 = vmatpush1.bf16.msra.mxu0 0
        %2065 = vmatprep.subr.bf16.mxu0 0
        %2066 = vmatpush1.bf16.msra.mxu0 0
        %2067 = vmatprep.subr.bf16.mxu0 0
        %2068 = vmatpush1.bf16.msra.mxu0 0
        %2069 = vmatprep.subr.bf16.mxu0 0
        %2070 = vmatpush1.bf16.msra.mxu0 0
        %2071 = vmatprep.subr.bf16.mxu0 0
        %2072 = vmatpush1.bf16.msra.mxu0 0
        %2073 = vmatprep.subr.bf16.mxu0 0
        %2074 = vmatpush1.bf16.msra.mxu0 0
        %2075 = vmatprep.mubr.bf16.mxu0 0
        %2076 = vmatmul.mubr.bf16.gmra.mrb[0].mxu0 %v1978
        %v2077 = vpop.f32.mrb[0].mxu0
        %v2078 = vadd.f32 0.0, %v2077
        %v2079 = vpop.f32.mrb[0].mxu0
        %v2080 = vpop.f32.mrb[0].mxu0
        %v2081 = vpop.f32.mrb[0].mxu0
        %2082 = vdwg.mxu0
        %v2083 = vadd.f32 %v1888, %v2078
        %v2084 = vld [vmem:[#allocation17] sm:$0x1]
        %v2086 = vlaneseq
        %v2087 = vshrl.u32 %v2086, 7
        %v2088 = vsub.s32 0, %v2087
        %v2089 = vrot.slane %v2084, %v2088
        %v2091 = vadd.f32 %v2083, %v2089
        %2092 = vst.msk [vmem:[%s540] sm:$0xff] %vm544, %v2091
        %s2093 = sand.u32 %s278, 1
        %s2094 = scalar_lea.sflag [#allocation4], %s2093
        %s2095 = sand.u32 %s278, 1
        %s2096 = smul.addr %s2095, 8
        %s2097 = scalar_lea.vmem [#allocation19], %s2096
        // Predicated region
        $region101: #{tpu_custom_call.1} parent=59 // pred_check
          %p2098 = pneg %p288
        $region102: #{tpu_custom_call.1} parent=59 // pred_check_branch
          %2100 = sbr.rel (%p2098) target = $region104
        $region103: #{tpu_custom_call.1} parent=59 // pred_region
          %s2102 = ssub.s32 128, 128
          %2103 = vsyncadd %s2094, %s2102
          %s2104 = sadd.s32 %s39, %s38
          %s2105 = smul.addr %s2104, 128
          %s2106 = scalar_lea.hbm %s10, %s2105
          %s2108 = sshll.u32 %s2097, 4
          %s2109 = int_to_ptr.vmem [resolvable:$true] %s2108
          %2111 = dma.vmem_to_hbm [thread:$0]  %s2109, 128, %s2106, %s2094
        $region104: #{tpu_custom_call.1} parent=59 // pred_fallthru
          _
      $region60: #{tpu_custom_call.1} parent=5 // pred_fallthru
        _
      %p2112 = scmp.le.s32.totalorder 2, %s29
      // Predicated region
      $region105: #{tpu_custom_call.1} parent=5 // pred_check
        %p2113 = pneg %p2112
      $region106: #{tpu_custom_call.1} parent=5 // pred_check_branch
        %2115 = sbr.rel (%p2113) target = $region108
      $region107: #{tpu_custom_call.1} parent=5 // pred_region
        %s2116 = ssub.s32 %s29, 2
        // Predicated region
        $region109: #{tpu_custom_call.1} parent=107 // pred_check
          %p2117 = pneg %p294
        $region110: #{tpu_custom_call.1} parent=107 // pred_check_branch
          %2119 = sbr.rel (%p2117) target = $region112
        $region111: #{tpu_custom_call.1} parent=107 // pred_region
          %s2120 = sand.u32 %s279, 1
          %s2121 = scalar_lea.sflag [#allocation4], %s2120
          %s2122 = sand.u32 %s279, 1
          %s2123 = smul.addr %s2122, 8
          %s2124 = scalar_lea.vmem [#allocation19], %s2123
          %2125 = dma.done %s2121, 128
        $region112: #{tpu_custom_call.1} parent=107 // pred_fallthru
          _
      $region108: #{tpu_custom_call.1} parent=5 // pred_fallthru
        _
    $region6: #{tpu_custom_call.1} parent=1 // loop_footer
      %s33 = sadd.s32 1, %s29
    $region7: #{tpu_custom_call.1} parent=1 // loop_footer_branch
      %28 = sbr.rel target = $region3
    $region8: #{tpu_custom_call.1} parent=1 // loop_exit
      _
    %2126 = vsyncpa [#allocation3], 1
    %s2127 = scalar_lea.sflag [#allocation3], 1
    %2128 = vsyncpa %s2127, 1
    %2129 = vsyncpa [#allocation6], 1
    %s2130 = scalar_lea.sflag [#allocation6], 1
    %2131 = vsyncpa %s2130, 1
    %2132 = vsyncpa [#allocation9], 1
    %2133 = vsyncpa [#allocation12], 1
    %2134 = vsyncpa [#allocation15], 1
    %2135 = vsyncpa [#allocation18], 1
    %2136 = vsyncpa [#allocation4], 1
    %s2137 = scalar_lea.sflag [#allocation4], 1
    %2138 = vsyncpa %s2137, 1

// kernel: tpu_custom_call.1
$region0: #{tpu_custom_call.1}
  #allocation0 [shape = 'u32[]', space=smem, size = 0x4, offset = 0x4, fixed_abs, tag = 'smem constant byte address 0x4 - core index']
  #allocation1 [shape = 'u32[144,128]{1,0:T(1,128)}', space=vmem, size = 0x12000, scoped, tag = 'internal scratch']
  %s0 = inlined_call_operand.hbm [shape: f32[2,8,32], index: 0, kind: input, shape index: {}]
  %s1 = inlined_call_operand.hbm [shape: f32[2,8,32], index: 1, kind: input, shape index: {}]
  %s2 = inlined_call_operand.hbm [shape: bf16[4,32,8], index: 2, kind: input, shape index: {}]
  %s3 = inlined_call_operand.hbm [shape: bf16[4,32,8], index: 3, kind: input, shape index: {}]
  %s4 = inlined_call_operand.hbm [shape: bf16[4,32,8], index: 4, kind: input, shape index: {}]
  %s5 = inlined_call_operand.hbm [shape: bf16[4,8,32], index: 5, kind: input, shape index: {}]
  %s6 = inlined_call_operand.hbm [shape: bf16[32,128], index: 6, kind: input, shape index: {}]
  %s7 = inlined_call_operand.hbm [shape: f32[1,128], index: 7, kind: input, shape index: {}]
  %s8 = inlined_call_operand.hbm [shape: bf16[128,32], index: 8, kind: input, shape index: {}]
  %s9 = inlined_call_operand.hbm [shape: f32[1,32], index: 9, kind: input, shape index: {}]
  %s10 = inlined_call_operand.hbm [shape: f32[2,8,32], index: 10, kind: output, shape index: {}]
  %s11 = sld [smem:[#allocation0]]
  $region113: #{tpu_custom_call.1} parent=0
    _
  %s13 = ssub.s32 1, %s11
  %s14 = scalar_select 0, %s13, %s11
  $region1: #{tpu_custom_call.1} parent=0
    #allocation2 [shape = 'u8[8192]{0}', space=vmem, size = 0x2000, scoped, tag = 'input window, operand 0']
    #allocation3 [shape = 's32[2]{0}', space=sflag, size = 0x8, scoped, tag = 'scoped memory for tpu_custom_call.1']
    #allocation4 [shape = 's32[2]{0}', space=sflag, size = 0x8, scoped, tag = 'scoped memory for tpu_custom_call.1']
    #allocation5 [shape = 'u8[8192]{0}', space=vmem, size = 0x2000, scoped, tag = 'input window, operand 1']
    #allocation6 [shape = 's32[2]{0}', space=sflag, size = 0x8, scoped, tag = 'scoped memory for tpu_custom_call.1']
    #allocation7 [shape = 'u8[32768]{0}', space=vmem, size = 0x8000, scoped, tag = 'input window, operand 2, single buffered']
    #allocation8 [shape = 'u8[32768]{0}', space=vmem, size = 0x8000, scoped, tag = 'input window, operand 3, single buffered']
    #allocation9 [shape = 's32[1]{0}', space=sflag, size = 0x4, scoped, tag = 'scoped memory for tpu_custom_call.1']
    #allocation10 [shape = 'u8[32768]{0}', space=vmem, size = 0x8000, scoped, tag = 'input window, operand 4, single buffered']
    #allocation11 [shape = 'u8[8192]{0}', space=vmem, size = 0x2000, scoped, tag = 'input window, operand 5, single buffered']
    #allocation12 [shape = 's32[1]{0}', space=sflag, size = 0x4, scoped, tag = 'scoped memory for tpu_custom_call.1']
    #allocation13 [shape = 'u8[8192]{0}', space=vmem, size = 0x2000, scoped, tag = 'input window, operand 6, single buffered']
    #allocation14 [shape = 'u8[512]{0}', space=vmem, size = 0x400, scoped, tag = 'input window, operand 7, single buffered']
    #allocation15 [shape = 's32[1]{0}', space=sflag, size = 0x4, scoped, tag = 'scoped memory for tpu_custom_call.1']
    #allocation16 [shape = 'u8[32768]{0}', space=vmem, size = 0x8000, scoped, tag = 'input window, operand 8, single buffered']
    #allocation17 [shape = 'u8[512]{0}', space=vmem, size = 0x400, scoped, tag = 'input window, operand 9, single buffered']
    #allocation18 [shape = 's32[1]{0}', space=sflag, size = 0x4, scoped, tag = 'scoped memory for tpu_custom_call.1']
    #allocation19 [shape = 'u8[8192]{0}', space=vmem, size = 0x2000, scoped, tag = 'output window, operand 0']
    %15 = vsyncpa [#allocation3], 0
    %s16 = scalar_lea.sflag [#allocation3], 1
    %17 = vsyncpa %s16, 0
    %18 = vsyncpa [#allocation6], 0
    %s19 = scalar_lea.sflag [#allocation6], 1
    %20 = vsyncpa %s19, 0
    %21 = vsyncpa [#allocation9], 0
    %22 = vsyncpa [#allocation12], 0
    %23 = vsyncpa [#allocation15], 0
    %24 = vsyncpa [#allocation18], 0
    %25 = vsyncpa [#allocation4], 0
    %s26 = scalar_lea.sflag [#allocation4], 1
    %27 = vsyncpa %s26, 0
    loop: start=0, step=1, limit=4
    $region2: #{tpu_custom_call.1} parent=1 // loop_pre_header
      _
    $region3: #{tpu_custom_call.1} parent=1 // loop_header
      %s29 = sphi 0, %s33
      %p30 = scmp.ge.s32.totalorder %s29, 4
      %s36 = sphi 0, %s48
      %s37 = sphi 0, %s44
      %s38 = sphi 0, %s36
      %s39 = sphi 0, %s37
      %s40 = sphi 0, %s38
      %s41 = sphi 0, %s39
      %s53 = sphi 0, %s55
      %s56 = sphi 0, %s53
      %s57 = sphi 0, %s56
      %s73 = sphi 0, %s57
      %s79 = sphi 0, %s81
      %s82 = sphi 0, %s79
      %s83 = sphi 0, %s82
      %s99 = sphi 0, %s83
      %s103 = sphi 0, %s103
      %s105 = sphi 0, %s103
      %s106 = sphi 0, %s105
      %s120 = sphi 0, %s106
      %s124 = sphi 0, %s124
      %s126 = sphi 0, %s124
      %s127 = sphi 0, %s126
      %s141 = sphi 0, %s127
      %s145 = sphi 0, %s145
      %s147 = sphi 0, %s145
      %s148 = sphi 0, %s147
      %s162 = sphi 0, %s148
      %s166 = sphi 0, %s166
      %s168 = sphi 0, %s166
      %s169 = sphi 0, %s168
      %s183 = sphi 0, %s169
      %s187 = sphi 0, %s187
      %s189 = sphi 0, %s187
      %s190 = sphi 0, %s189
      %s204 = sphi 0, %s190
      %s208 = sphi 0, %s208
      %s210 = sphi 0, %s208
      %s211 = sphi 0, %s210
      %s225 = sphi 0, %s211
      %s229 = sphi 0, %s229
      %s231 = sphi 0, %s229
      %s232 = sphi 0, %s231
      %s246 = sphi 0, %s232
      %s250 = sphi 0, %s250
      %s252 = sphi 0, %s250
      %s253 = sphi 0, %s252
      %s267 = sphi 0, %s253
      %s275 = sphi 0, %s277
      %s278 = sphi 0, %s275
      %s279 = sphi 0, %s278
      %s295 = sphi 0, %s279
    $region4: #{tpu_custom_call.1} parent=1 // loop_header_branch
      %32 = sbr.rel (%p30) target = $region8
    $region5: #{tpu_custom_call.1} parent=1 // loop_body
      %s34 = ssub.s32 %s29, 1
      %s35 = ssub.s32 %s29, 2
      %s42 = sadd.s32 1, %s37
      %p43 = scmp.ge.s32.totalorder %s42, 1
      %s44 = scalar_select %p43, 0, %s42
      %s45 = sadd.s32 1, %s36
      %s46 = scalar_select %p43, %s45, %s36
      %p47 = scmp.ge.s32.totalorder %s46, 2
      %s48 = scalar_select %p47, 0, %s46
      %s49 = ssub.s32 %s36, %s48
      %s50 = ssub.s32 %s37, %s44
      %s51 = sor.u32 %s49, %s50
      %p52 = scmp.eq.s32.totalorder %s51, 0
      %s54 = sadd.s32 %s53, 1
      %s55 = scalar_select %p52, %s53, %s54
      %p58 = pneg %p52
      %p59 = scmp.eq.s32.totalorder %s29, 1
      %p60 = por %p58, %p59
      %p61 = scmp.ne.s32.totalorder %s53, %s56
      %p62 = scmp.eq.s32.totalorder %s29, 0
      %p63 = por %p61, %p62
      %p64 = scmp.ne.s32.totalorder %s53, %s56
      %p65 = scmp.eq.s32.totalorder %s34, 1
      %p66 = por %p64, %p65
      %p67 = scmp.ne.s32.totalorder %s56, %s57
      %p68 = scmp.eq.s32.totalorder %s34, 0
      %p69 = por %p67, %p68
      %p70 = scmp.ne.s32.totalorder %s56, %s57
      %p71 = scmp.eq.s32.totalorder %s35, 1
      %p72 = por %p70, %p71
      %p74 = scmp.ne.s32.totalorder %s57, %s73
      %p75 = scmp.eq.s32.totalorder %s35, 0
      %p76 = por %p74, %p75
      %s77 = ssub.s32 %s36, %s48
      %p78 = scmp.eq.s32.totalorder %s77, 0
      %s80 = sadd.s32 %s79, 1
      %s81 = scalar_select %p78, %s79, %s80
      %p84 = pneg %p78
      %p85 = scmp.eq.s32.totalorder %s29, 1
      %p86 = por %p84, %p85
      %p87 = scmp.ne.s32.totalorder %s79, %s82
      %p88 = scmp.eq.s32.totalorder %s29, 0
      %p89 = por %p87, %p88
      %p90 = scmp.ne.s32.totalorder %s79, %s82
      %p91 = scmp.eq.s32.totalorder %s34, 1
      %p92 = por %p90, %p91
      %p93 = scmp.ne.s32.totalorder %s82, %s83
      %p94 = scmp.eq.s32.totalorder %s34, 0
      %p95 = por %p93, %p94
      %p96 = scmp.ne.s32.totalorder %s82, %s83
      %p97 = scmp.eq.s32.totalorder %s35, 1
      %p98 = por %p96, %p97
      %p100 = scmp.ne.s32.totalorder %s83, %s99
      %p101 = scmp.eq.s32.totalorder %s35, 0
      %p102 = por %p100, %p101
      %s104 = sadd.s32 %s103, 1
      %p107 = scmp.eq.s32.totalorder %s29, 1
      %p108 = scmp.ne.s32.totalorder %s103, %s105
      %p109 = scmp.eq.s32.totalorder %s29, 0
      %p110 = por %p108, %p109
      %p111 = scmp.ne.s32.totalorder %s103, %s105
      %p112 = scmp.eq.s32.totalorder %s34, 1
      %p113 = por %p111, %p112
      %p114 = scmp.ne.s32.totalorder %s105, %s106
      %p115 = scmp.eq.s32.totalorder %s34, 0
      %p116 = por %p114, %p115
      %p117 = scmp.ne.s32.totalorder %s105, %s106
      %p118 = scmp.eq.s32.totalorder %s35, 1
      %p119 = por %p117, %p118
      %p121 = scmp.ne.s32.totalorder %s106, %s120
      %p122 = scmp.eq.s32.totalorder %s35, 0
      %p123 = por %p121, %p122
      %s125 = sadd.s32 %s124, 1
      %p128 = scmp.eq.s32.totalorder %s29, 1
      %p129 = scmp.ne.s32.totalorder %s124, %s126
      %p130 = scmp.eq.s32.totalorder %s29, 0
      %p131 = por %p129, %p130
      %p132 = scmp.ne.s32.totalorder %s124, %s126
      %p133 = scmp.eq.s32.totalorder %s34, 1
      %p134 = por %p132, %p133
      %p135 = scmp.ne.s32.totalorder %s126, %s127
      %p136 = scmp.eq.s32.totalorder %s34, 0
      %p137 = por %p135, %p136
      %p138 = scmp.ne.s32.totalorder %s126, %s127
      %p139 = scmp.eq.s32.totalorder %s35, 1
      %p140 = por %p138, %p139
      %p142 = scmp.ne.s32.totalorder %s127, %s141
      %p143 = scmp.eq.s32.totalorder %s35, 0
      %p144 = por %p142, %p143
      %s146 = sadd.s32 %s145, 1
      %p149 = scmp.eq.s32.totalorder %s29, 1
      %p150 = scmp.ne.s32.totalorder %s145, %s147
      %p151 = scmp.eq.s32.totalorder %s29, 0
      %p152 = por %p150, %p151
      %p153 = scmp.ne.s32.totalorder %s145, %s147
      %p154 = scmp.eq.s32.totalorder %s34, 1
      %p155 = por %p153, %p154
      %p156 = scmp.ne.s32.totalorder %s147, %s148
      %p157 = scmp.eq.s32.totalorder %s34, 0
      %p158 = por %p156, %p157
      %p159 = scmp.ne.s32.totalorder %s147, %s148
      %p160 = scmp.eq.s32.totalorder %s35, 1
      %p161 = por %p159, %p160
      %p163 = scmp.ne.s32.totalorder %s148, %s162
      %p164 = scmp.eq.s32.totalorder %s35, 0
      %p165 = por %p163, %p164
      %s167 = sadd.s32 %s166, 1
      %p170 = scmp.eq.s32.totalorder %s29, 1
      %p171 = scmp.ne.s32.totalorder %s166, %s168
      %p172 = scmp.eq.s32.totalorder %s29, 0
      %p173 = por %p171, %p172
      %p174 = scmp.ne.s32.totalorder %s166, %s168
      %p175 = scmp.eq.s32.totalorder %s34, 1
      %p176 = por %p174, %p175
      %p177 = scmp.ne.s32.totalorder %s168, %s169
      %p178 = scmp.eq.s32.totalorder %s34, 0
      %p179 = por %p177, %p178
      %p180 = scmp.ne.s32.totalorder %s168, %s169
      %p181 = scmp.eq.s32.totalorder %s35, 1
      %p182 = por %p180, %p181
      %p184 = scmp.ne.s32.totalorder %s169, %s183
      %p185 = scmp.eq.s32.totalorder %s35, 0
      %p186 = por %p184, %p185
      %s188 = sadd.s32 %s187, 1
      %p191 = scmp.eq.s32.totalorder %s29, 1
      %p192 = scmp.ne.s32.totalorder %s187, %s189
      %p193 = scmp.eq.s32.totalorder %s29, 0
      %p194 = por %p192, %p193
      %p195 = scmp.ne.s32.totalorder %s187, %s189
      %p196 = scmp.eq.s32.totalorder %s34, 1
      %p197 = por %p195, %p196
      %p198 = scmp.ne.s32.totalorder %s189, %s190
      %p199 = scmp.eq.s32.totalorder %s34, 0
      %p200 = por %p198, %p199
      %p201 = scmp.ne.s32.totalorder %s189, %s190
      %p202 = scmp.eq.s32.totalorder %s35, 1
      %p203 = por %p201, %p202
      %p205 = scmp.ne.s32.totalorder %s190, %s204
      %p206 = scmp.eq.s32.totalorder %s35, 0
      %p207 = por %p205, %p206
      %s209 = sadd.s32 %s208, 1
      %p212 = scmp.eq.s32.totalorder %s29, 1
      %p213 = scmp.ne.s32.totalorder %s208, %s210
      %p214 = scmp.eq.s32.totalorder %s29, 0
      %p215 = por %p213, %p214
      %p216 = scmp.ne.s32.totalorder %s208, %s210
      %p217 = scmp.eq.s32.totalorder %s34, 1
      %p218 = por %p216, %p217
      %p219 = scmp.ne.s32.totalorder %s210, %s211
      %p220 = scmp.eq.s32.totalorder %s34, 0
      %p221 = por %p219, %p220
      %p222 = scmp.ne.s32.totalorder %s210, %s211
      %p223 = scmp.eq.s32.totalorder %s35, 1
      %p224 = por %p222, %p223
      %p226 = scmp.ne.s32.totalorder %s211, %s225
      %p227 = scmp.eq.s32.totalorder %s35, 0
      %p228 = por %p226, %p227
      %s230 = sadd.s32 %s229, 1
      %p233 = scmp.eq.s32.totalorder %s29, 1
      %p234 = scmp.ne.s32.totalorder %s229, %s231
      %p235 = scmp.eq.s32.totalorder %s29, 0
      %p236 = por %p234, %p235
      %p237 = scmp.ne.s32.totalorder %s229, %s231
      %p238 = scmp.eq.s32.totalorder %s34, 1
      %p239 = por %p237, %p238
      %p240 = scmp.ne.s32.totalorder %s231, %s232
      %p241 = scmp.eq.s32.totalorder %s34, 0
      %p242 = por %p240, %p241
      %p243 = scmp.ne.s32.totalorder %s231, %s232
      %p244 = scmp.eq.s32.totalorder %s35, 1
      %p245 = por %p243, %p244
      %p247 = scmp.ne.s32.totalorder %s232, %s246
      %p248 = scmp.eq.s32.totalorder %s35, 0
      %p249 = por %p247, %p248
      %s251 = sadd.s32 %s250, 1
      %p254 = scmp.eq.s32.totalorder %s29, 1
      %p255 = scmp.ne.s32.totalorder %s250, %s252
      %p256 = scmp.eq.s32.totalorder %s29, 0
      %p257 = por %p255, %p256
      %p258 = scmp.ne.s32.totalorder %s250, %s252
      %p259 = scmp.eq.s32.totalorder %s34, 1
      %p260 = por %p258, %p259
      %p261 = scmp.ne.s32.totalorder %s252, %s253
      %p262 = scmp.eq.s32.totalorder %s34, 0
      %p263 = por %p261, %p262
      %p264 = scmp.ne.s32.totalorder %s252, %s253
      %p265 = scmp.eq.s32.totalorder %s35, 1
      %p266 = por %p264, %p265
      %p268 = scmp.ne.s32.totalorder %s253, %s267
      %p269 = scmp.eq.s32.totalorder %s35, 0
      %p270 = por %p268, %p269
      %s271 = ssub.s32 %s36, %s48
      %s272 = ssub.s32 %s37, %s44
      %s273 = sor.u32 %s271, %s272
      %p274 = scmp.eq.s32.totalorder %s273, 0
      %s276 = sadd.s32 %s275, 1
      %s277 = scalar_select %p274, %s275, %s276
      %p280 = pneg %p274
      %p281 = scmp.eq.s32.totalorder %s29, 1
      %p282 = por %p280, %p281
      %p283 = scmp.ne.s32.totalorder %s275, %s278
      %p284 = scmp.eq.s32.totalorder %s29, 0
      %p285 = por %p283, %p284
      %p286 = scmp.ne.s32.totalorder %s275, %s278
      %p287 = scmp.eq.s32.totalorder %s34, 1
      %p288 = por %p286, %p287
      %p289 = scmp.ne.s32.totalorder %s278, %s279
      %p290 = scmp.eq.s32.totalorder %s34, 0
      %p291 = por %p289, %p290
      %p292 = scmp.ne.s32.totalorder %s278, %s279
      %p293 = scmp.eq.s32.totalorder %s35, 1
      %p294 = por %p292, %p293
      %p296 = scmp.ne.s32.totalorder %s279, %s295
      %p297 = scmp.eq.s32.totalorder %s35, 0
      %p298 = por %p296, %p297
      %p299 = scmp.le.s32.totalorder 1, %s29
      %p300 = scmp.lt.s32.totalorder %s29, 3
      %p301 = pnand %p299, %p300
      %p302 = pneg %p301
      // Predicated region
      $region9: #{tpu_custom_call.1} parent=5 // pred_check
        _
      $region10: #{tpu_custom_call.1} parent=5 // pred_check_branch
        %304 = sbr.rel (%p301) target = $region12
      $region11: #{tpu_custom_call.1} parent=5 // pred_region
        %s305 = ssub.s32 %s29, 1
        // Predicated region
        $region13: #{tpu_custom_call.1} parent=11 // pred_check
          %p306 = pneg %p116
        $region14: #{tpu_custom_call.1} parent=11 // pred_check_branch
          %308 = sbr.rel (%p306) target = $region16
        $region15: #{tpu_custom_call.1} parent=11 // pred_region
          %s310 = ssub.s32 1024, 1024
          %311 = vsyncadd [#allocation6], %s310
          %s312 = sshll.u32 [#allocation7], 4
          %s313 = int_to_ptr.vmem [resolvable:$true] %s312
          %318 = dma.hbm_to_vmem [thread:$0]  %s2, 1024, %s313, [#allocation6], 64, 64, 4
        $region16: #{tpu_custom_call.1} parent=11 // pred_fallthru
          _
        // Predicated region
        $region17: #{tpu_custom_call.1} parent=11 // pred_check
          %p319 = pneg %p137
        $region18: #{tpu_custom_call.1} parent=11 // pred_check_branch
          %321 = sbr.rel (%p319) target = $region20
        $region19: #{tpu_custom_call.1} parent=11 // pred_region
          %s323 = ssub.s32 1024, 1024
          %324 = vsyncadd [#allocation9], %s323
          %s325 = sshll.u32 [#allocation8], 4
          %s326 = int_to_ptr.vmem [resolvable:$true] %s325
          %331 = dma.hbm_to_vmem [thread:$0]  %s3, 1024, %s326, [#allocation9], 64, 64, 4
        $region20: #{tpu_custom_call.1} parent=11 // pred_fallthru
          _
        // Predicated region
        $region21: #{tpu_custom_call.1} parent=11 // pred_check
          %p332 = pneg %p158
        $region22: #{tpu_custom_call.1} parent=11 // pred_check_branch
          %334 = sbr.rel (%p332) target = $region24
        $region23: #{tpu_custom_call.1} parent=11 // pred_region
          %s336 = ssub.s32 1024, 1024
          %337 = vsyncadd [#allocation9], %s336
          %s338 = sshll.u32 [#allocation10], 4
          %s339 = int_to_ptr.vmem [resolvable:$true] %s338
          %344 = dma.hbm_to_vmem [thread:$0]  %s4, 1024, %s339, [#allocation9], 64, 64, 4
        $region24: #{tpu_custom_call.1} parent=11 // pred_fallthru
          _
        // Predicated region
        $region25: #{tpu_custom_call.1} parent=11 // pred_check
          %p345 = pneg %p179
        $region26: #{tpu_custom_call.1} parent=11 // pred_check_branch
          %347 = sbr.rel (%p345) target = $region28
        $region27: #{tpu_custom_call.1} parent=11 // pred_region
          %s349 = ssub.s32 256, 256
          %350 = vsyncadd [#allocation12], %s349
          %s351 = sshll.u32 [#allocation11], 4
          %s352 = int_to_ptr.vmem [resolvable:$true] %s351
          %357 = dma.hbm_to_vmem [thread:$0]  %s5, 256, %s352, [#allocation12], 64, 64, 4
        $region28: #{tpu_custom_call.1} parent=11 // pred_fallthru
          _
        // Predicated region
        $region29: #{tpu_custom_call.1} parent=11 // pred_check
          %p358 = pneg %p200
        $region30: #{tpu_custom_call.1} parent=11 // pred_check_branch
          %360 = sbr.rel (%p358) target = $region32
        $region31: #{tpu_custom_call.1} parent=11 // pred_region
          %s362 = ssub.s32 256, 256
          %363 = vsyncadd [#allocation12], %s362
          %s364 = sshll.u32 [#allocation13], 4
          %s365 = int_to_ptr.vmem [resolvable:$true] %s364
          %370 = dma.hbm_to_vmem [thread:$0]  %s6, 256, %s365, [#allocation12], 64, 64, 4
        $region32: #{tpu_custom_call.1} parent=11 // pred_fallthru
          _
        // Predicated region
        $region33: #{tpu_custom_call.1} parent=11 // pred_check
          %p371 = pneg %p221
        $region34: #{tpu_custom_call.1} parent=11 // pred_check_branch
          %373 = sbr.rel (%p371) target = $region36
        $region35: #{tpu_custom_call.1} parent=11 // pred_region
          %s375 = ssub.s32 16, 16
          %376 = vsyncadd [#allocation15], %s375
          %s378 = sshll.u32 [#allocation14], 4
          %s379 = int_to_ptr.vmem [resolvable:$true] %s378
          %381 = dma.hbm_to_vmem [thread:$0]  %s7, 16, %s379, [#allocation15]
        $region36: #{tpu_custom_call.1} parent=11 // pred_fallthru
          _
        // Predicated region
        $region37: #{tpu_custom_call.1} parent=11 // pred_check
          %p382 = pneg %p242
        $region38: #{tpu_custom_call.1} parent=11 // pred_check_branch
          %384 = sbr.rel (%p382) target = $region40
        $region39: #{tpu_custom_call.1} parent=11 // pred_region
          %s386 = ssub.s32 1024, 1024
          %387 = vsyncadd [#allocation15], %s386
          %s388 = sshll.u32 [#allocation16], 4
          %s389 = int_to_ptr.vmem [resolvable:$true] %s388
          %394 = dma.hbm_to_vmem [thread:$0]  %s8, 1024, %s389, [#allocation15], 64, 64, 4
        $region40: #{tpu_custom_call.1} parent=11 // pred_fallthru
          _
        // Predicated region
        $region41: #{tpu_custom_call.1} parent=11 // pred_check
          %p395 = pneg %p263
        $region42: #{tpu_custom_call.1} parent=11 // pred_check_branch
          %397 = sbr.rel (%p395) target = $region44
        $region43: #{tpu_custom_call.1} parent=11 // pred_region
          %s399 = ssub.s32 16, 16
          %400 = vsyncadd [#allocation18], %s399
          %s402 = sshll.u32 [#allocation17], 4
          %s403 = int_to_ptr.vmem [resolvable:$true] %s402
          %405 = dma.hbm_to_vmem [thread:$0]  %s9, 16, %s403, [#allocation18]
        $region44: #{tpu_custom_call.1} parent=11 // pred_fallthru
          _
      $region12: #{tpu_custom_call.1} parent=5 // pred_fallthru
        _
      %p406 = scmp.lt.s32.totalorder %s29, 2
      // Predicated region
      $region45: #{tpu_custom_call.1} parent=5 // pred_check
        %p407 = pneg %p406
      $region46: #{tpu_custom_call.1} parent=5 // pred_check_branch
        %409 = sbr.rel (%p407) target = $region48
      $region47: #{tpu_custom_call.1} parent=5 // pred_region
        // Predicated region
        $region49: #{tpu_custom_call.1} parent=47 // pred_check
          %p410 = pneg %p63
        $region50: #{tpu_custom_call.1} parent=47 // pred_check_branch
          %412 = sbr.rel (%p410) target = $region52
        $region51: #{tpu_custom_call.1} parent=47 // pred_region
          %s413 = sand.u32 %s53, 1
          %s414 = scalar_lea.sflag [#allocation3], %s413
          %s415 = sand.u32 %s53, 1
          %s416 = smul.addr %s415, 8
          %s417 = scalar_lea.vmem [#allocation2], %s416
          %s419 = ssub.s32 128, 128
          %420 = vsyncadd %s414, %s419
          %s421 = sadd.s32 %s37, %s36
          %s422 = smul.addr %s421, 128
          %s423 = scalar_lea.hbm %s0, %s422
          %s425 = sshll.u32 %s417, 4
          %s426 = int_to_ptr.vmem [resolvable:$true] %s425
          %428 = dma.hbm_to_vmem [thread:$0]  %s423, 128, %s426, %s414
        $region52: #{tpu_custom_call.1} parent=47 // pred_fallthru
          _
        // Predicated region
        $region53: #{tpu_custom_call.1} parent=47 // pred_check
          %p429 = pneg %p89
        $region54: #{tpu_custom_call.1} parent=47 // pred_check_branch
          %431 = sbr.rel (%p429) target = $region56
        $region55: #{tpu_custom_call.1} parent=47 // pred_region
          %s432 = sand.u32 %s29, 1
          %s433 = scalar_lea.sflag [#allocation6], %s432
          %s434 = sand.u32 %s79, 1
          %s435 = smul.addr %s434, 8
          %s436 = scalar_lea.vmem [#allocation5], %s435
          %s438 = ssub.s32 128, 128
          %439 = vsyncadd %s433, %s438
          %s440 = smul.addr %s36, 128
          %s441 = scalar_lea.hbm %s1, %s440
          %s443 = sshll.u32 %s436, 4
          %s444 = int_to_ptr.vmem [resolvable:$true] %s443
          %446 = dma.hbm_to_vmem [thread:$0]  %s441, 128, %s444, %s433
        $region56: #{tpu_custom_call.1} parent=47 // pred_fallthru
          _
      $region48: #{tpu_custom_call.1} parent=5 // pred_fallthru
        _
      %p447 = scmp.le.s32.totalorder 1, %s29
      %p448 = scmp.lt.s32.totalorder %s29, 3
      %p449 = pnand %p447, %p448
      %p450 = pneg %p449
      // Predicated region
      $region57: #{tpu_custom_call.1} parent=5 // pred_check
        _
      $region58: #{tpu_custom_call.1} parent=5 // pred_check_branch
        %452 = sbr.rel (%p449) target = $region60
      $region59: #{tpu_custom_call.1} parent=5 // pred_region
        %s453 = ssub.s32 %s29, 1
        %s454 = sand.u32 %s56, 1
        %s455 = scalar_lea.sflag [#allocation3], %s454
        %s456 = sand.u32 %s56, 1
        %s457 = smul.addr %s456, 8
        %s458 = scalar_lea.vmem [#allocation2], %s457
        // Predicated region
        $region61: #{tpu_custom_call.1} parent=59 // pred_check
          %p459 = pneg %p69
        $region62: #{tpu_custom_call.1} parent=59 // pred_check_branch
          %461 = sbr.rel (%p459) target = $region64
        $region63: #{tpu_custom_call.1} parent=59 // pred_region
          %462 = dma.done %s455, 128
        $region64: #{tpu_custom_call.1} parent=59 // pred_fallthru
          _
        %s463 = sand.u32 %s34, 1
        %s464 = scalar_lea.sflag [#allocation6], %s463
        %s465 = sand.u32 %s82, 1
        %s466 = smul.addr %s465, 8
        %s467 = scalar_lea.vmem [#allocation5], %s466
        // Predicated region
        $region65: #{tpu_custom_call.1} parent=59 // pred_check
          %p468 = pneg %p95
        $region66: #{tpu_custom_call.1} parent=59 // pred_check_branch
          %470 = sbr.rel (%p468) target = $region68
        $region67: #{tpu_custom_call.1} parent=59 // pred_region
          %471 = dma.done %s464, 128
        $region68: #{tpu_custom_call.1} parent=59 // pred_fallthru
          _
        // Predicated region
        $region69: #{tpu_custom_call.1} parent=59 // pred_check
          %p472 = pneg %p116
        $region70: #{tpu_custom_call.1} parent=59 // pred_check_branch
          %474 = sbr.rel (%p472) target = $region72
        $region71: #{tpu_custom_call.1} parent=59 // pred_region
          %475 = dma.done [#allocation6], 1024
        $region72: #{tpu_custom_call.1} parent=59 // pred_fallthru
          _
        // Predicated region
        $region73: #{tpu_custom_call.1} parent=59 // pred_check
          %p476 = pneg %p137
        $region74: #{tpu_custom_call.1} parent=59 // pred_check_branch
          %478 = sbr.rel (%p476) target = $region76
        $region75: #{tpu_custom_call.1} parent=59 // pred_region
          %479 = dma.done [#allocation9], 1024
        $region76: #{tpu_custom_call.1} parent=59 // pred_fallthru
          _
        // Predicated region
        $region77: #{tpu_custom_call.1} parent=59 // pred_check
          %p480 = pneg %p158
        $region78: #{tpu_custom_call.1} parent=59 // pred_check_branch
          %482 = sbr.rel (%p480) target = $region80
        $region79: #{tpu_custom_call.1} parent=59 // pred_region
          %483 = dma.done [#allocation9], 1024
        $region80: #{tpu_custom_call.1} parent=59 // pred_fallthru
          _
        // Predicated region
        $region81: #{tpu_custom_call.1} parent=59 // pred_check
          %p484 = pneg %p179
        $region82: #{tpu_custom_call.1} parent=59 // pred_check_branch
          %486 = sbr.rel (%p484) target = $region84
        $region83: #{tpu_custom_call.1} parent=59 // pred_region
          %487 = dma.done [#allocation12], 256
        $region84: #{tpu_custom_call.1} parent=59 // pred_fallthru
          _
        // Predicated region
        $region85: #{tpu_custom_call.1} parent=59 // pred_check
          %p488 = pneg %p200
        $region86: #{tpu_custom_call.1} parent=59 // pred_check_branch
          %490 = sbr.rel (%p488) target = $region88
        $region87: #{tpu_custom_call.1} parent=59 // pred_region
          %491 = dma.done [#allocation12], 256
        $region88: #{tpu_custom_call.1} parent=59 // pred_fallthru
          _
        // Predicated region
        $region89: #{tpu_custom_call.1} parent=59 // pred_check
          %p492 = pneg %p221
        $region90: #{tpu_custom_call.1} parent=59 // pred_check_branch
          %494 = sbr.rel (%p492) target = $region92
        $region91: #{tpu_custom_call.1} parent=59 // pred_region
          %495 = dma.done [#allocation15], 16
        $region92: #{tpu_custom_call.1} parent=59 // pred_fallthru
          _
        // Predicated region
        $region93: #{tpu_custom_call.1} parent=59 // pred_check
          %p496 = pneg %p242
        $region94: #{tpu_custom_call.1} parent=59 // pred_check_branch
          %498 = sbr.rel (%p496) target = $region96
        $region95: #{tpu_custom_call.1} parent=59 // pred_region
          %499 = dma.done [#allocation15], 1024
        $region96: #{tpu_custom_call.1} parent=59 // pred_fallthru
          _
        // Predicated region
        $region97: #{tpu_custom_call.1} parent=59 // pred_check
          %p500 = pneg %p263
        $region98: #{tpu_custom_call.1} parent=59 // pred_check_branch
          %502 = sbr.rel (%p500) target = $region100
        $region99: #{tpu_custom_call.1} parent=59 // pred_region
          %503 = dma.done [#allocation18], 16
        $region100: #{tpu_custom_call.1} parent=59 // pred_fallthru
          _
        %s504 = sand.u32 %s56, 1
        %s505 = scalar_lea.sflag [#allocation3], %s504
        %s506 = sand.u32 %s56, 1
        %s507 = smul.addr %s506, 8
        %s508 = scalar_lea.vmem [#allocation2], %s507
        %p509 = pneg %p69
        %p510 = pneg %p66
        %s511 = sand.u32 %s34, 1
        %s512 = scalar_lea.sflag [#allocation6], %s511
        %s513 = sand.u32 %s82, 1
        %s514 = smul.addr %s513, 8
        %s515 = scalar_lea.vmem [#allocation5], %s514
        %p516 = pneg %p95
        %p517 = pneg %p92
        %p518 = pneg %p116
        %p519 = pneg %p113
        %p520 = pneg %p137
        %p521 = pneg %p134
        %p522 = pneg %p158
        %p523 = pneg %p155
        %p524 = pneg %p179
        %p525 = pneg %p176
        %p526 = pneg %p200
        %p527 = pneg %p197
        %p528 = pneg %p221
        %p529 = pneg %p218
        %p530 = pneg %p242
        %p531 = pneg %p239
        %p532 = pneg %p263
        %p533 = pneg %p260
        %p534 = pneg %p291
        %p535 = pneg %p288
        %s536 = sand.u32 %s278, 1
        %s537 = scalar_lea.sflag [#allocation4], %s536
        %s538 = sand.u32 %s278, 1
        %s539 = smul.addr %s538, 8
        %s540 = scalar_lea.vmem [#allocation19], %s539
        %v542 = vld [vmem:[%s458] sm:$0xff]
        %v543 = vld [vmem:[%s467] sm:$0xff]
        %vm544 = vcmask 261120
        %v545 = vsel %vm544, %v542, 0.0
        %546 = vadd.xlane.f32.xlu0 %v545
        %v547 = vpop.xlane.xlu0 %546
        %v548 = vrcp.pop 32.0
        %v549 = vmul.f32 %v547, %v548
        %v550 = vsub.f32 %v542, %v549
        %v551 = vmul.f32 %v550, %v550
        %v552 = vsel %vm544, %v551, 0.0
        %553 = vadd.xlane.f32.xlu0 %v552
        %v554 = vpop.xlane.xlu0 %553
        %v555 = vmul.f32 %v554, %v548
        %v556 = vadd.f32 %v555, 1e-05
        %v557 = vrsqrt.pop %v556
        %v558 = vmul.f32 %v550, %v557
        %v559 = vpack.c.bf16 %v558, %v558
        %v560 = vsel %vm544, %v543, 0.0
        %561 = vadd.xlane.f32.xlu0 %v560
        %v562 = vpop.xlane.xlu0 %561
        %v563 = vmul.f32 %v562, %v548
        %v564 = vsub.f32 %v543, %v563
        %v565 = vmul.f32 %v564, %v564
        %v566 = vsel %vm544, %v565, 0.0
        %567 = vadd.xlane.f32.xlu0 %v566
        %v568 = vpop.xlane.xlu0 %567
        %v569 = vmul.f32 %v568, %v548
        %v570 = vadd.f32 %v569, 1e-05
        %v571 = vrsqrt.pop %v570
        %v572 = vmul.f32 %v564, %v571
        %v573 = vpack.c.bf16 %v572, %v572
        %v574 = vld [vmem:[#allocation7] sm:$0xf]
        %v575 = vld [vmem:[#allocation7 + $0x4] sm:$0xf]
        %v576 = vld [vmem:[#allocation7 + $0x8] sm:$0xf]
        %v577 = vld [vmem:[#allocation7 + $0xc] sm:$0xf]
        %v582 = vunpack.c.l.b16 %v574
        %v583 = vunpack.c.l.b16 %v575
        %v584 = vunpack.c.l.b16 %v576
        %v585 = vunpack.c.l.b16 %v577
        %v586 = vpack.c.b16 %v583, %v582
        %v587 = vpack.c.b16 %v585, %v584
        %v591 = vsel %vm544, %v559, 0
        %593 = vmatprep.subr.bf16.mxu0 0
        %594 = vmatpush1.bf16.msra.mxu0 %v586
        %595 = vmatprep.subr.bf16.mxu0 0
        %596 = vmatpush1.bf16.msra.mxu0 %v587
        %597 = vmatprep.subr.bf16.mxu0 0
        %598 = vmatpush1.bf16.msra.mxu0 0
        %599 = vmatprep.subr.bf16.mxu0 0
        %600 = vmatpush1.bf16.msra.mxu0 0
        %601 = vmatprep.subr.bf16.mxu0 0
        %602 = vmatpush1.bf16.msra.mxu0 0
        %603 = vmatprep.subr.bf16.mxu0 0
        %604 = vmatpush1.bf16.msra.mxu0 0
        %605 = vmatprep.subr.bf16.mxu0 0
        %606 = vmatpush1.bf16.msra.mxu0 0
        %607 = vmatprep.subr.bf16.mxu0 0
        %608 = vmatpush1.bf16.msra.mxu0 0
        %609 = vmatprep.subr.bf16.mxu0 0
        %610 = vmatpush1.bf16.msra.mxu0 0
        %611 = vmatprep.subr.bf16.mxu0 0
        %612 = vmatpush1.bf16.msra.mxu0 0
        %613 = vmatprep.subr.bf16.mxu0 0
        %614 = vmatpush1.bf16.msra.mxu0 0
        %615 = vmatprep.subr.bf16.mxu0 0
        %616 = vmatpush1.bf16.msra.mxu0 0
        %617 = vmatprep.subr.bf16.mxu0 0
        %618 = vmatpush1.bf16.msra.mxu0 0
        %619 = vmatprep.subr.bf16.mxu0 0
        %620 = vmatpush1.bf16.msra.mxu0 0
        %621 = vmatprep.subr.bf16.mxu0 0
        %622 = vmatpush1.bf16.msra.mxu0 0
        %623 = vmatprep.subr.bf16.mxu0 0
        %624 = vmatpush1.bf16.msra.mxu0 0
        %625 = vmatprep.mubr.bf16.mxu0 0
        %626 = vmatmul.mubr.bf16.gmra.mrb[0].mxu0 %v591
        %v627 = vpop.f32.mrb[0].mxu0
        %v628 = vadd.f32 0.0, %v627
        %v629 = vpop.f32.mrb[0].mxu0
        %v630 = vpop.f32.mrb[0].mxu0
        %v631 = vpop.f32.mrb[0].mxu0
        %632 = vdwg.mxu0
        %v633 = vpack.c.bf16 %v628, %v628
        %v634 = vld [vmem:[#allocation8] sm:$0xf]
        %v635 = vld [vmem:[#allocation8 + $0x4] sm:$0xf]
        %v636 = vld [vmem:[#allocation8 + $0x8] sm:$0xf]
        %v637 = vld [vmem:[#allocation8 + $0xc] sm:$0xf]
        %v642 = vunpack.c.l.b16 %v634
        %v643 = vunpack.c.l.b16 %v635
        %v644 = vunpack.c.l.b16 %v636
        %v645 = vunpack.c.l.b16 %v637
        %v646 = vpack.c.b16 %v643, %v642
        %v647 = vpack.c.b16 %v645, %v644
        %v651 = vsel %vm544, %v573, 0
        %653 = vmatprep.subr.bf16.mxu0 0
        %654 = vmatpush1.bf16.msra.mxu0 %v646
        %655 = vmatprep.subr.bf16.mxu0 0
        %656 = vmatpush1.bf16.msra.mxu0 %v647
        %657 = vmatprep.subr.bf16.mxu0 0
        %658 = vmatpush1.bf16.msra.mxu0 0
        %659 = vmatprep.subr.bf16.mxu0 0
        %660 = vmatpush1.bf16.msra.mxu0 0
        %661 = vmatprep.subr.bf16.mxu0 0
        %662 = vmatpush1.bf16.msra.mxu0 0
        %663 = vmatprep.subr.bf16.mxu0 0
        %664 = vmatpush1.bf16.msra.mxu0 0
        %665 = vmatprep.subr.bf16.mxu0 0
        %666 = vmatpush1.bf16.msra.mxu0 0
        %667 = vmatprep.subr.bf16.mxu0 0
        %668 = vmatpush1.bf16.msra.mxu0 0
        %669 = vmatprep.subr.bf16.mxu0 0
        %670 = vmatpush1.bf16.msra.mxu0 0
        %671 = vmatprep.subr.bf16.mxu0 0
        %672 = vmatpush1.bf16.msra.mxu0 0
        %673 = vmatprep.subr.bf16.mxu0 0
        %674 = vmatpush1.bf16.msra.mxu0 0
        %675 = vmatprep.subr.bf16.mxu0 0
        %676 = vmatpush1.bf16.msra.mxu0 0
        %677 = vmatprep.subr.bf16.mxu0 0
        %678 = vmatpush1.bf16.msra.mxu0 0
        %679 = vmatprep.subr.bf16.mxu0 0
        %680 = vmatpush1.bf16.msra.mxu0 0
        %681 = vmatprep.subr.bf16.mxu0 0
        %682 = vmatpush1.bf16.msra.mxu0 0
        %683 = vmatprep.subr.bf16.mxu0 0
        %684 = vmatpush1.bf16.msra.mxu0 0
        %685 = vmatprep.mubr.bf16.mxu0 0
        %686 = vmatmul.mubr.bf16.gmra.mrb[0].mxu0 %v651
        %v687 = vpop.f32.mrb[0].mxu0
        %v688 = vadd.f32 0.0, %v687
        %v689 = vpop.f32.mrb[0].mxu0
        %v690 = vpop.f32.mrb[0].mxu0
        %v691 = vpop.f32.mrb[0].mxu0
        %692 = vdwg.mxu0
        %v693 = vpack.c.bf16 %v688, %v688
        %v694 = vld [vmem:[#allocation10] sm:$0xf]
        %v695 = vld [vmem:[#allocation10 + $0x4] sm:$0xf]
        %v696 = vld [vmem:[#allocation10 + $0x8] sm:$0xf]
        %v697 = vld [vmem:[#allocation10 + $0xc] sm:$0xf]
        %v702 = vunpack.c.l.b16 %v694
        %v703 = vunpack.c.l.b16 %v695
        %v704 = vunpack.c.l.b16 %v696
        %v705 = vunpack.c.l.b16 %v697
        %v706 = vpack.c.b16 %v703, %v702
        %v707 = vpack.c.b16 %v705, %v704
        %710 = vmatprep.subr.bf16.mxu0 0
        %711 = vmatpush1.bf16.msra.mxu0 %v706
        %712 = vmatprep.subr.bf16.mxu0 0
        %713 = vmatpush1.bf16.msra.mxu0 %v707
        %714 = vmatprep.subr.bf16.mxu0 0
        %715 = vmatpush1.bf16.msra.mxu0 0
        %716 = vmatprep.subr.bf16.mxu0 0
        %717 = vmatpush1.bf16.msra.mxu0 0
        %718 = vmatprep.subr.bf16.mxu0 0
        %719 = vmatpush1.bf16.msra.mxu0 0
        %720 = vmatprep.subr.bf16.mxu0 0
        %721 = vmatpush1.bf16.msra.mxu0 0
        %722 = vmatprep.subr.bf16.mxu0 0
        %723 = vmatpush1.bf16.msra.mxu0 0
        %724 = vmatprep.subr.bf16.mxu0 0
        %725 = vmatpush1.bf16.msra.mxu0 0
        %726 = vmatprep.subr.bf16.mxu0 0
        %727 = vmatpush1.bf16.msra.mxu0 0
        %728 = vmatprep.subr.bf16.mxu0 0
        %729 = vmatpush1.bf16.msra.mxu0 0
        %730 = vmatprep.subr.bf16.mxu0 0
        %731 = vmatpush1.bf16.msra.mxu0 0
        %732 = vmatprep.subr.bf16.mxu0 0
        %733 = vmatpush1.bf16.msra.mxu0 0
        %734 = vmatprep.subr.bf16.mxu0 0
        %735 = vmatpush1.bf16.msra.mxu0 0
        %736 = vmatprep.subr.bf16.mxu0 0
        %737 = vmatpush1.bf16.msra.mxu0 0
        %738 = vmatprep.subr.bf16.mxu0 0
        %739 = vmatpush1.bf16.msra.mxu0 0
        %740 = vmatprep.subr.bf16.mxu0 0
        %741 = vmatpush1.bf16.msra.mxu0 0
        %742 = vmatprep.mubr.bf16.mxu0 0
        %743 = vmatmul.mubr.bf16.gmra.mrb[0].mxu0 %v651
        %v744 = vpop.f32.mrb[0].mxu0
        %v745 = vadd.f32 0.0, %v744
        %v746 = vpop.f32.mrb[0].mxu0
        %v747 = vpop.f32.mrb[0].mxu0
        %v748 = vpop.f32.mrb[0].mxu0
        %749 = vdwg.mxu0
        %v750 = vpack.c.bf16 %v745, %v745
        %vm751 = vcmask 64512
        %v753 = vsel %vm751, %v633, 0
        %v756 = vsel %vm751, %v693, 0
        %758 = vmatprep.subr.bf16.mxu0 0
        %759 = vmatpush1.bf16.xpose.msra.mxu0 %v756
        %760 = vmatprep.subr.bf16.mxu0 0
        %761 = vmatpush1.bf16.xpose.msra.mxu0 0
        %762 = vmatprep.subr.bf16.mxu0 0
        %763 = vmatpush1.bf16.xpose.msra.mxu0 0
        %764 = vmatprep.subr.bf16.mxu0 0
        %765 = vmatpush1.bf16.xpose.msra.mxu0 0
        %766 = vmatprep.subr.bf16.mxu0 0
        %767 = vmatpush1.bf16.xpose.msra.mxu0 0
        %768 = vmatprep.subr.bf16.mxu0 0
        %769 = vmatpush1.bf16.xpose.msra.mxu0 0
        %770 = vmatprep.subr.bf16.mxu0 0
        %771 = vmatpush1.bf16.xpose.msra.mxu0 0
        %772 = vmatprep.subr.bf16.mxu0 0
        %773 = vmatpush1.bf16.xpose.msra.mxu0 0
        %774 = vmatprep.subr.bf16.mxu0 0
        %775 = vmatpush1.bf16.xpose.msra.mxu0 0
        %776 = vmatprep.subr.bf16.mxu0 0
        %777 = vmatpush1.bf16.xpose.msra.mxu0 0
        %778 = vmatprep.subr.bf16.mxu0 0
        %779 = vmatpush1.bf16.xpose.msra.mxu0 0
        %780 = vmatprep.subr.bf16.mxu0 0
        %781 = vmatpush1.bf16.xpose.msra.mxu0 0
        %782 = vmatprep.subr.bf16.mxu0 0
        %783 = vmatpush1.bf16.xpose.msra.mxu0 0
        %784 = vmatprep.subr.bf16.mxu0 0
        %785 = vmatpush1.bf16.xpose.msra.mxu0 0
        %786 = vmatprep.subr.bf16.mxu0 0
        %787 = vmatpush1.bf16.xpose.msra.mxu0 0
        %788 = vmatprep.subr.bf16.mxu0 0
        %789 = vmatpush1.bf16.xpose.msra.mxu0 0
        %790 = vmatprep.mubr.bf16.mxu0 0
        %791 = vmatmul.mubr.bf16.gmra.mrb[0].mxu0 %v753
        %v792 = vpop.f32.mrb[0].mxu0
        %v793 = vadd.f32 0.0, %v792
        %v794 = vpop.f32.mrb[0].mxu0
        %v795 = vpop.f32.mrb[0].mxu0
        %v796 = vpop.f32.mrb[0].mxu0
        %797 = vdwg.mxu0
        %v798 = vsel %vm751, %v793, -inf
        %799 = vmax.xlane.f32.xlu0 %v798
        %v800 = vpop.xlane.xlu0 %799
        %v801 = vsub.f32 %v793, %v800
        %v802 = vmul.f32 %v801, 1.442695
        %v803 = vpow.pop %v802
        %v804 = vsel %vm751, %v803, 0.0
        %805 = vadd.xlane.f32.xlu0 %v804
        %v806 = vpop.xlane.xlu0 %805
        %v807 = vrcp.pop %v806
        %v808 = vmul.f32 %v803, %v807
        %v809 = vpack.c.bf16 %v808, %v808
        %v811 = vsel %vm751, %v809, 0
        %vm813 = vcmask 1043456
        %v815 = vsel %vm813, %v750, 0
        %817 = vmatprep.subr.bf16.mxu0 0
        %818 = vmatpush1.bf16.msra.mxu0 %v815
        %819 = vmatprep.subr.bf16.mxu0 0
        %820 = vmatpush1.bf16.msra.mxu0 0
        %821 = vmatprep.subr.bf16.mxu0 0
        %822 = vmatpush1.bf16.msra.mxu0 0
        %823 = vmatprep.subr.bf16.mxu0 0
        %824 = vmatpush1.bf16.msra.mxu0 0
        %825 = vmatprep.subr.bf16.mxu0 0
        %826 = vmatpush1.bf16.msra.mxu0 0
        %827 = vmatprep.subr.bf16.mxu0 0
        %828 = vmatpush1.bf16.msra.mxu0 0
        %829 = vmatprep.subr.bf16.mxu0 0
        %830 = vmatpush1.bf16.msra.mxu0 0
        %831 = vmatprep.subr.bf16.mxu0 0
        %832 = vmatpush1.bf16.msra.mxu0 0
        %833 = vmatprep.subr.bf16.mxu0 0
        %834 = vmatpush1.bf16.msra.mxu0 0
        %835 = vmatprep.subr.bf16.mxu0 0
        %836 = vmatpush1.bf16.msra.mxu0 0
        %837 = vmatprep.subr.bf16.mxu0 0
        %838 = vmatpush1.bf16.msra.mxu0 0
        %839 = vmatprep.subr.bf16.mxu0 0
        %840 = vmatpush1.bf16.msra.mxu0 0
        %841 = vmatprep.subr.bf16.mxu0 0
        %842 = vmatpush1.bf16.msra.mxu0 0
        %843 = vmatprep.subr.bf16.mxu0 0
        %844 = vmatpush1.bf16.msra.mxu0 0
        %845 = vmatprep.subr.bf16.mxu0 0
        %846 = vmatpush1.bf16.msra.mxu0 0
        %847 = vmatprep.subr.bf16.mxu0 0
        %848 = vmatpush1.bf16.msra.mxu0 0
        %849 = vmatprep.mubr.bf16.mxu0 0
        %850 = vmatmul.mubr.bf16.gmra.mrb[0].mxu0 %v811
        %v851 = vpop.f32.mrb[0].mxu0
        %v852 = vadd.f32 0.0, %v851
        %v853 = vpop.f32.mrb[0].mxu0
        %v854 = vpop.f32.mrb[0].mxu0
        %v855 = vpop.f32.mrb[0].mxu0
        %856 = vdwg.mxu0
        %v857 = vpack.c.bf16 %v852, %v852
        %v858 = vld [vmem:[#allocation11] sm:$0xf]
        %s859 = scalar_lea.vmem [#allocation7], 16
        %v860 = vld [vmem:[%s859] sm:$0xf]
        %v861 = vld [vmem:[%s859 + $0x4] sm:$0xf]
        %v862 = vld [vmem:[%s859 + $0x8] sm:$0xf]
        %v863 = vld [vmem:[%s859 + $0xc] sm:$0xf]
        %v868 = vunpack.c.l.b16 %v860
        %v869 = vunpack.c.l.b16 %v861
        %v870 = vunpack.c.l.b16 %v862
        %v871 = vunpack.c.l.b16 %v863
        %v872 = vpack.c.b16 %v869, %v868
        %v873 = vpack.c.b16 %v871, %v870
        %876 = vmatprep.subr.bf16.mxu0 0
        %877 = vmatpush1.bf16.msra.mxu0 %v872
        %878 = vmatprep.subr.bf16.mxu0 0
        %879 = vmatpush1.bf16.msra.mxu0 %v873
        %880 = vmatprep.subr.bf16.mxu0 0
        %881 = vmatpush1.bf16.msra.mxu0 0
        %882 = vmatprep.subr.bf16.mxu0 0
        %883 = vmatpush1.bf16.msra.mxu0 0
        %884 = vmatprep.subr.bf16.mxu0 0
        %885 = vmatpush1.bf16.msra.mxu0 0
        %886 = vmatprep.subr.bf16.mxu0 0
        %887 = vmatpush1.bf16.msra.mxu0 0
        %888 = vmatprep.subr.bf16.mxu0 0
        %889 = vmatpush1.bf16.msra.mxu0 0
        %890 = vmatprep.subr.bf16.mxu0 0
        %891 = vmatpush1.bf16.msra.mxu0 0
        %892 = vmatprep.subr.bf16.mxu0 0
        %893 = vmatpush1.bf16.msra.mxu0 0
        %894 = vmatprep.subr.bf16.mxu0 0
        %895 = vmatpush1.bf16.msra.mxu0 0
        %896 = vmatprep.subr.bf16.mxu0 0
        %897 = vmatpush1.bf16.msra.mxu0 0
        %898 = vmatprep.subr.bf16.mxu0 0
        %899 = vmatpush1.bf16.msra.mxu0 0
        %900 = vmatprep.subr.bf16.mxu0 0
        %901 = vmatpush1.bf16.msra.mxu0 0
        %902 = vmatprep.subr.bf16.mxu0 0
        %903 = vmatpush1.bf16.msra.mxu0 0
        %904 = vmatprep.subr.bf16.mxu0 0
        %905 = vmatpush1.bf16.msra.mxu0 0
        %906 = vmatprep.subr.bf16.mxu0 0
        %907 = vmatpush1.bf16.msra.mxu0 0
        %908 = vmatprep.mubr.bf16.mxu0 0
        %909 = vmatmul.mubr.bf16.gmra.mrb[0].mxu0 %v591
        %v910 = vpop.f32.mrb[0].mxu0
        %v911 = vadd.f32 0.0, %v910
        %v912 = vpop.f32.mrb[0].mxu0
        %v913 = vpop.f32.mrb[0].mxu0
        %v914 = vpop.f32.mrb[0].mxu0
        %915 = vdwg.mxu0
        %v916 = vpack.c.bf16 %v911, %v911
        %s917 = scalar_lea.vmem [#allocation8], 16
        %v918 = vld [vmem:[%s917] sm:$0xf]
        %v919 = vld [vmem:[%s917 + $0x4] sm:$0xf]
        %v920 = vld [vmem:[%s917 + $0x8] sm:$0xf]
        %v921 = vld [vmem:[%s917 + $0xc] sm:$0xf]
        %v926 = vunpack.c.l.b16 %v918
        %v927 = vunpack.c.l.b16 %v919
        %v928 = vunpack.c.l.b16 %v920
        %v929 = vunpack.c.l.b16 %v921
        %v930 = vpack.c.b16 %v927, %v926
        %v931 = vpack.c.b16 %v929, %v928
        %934 = vmatprep.subr.bf16.mxu0 0
        %935 = vmatpush1.bf16.msra.mxu0 %v930
        %936 = vmatprep.subr.bf16.mxu0 0
        %937 = vmatpush1.bf16.msra.mxu0 %v931
        %938 = vmatprep.subr.bf16.mxu0 0
        %939 = vmatpush1.bf16.msra.mxu0 0
        %940 = vmatprep.subr.bf16.mxu0 0
        %941 = vmatpush1.bf16.msra.mxu0 0
        %942 = vmatprep.subr.bf16.mxu0 0
        %943 = vmatpush1.bf16.msra.mxu0 0
        %944 = vmatprep.subr.bf16.mxu0 0
        %945 = vmatpush1.bf16.msra.mxu0 0
        %946 = vmatprep.subr.bf16.mxu0 0
        %947 = vmatpush1.bf16.msra.mxu0 0
        %948 = vmatprep.subr.bf16.mxu0 0
        %949 = vmatpush1.bf16.msra.mxu0 0
        %950 = vmatprep.subr.bf16.mxu0 0
        %951 = vmatpush1.bf16.msra.mxu0 0
        %952 = vmatprep.subr.bf16.mxu0 0
        %953 = vmatpush1.bf16.msra.mxu0 0
        %954 = vmatprep.subr.bf16.mxu0 0
        %955 = vmatpush1.bf16.msra.mxu0 0
        %956 = vmatprep.subr.bf16.mxu0 0
        %957 = vmatpush1.bf16.msra.mxu0 0
        %958 = vmatprep.subr.bf16.mxu0 0
        %959 = vmatpush1.bf16.msra.mxu0 0
        %960 = vmatprep.subr.bf16.mxu0 0
        %961 = vmatpush1.bf16.msra.mxu0 0
        %962 = vmatprep.subr.bf16.mxu0 0
        %963 = vmatpush1.bf16.msra.mxu0 0
        %964 = vmatprep.subr.bf16.mxu0 0
        %965 = vmatpush1.bf16.msra.mxu0 0
        %966 = vmatprep.mubr.bf16.mxu0 0
        %967 = vmatmul.mubr.bf16.gmra.mrb[0].mxu0 %v651
        %v968 = vpop.f32.mrb[0].mxu0
        %v969 = vadd.f32 0.0, %v968
        %v970 = vpop.f32.mrb[0].mxu0
        %v971 = vpop.f32.mrb[0].mxu0
        %v972 = vpop.f32.mrb[0].mxu0
        %973 = vdwg.mxu0
        %v974 = vpack.c.bf16 %v969, %v969
        %s975 = scalar_lea.vmem [#allocation10], 16
        %v976 = vld [vmem:[%s975] sm:$0xf]
        %v977 = vld [vmem:[%s975 + $0x4] sm:$0xf]
        %v978 = vld [vmem:[%s975 + $0x8] sm:$0xf]
        %v979 = vld [vmem:[%s975 + $0xc] sm:$0xf]
        %v984 = vunpack.c.l.b16 %v976
        %v985 = vunpack.c.l.b16 %v977
        %v986 = vunpack.c.l.b16 %v978
        %v987 = vunpack.c.l.b16 %v979
        %v988 = vpack.c.b16 %v985, %v984
        %v989 = vpack.c.b16 %v987, %v986
        %992 = vmatprep.subr.bf16.mxu0 0
        %993 = vmatpush1.bf16.msra.mxu0 %v988
        %994 = vmatprep.subr.bf16.mxu0 0
        %995 = vmatpush1.bf16.msra.mxu0 %v989
        %996 = vmatprep.subr.bf16.mxu0 0
        %997 = vmatpush1.bf16.msra.mxu0 0
        %998 = vmatprep.subr.bf16.mxu0 0
        %999 = vmatpush1.bf16.msra.mxu0 0
        %1000 = vmatprep.subr.bf16.mxu0 0
        %1001 = vmatpush1.bf16.msra.mxu0 0
        %1002 = vmatprep.subr.bf16.mxu0 0
        %1003 = vmatpush1.bf16.msra.mxu0 0
        %1004 = vmatprep.subr.bf16.mxu0 0
        %1005 = vmatpush1.bf16.msra.mxu0 0
        %1006 = vmatprep.subr.bf16.mxu0 0
        %1007 = vmatpush1.bf16.msra.mxu0 0
        %1008 = vmatprep.subr.bf16.mxu0 0
        %1009 = vmatpush1.bf16.msra.mxu0 0
        %1010 = vmatprep.subr.bf16.mxu0 0
        %1011 = vmatpush1.bf16.msra.mxu0 0
        %1012 = vmatprep.subr.bf16.mxu0 0
        %1013 = vmatpush1.bf16.msra.mxu0 0
        %1014 = vmatprep.subr.bf16.mxu0 0
        %1015 = vmatpush1.bf16.msra.mxu0 0
        %1016 = vmatprep.subr.bf16.mxu0 0
        %1017 = vmatpush1.bf16.msra.mxu0 0
        %1018 = vmatprep.subr.bf16.mxu0 0
        %1019 = vmatpush1.bf16.msra.mxu0 0
        %1020 = vmatprep.subr.bf16.mxu0 0
        %1021 = vmatpush1.bf16.msra.mxu0 0
        %1022 = vmatprep.subr.bf16.mxu0 0
        %1023 = vmatpush1.bf16.msra.mxu0 0
        %1024 = vmatprep.mubr.bf16.mxu0 0
        %1025 = vmatmul.mubr.bf16.gmra.mrb[0].mxu0 %v651
        %v1026 = vpop.f32.mrb[0].mxu0
        %v1027 = vadd.f32 0.0, %v1026
        %v1028 = vpop.f32.mrb[0].mxu0
        %v1029 = vpop.f32.mrb[0].mxu0
        %v1030 = vpop.f32.mrb[0].mxu0
        %1031 = vdwg.mxu0
        %v1032 = vpack.c.bf16 %v1027, %v1027
        %v1034 = vsel %vm751, %v916, 0
        %v1037 = vsel %vm751, %v974, 0
        %1039 = vmatprep.subr.bf16.mxu0 0
        %1040 = vmatpush1.bf16.xpose.msra.mxu0 %v1037
        %1041 = vmatprep.subr.bf16.mxu0 0
        %1042 = vmatpush1.bf16.xpose.msra.mxu0 0
        %1043 = vmatprep.subr.bf16.mxu0 0
        %1044 = vmatpush1.bf16.xpose.msra.mxu0 0
        %1045 = vmatprep.subr.bf16.mxu0 0
        %1046 = vmatpush1.bf16.xpose.msra.mxu0 0
        %1047 = vmatprep.subr.bf16.mxu0 0
        %1048 = vmatpush1.bf16.xpose.msra.mxu0 0
        %1049 = vmatprep.subr.bf16.mxu0 0
        %1050 = vmatpush1.bf16.xpose.msra.mxu0 0
        %1051 = vmatprep.subr.bf16.mxu0 0
        %1052 = vmatpush1.bf16.xpose.msra.mxu0 0
        %1053 = vmatprep.subr.bf16.mxu0 0
        %1054 = vmatpush1.bf16.xpose.msra.mxu0 0
        %1055 = vmatprep.subr.bf16.mxu0 0
        %1056 = vmatpush1.bf16.xpose.msra.mxu0 0
        %1057 = vmatprep.subr.bf16.mxu0 0
        %1058 = vmatpush1.bf16.xpose.msra.mxu0 0
        %1059 = vmatprep.subr.bf16.mxu0 0
        %1060 = vmatpush1.bf16.xpose.msra.mxu0 0
        %1061 = vmatprep.subr.bf16.mxu0 0
        %1062 = vmatpush1.bf16.xpose.msra.mxu0 0
        %1063 = vmatprep.subr.bf16.mxu0 0
        %1064 = vmatpush1.bf16.xpose.msra.mxu0 0
        %1065 = vmatprep.subr.bf16.mxu0 0
        %1066 = vmatpush1.bf16.xpose.msra.mxu0 0
        %1067 = vmatprep.subr.bf16.mxu0 0
        %1068 = vmatpush1.bf16.xpose.msra.mxu0 0
        %1069 = vmatprep.subr.bf16.mxu0 0
        %1070 = vmatpush1.bf16.xpose.msra.mxu0 0
        %1071 = vmatprep.mubr.bf16.mxu0 0
        %1072 = vmatmul.mubr.bf16.gmra.mrb[0].mxu0 %v1034
        %v1073 = vpop.f32.mrb[0].mxu0
        %v1074 = vadd.f32 0.0, %v1073
        %v1075 = vpop.f32.mrb[0].mxu0
        %v1076 = vpop.f32.mrb[0].mxu0
        %v1077 = vpop.f32.mrb[0].mxu0
        %1078 = vdwg.mxu0
        %v1079 = vsel %vm751, %v1074, -inf
        %1080 = vmax.xlane.f32.xlu0 %v1079
        %v1081 = vpop.xlane.xlu0 %1080
        %v1082 = vsub.f32 %v1074, %v1081
        %v1083 = vmul.f32 %v1082, 1.442695
        %v1084 = vpow.pop %v1083
        %v1085 = vsel %vm751, %v1084, 0.0
        %1086 = vadd.xlane.f32.xlu0 %v1085
        %v1087 = vpop.xlane.xlu0 %1086
        %v1088 = vrcp.pop %v1087
        %v1089 = vmul.f32 %v1084, %v1088
        %v1090 = vpack.c.bf16 %v1089, %v1089
        %v1092 = vsel %vm751, %v1090, 0
        %v1095 = vsel %vm813, %v1032, 0
        %1097 = vmatprep.subr.bf16.mxu0 0
        %1098 = vmatpush1.bf16.msra.mxu0 %v1095
        %1099 = vmatprep.subr.bf16.mxu0 0
        %1100 = vmatpush1.bf16.msra.mxu0 0
        %1101 = vmatprep.subr.bf16.mxu0 0
        %1102 = vmatpush1.bf16.msra.mxu0 0
        %1103 = vmatprep.subr.bf16.mxu0 0
        %1104 = vmatpush1.bf16.msra.mxu0 0
        %1105 = vmatprep.subr.bf16.mxu0 0
        %1106 = vmatpush1.bf16.msra.mxu0 0
        %1107 = vmatprep.subr.bf16.mxu0 0
        %1108 = vmatpush1.bf16.msra.mxu0 0
        %1109 = vmatprep.subr.bf16.mxu0 0
        %1110 = vmatpush1.bf16.msra.mxu0 0
        %1111 = vmatprep.subr.bf16.mxu0 0
        %1112 = vmatpush1.bf16.msra.mxu0 0
        %1113 = vmatprep.subr.bf16.mxu0 0
        %1114 = vmatpush1.bf16.msra.mxu0 0
        %1115 = vmatprep.subr.bf16.mxu0 0
        %1116 = vmatpush1.bf16.msra.mxu0 0
        %1117 = vmatprep.subr.bf16.mxu0 0
        %1118 = vmatpush1.bf16.msra.mxu0 0
        %1119 = vmatprep.subr.bf16.mxu0 0
        %1120 = vmatpush1.bf16.msra.mxu0 0
        %1121 = vmatprep.subr.bf16.mxu0 0
        %1122 = vmatpush1.bf16.msra.mxu0 0
        %1123 = vmatprep.subr.bf16.mxu0 0
        %1124 = vmatpush1.bf16.msra.mxu0 0
        %1125 = vmatprep.subr.bf16.mxu0 0
        %1126 = vmatpush1.bf16.msra.mxu0 0
        %1127 = vmatprep.subr.bf16.mxu0 0
        %1128 = vmatpush1.bf16.msra.mxu0 0
        %1129 = vmatprep.mubr.bf16.mxu0 0
        %1130 = vmatmul.mubr.bf16.gmra.mrb[0].mxu0 %v1092
        %v1131 = vpop.f32.mrb[0].mxu0
        %v1132 = vadd.f32 0.0, %v1131
        %v1133 = vpop.f32.mrb[0].mxu0
        %v1134 = vpop.f32.mrb[0].mxu0
        %v1135 = vpop.f32.mrb[0].mxu0
        %1136 = vdwg.mxu0
        %v1137 = vpack.c.bf16 %v1132, %v1132
        %s1138 = scalar_lea.vmem [#allocation11], 4
        %v1139 = vld [vmem:[%s1138] sm:$0xf]
        %v1141 = vsel %vm751, %v1137, 0
        %v1144 = vsel %vm813, %v1139, 0
        %1146 = vmatprep.subr.bf16.mxu0 0
        %1147 = vmatpush1.bf16.msra.mxu0 %v1144
        %1148 = vmatprep.subr.bf16.mxu0 0
        %1149 = vmatpush1.bf16.msra.mxu0 0
        %1150 = vmatprep.subr.bf16.mxu0 0
        %1151 = vmatpush1.bf16.msra.mxu0 0
        %1152 = vmatprep.subr.bf16.mxu0 0
        %1153 = vmatpush1.bf16.msra.mxu0 0
        %1154 = vmatprep.subr.bf16.mxu0 0
        %1155 = vmatpush1.bf16.msra.mxu0 0
        %1156 = vmatprep.subr.bf16.mxu0 0
        %1157 = vmatpush1.bf16.msra.mxu0 0
        %1158 = vmatprep.subr.bf16.mxu0 0
        %1159 = vmatpush1.bf16.msra.mxu0 0
        %1160 = vmatprep.subr.bf16.mxu0 0
        %1161 = vmatpush1.bf16.msra.mxu0 0
        %1162 = vmatprep.subr.bf16.mxu0 0
        %1163 = vmatpush1.bf16.msra.mxu0 0
        %1164 = vmatprep.subr.bf16.mxu0 0
        %1165 = vmatpush1.bf16.msra.mxu0 0
        %1166 = vmatprep.subr.bf16.mxu0 0
        %1167 = vmatpush1.bf16.msra.mxu0 0
        %1168 = vmatprep.subr.bf16.mxu0 0
        %1169 = vmatpush1.bf16.msra.mxu0 0
        %1170 = vmatprep.subr.bf16.mxu0 0
        %1171 = vmatpush1.bf16.msra.mxu0 0
        %1172 = vmatprep.subr.bf16.mxu0 0
        %1173 = vmatpush1.bf16.msra.mxu0 0
        %1174 = vmatprep.subr.bf16.mxu0 0
        %1175 = vmatpush1.bf16.msra.mxu0 0
        %1176 = vmatprep.subr.bf16.mxu0 0
        %1177 = vmatpush1.bf16.msra.mxu0 0
        %1178 = vmatprep.mubr.bf16.mxu0 0
        %1179 = vmatmul.mubr.bf16.gmra.mrb[0].mxu0 %v1141
        %v1180 = vpop.f32.mrb[0].mxu0
        %v1181 = vadd.f32 0.0, %v1180
        %v1182 = vpop.f32.mrb[0].mxu0
        %v1183 = vpop.f32.mrb[0].mxu0
        %v1184 = vpop.f32.mrb[0].mxu0
        %1185 = vdwg.mxu0
        %v1187 = vsel %vm751, %v857, 0
        %v1190 = vsel %vm813, %v858, 0
        %1192 = vmatprep.subr.bf16.mxu0 0
        %1193 = vmatpush1.bf16.msra.mxu0 %v1190
        %1194 = vmatprep.subr.bf16.mxu0 0
        %1195 = vmatpush1.bf16.msra.mxu0 0
        %1196 = vmatprep.subr.bf16.mxu0 0
        %1197 = vmatpush1.bf16.msra.mxu0 0
        %1198 = vmatprep.subr.bf16.mxu0 0
        %1199 = vmatpush1.bf16.msra.mxu0 0
        %1200 = vmatprep.subr.bf16.mxu0 0
        %1201 = vmatpush1.bf16.msra.mxu0 0
        %1202 = vmatprep.subr.bf16.mxu0 0
        %1203 = vmatpush1.bf16.msra.mxu0 0
        %1204 = vmatprep.subr.bf16.mxu0 0
        %1205 = vmatpush1.bf16.msra.mxu0 0
        %1206 = vmatprep.subr.bf16.mxu0 0
        %1207 = vmatpush1.bf16.msra.mxu0 0
        %1208 = vmatprep.subr.bf16.mxu0 0
        %1209 = vmatpush1.bf16.msra.mxu0 0
        %1210 = vmatprep.subr.bf16.mxu0 0
        %1211 = vmatpush1.bf16.msra.mxu0 0
        %1212 = vmatprep.subr.bf16.mxu0 0
        %1213 = vmatpush1.bf16.msra.mxu0 0
        %1214 = vmatprep.subr.bf16.mxu0 0
        %1215 = vmatpush1.bf16.msra.mxu0 0
        %1216 = vmatprep.subr.bf16.mxu0 0
        %1217 = vmatpush1.bf16.msra.mxu0 0
        %1218 = vmatprep.subr.bf16.mxu0 0
        %1219 = vmatpush1.bf16.msra.mxu0 0
        %1220 = vmatprep.subr.bf16.mxu0 0
        %1221 = vmatpush1.bf16.msra.mxu0 0
        %1222 = vmatprep.subr.bf16.mxu0 0
        %1223 = vmatpush1.bf16.msra.mxu0 0
        %1224 = vmatprep.mubr.bf16.mxu0 0
        %1225 = vmatmul.mubr.bf16.gmra.mrb[0].mxu0 %v1187
        %v1226 = vpop.f32.mrb[0].mxu0
        %v1227 = vadd.f32 %v1181, %v1226
        %v1228 = vpop.f32.mrb[0].mxu0
        %v1229 = vpop.f32.mrb[0].mxu0
        %v1230 = vpop.f32.mrb[0].mxu0
        %1231 = vdwg.mxu0
        %s1232 = scalar_lea.vmem [#allocation7], 32
        %v1233 = vld [vmem:[%s1232] sm:$0xf]
        %v1234 = vld [vmem:[%s1232 + $0x4] sm:$0xf]
        %v1235 = vld [vmem:[%s1232 + $0x8] sm:$0xf]
        %v1236 = vld [vmem:[%s1232 + $0xc] sm:$0xf]
        %v1241 = vunpack.c.l.b16 %v1233
        %v1242 = vunpack.c.l.b16 %v1234
        %v1243 = vunpack.c.l.b16 %v1235
        %v1244 = vunpack.c.l.b16 %v1236
        %v1245 = vpack.c.b16 %v1242, %v1241
        %v1246 = vpack.c.b16 %v1244, %v1243
        %1249 = vmatprep.subr.bf16.mxu0 0
        %1250 = vmatpush1.bf16.msra.mxu0 %v1245
        %1251 = vmatprep.subr.bf16.mxu0 0
        %1252 = vmatpush1.bf16.msra.mxu0 %v1246
        %1253 = vmatprep.subr.bf16.mxu0 0
        %1254 = vmatpush1.bf16.msra.mxu0 0
        %1255 = vmatprep.subr.bf16.mxu0 0
        %1256 = vmatpush1.bf16.msra.mxu0 0
        %1257 = vmatprep.subr.bf16.mxu0 0
        %1258 = vmatpush1.bf16.msra.mxu0 0
        %1259 = vmatprep.subr.bf16.mxu0 0
        %1260 = vmatpush1.bf16.msra.mxu0 0
        %1261 = vmatprep.subr.bf16.mxu0 0
        %1262 = vmatpush1.bf16.msra.mxu0 0
        %1263 = vmatprep.subr.bf16.mxu0 0
        %1264 = vmatpush1.bf16.msra.mxu0 0
        %1265 = vmatprep.subr.bf16.mxu0 0
        %1266 = vmatpush1.bf16.msra.mxu0 0
        %1267 = vmatprep.subr.bf16.mxu0 0
        %1268 = vmatpush1.bf16.msra.mxu0 0
        %1269 = vmatprep.subr.bf16.mxu0 0
        %1270 = vmatpush1.bf16.msra.mxu0 0
        %1271 = vmatprep.subr.bf16.mxu0 0
        %1272 = vmatpush1.bf16.msra.mxu0 0
        %1273 = vmatprep.subr.bf16.mxu0 0
        %1274 = vmatpush1.bf16.msra.mxu0 0
        %1275 = vmatprep.subr.bf16.mxu0 0
        %1276 = vmatpush1.bf16.msra.mxu0 0
        %1277 = vmatprep.subr.bf16.mxu0 0
        %1278 = vmatpush1.bf16.msra.mxu0 0
        %1279 = vmatprep.subr.bf16.mxu0 0
        %1280 = vmatpush1.bf16.msra.mxu0 0
        %1281 = vmatprep.mubr.bf16.mxu0 0
        %1282 = vmatmul.mubr.bf16.gmra.mrb[0].mxu0 %v591
        %v1283 = vpop.f32.mrb[0].mxu0
        %v1284 = vadd.f32 0.0, %v1283
        %v1285 = vpop.f32.mrb[0].mxu0
        %v1286 = vpop.f32.mrb[0].mxu0
        %v1287 = vpop.f32.mrb[0].mxu0
        %1288 = vdwg.mxu0
        %v1289 = vpack.c.bf16 %v1284, %v1284
        %s1290 = scalar_lea.vmem [#allocation8], 32
        %v1291 = vld [vmem:[%s1290] sm:$0xf]
        %v1292 = vld [vmem:[%s1290 + $0x4] sm:$0xf]
        %v1293 = vld [vmem:[%s1290 + $0x8] sm:$0xf]
        %v1294 = vld [vmem:[%s1290 + $0xc] sm:$0xf]
        %v1299 = vunpack.c.l.b16 %v1291
        %v1300 = vunpack.c.l.b16 %v1292
        %v1301 = vunpack.c.l.b16 %v1293
        %v1302 = vunpack.c.l.b16 %v1294
        %v1303 = vpack.c.b16 %v1300, %v1299
        %v1304 = vpack.c.b16 %v1302, %v1301
        %1307 = vmatprep.subr.bf16.mxu0 0
        %1308 = vmatpush1.bf16.msra.mxu0 %v1303
        %1309 = vmatprep.subr.bf16.mxu0 0
        %1310 = vmatpush1.bf16.msra.mxu0 %v1304
        %1311 = vmatprep.subr.bf16.mxu0 0
        %1312 = vmatpush1.bf16.msra.mxu0 0
        %1313 = vmatprep.subr.bf16.mxu0 0
        %1314 = vmatpush1.bf16.msra.mxu0 0
        %1315 = vmatprep.subr.bf16.mxu0 0
        %1316 = vmatpush1.bf16.msra.mxu0 0
        %1317 = vmatprep.subr.bf16.mxu0 0
        %1318 = vmatpush1.bf16.msra.mxu0 0
        %1319 = vmatprep.subr.bf16.mxu0 0
        %1320 = vmatpush1.bf16.msra.mxu0 0
        %1321 = vmatprep.subr.bf16.mxu0 0
        %1322 = vmatpush1.bf16.msra.mxu0 0
        %1323 = vmatprep.subr.bf16.mxu0 0
        %1324 = vmatpush1.bf16.msra.mxu0 0
        %1325 = vmatprep.subr.bf16.mxu0 0
        %1326 = vmatpush1.bf16.msra.mxu0 0
        %1327 = vmatprep.subr.bf16.mxu0 0
        %1328 = vmatpush1.bf16.msra.mxu0 0
        %1329 = vmatprep.subr.bf16.mxu0 0
        %1330 = vmatpush1.bf16.msra.mxu0 0
        %1331 = vmatprep.subr.bf16.mxu0 0
        %1332 = vmatpush1.bf16.msra.mxu0 0
        %1333 = vmatprep.subr.bf16.mxu0 0
        %1334 = vmatpush1.bf16.msra.mxu0 0
        %1335 = vmatprep.subr.bf16.mxu0 0
        %1336 = vmatpush1.bf16.msra.mxu0 0
        %1337 = vmatprep.subr.bf16.mxu0 0
        %1338 = vmatpush1.bf16.msra.mxu0 0
        %1339 = vmatprep.mubr.bf16.mxu0 0
        %1340 = vmatmul.mubr.bf16.gmra.mrb[0].mxu0 %v651
        %v1341 = vpop.f32.mrb[0].mxu0
        %v1342 = vadd.f32 0.0, %v1341
        %v1343 = vpop.f32.mrb[0].mxu0
        %v1344 = vpop.f32.mrb[0].mxu0
        %v1345 = vpop.f32.mrb[0].mxu0
        %1346 = vdwg.mxu0
        %v1347 = vpack.c.bf16 %v1342, %v1342
        %s1348 = scalar_lea.vmem [#allocation10], 32
        %v1349 = vld [vmem:[%s1348] sm:$0xf]
        %v1350 = vld [vmem:[%s1348 + $0x4] sm:$0xf]
        %v1351 = vld [vmem:[%s1348 + $0x8] sm:$0xf]
        %v1352 = vld [vmem:[%s1348 + $0xc] sm:$0xf]
        %v1357 = vunpack.c.l.b16 %v1349
        %v1358 = vunpack.c.l.b16 %v1350
        %v1359 = vunpack.c.l.b16 %v1351
        %v1360 = vunpack.c.l.b16 %v1352
        %v1361 = vpack.c.b16 %v1358, %v1357
        %v1362 = vpack.c.b16 %v1360, %v1359
        %1365 = vmatprep.subr.bf16.mxu0 0
        %1366 = vmatpush1.bf16.msra.mxu0 %v1361
        %1367 = vmatprep.subr.bf16.mxu0 0
        %1368 = vmatpush1.bf16.msra.mxu0 %v1362
        %1369 = vmatprep.subr.bf16.mxu0 0
        %1370 = vmatpush1.bf16.msra.mxu0 0
        %1371 = vmatprep.subr.bf16.mxu0 0
        %1372 = vmatpush1.bf16.msra.mxu0 0
        %1373 = vmatprep.subr.bf16.mxu0 0
        %1374 = vmatpush1.bf16.msra.mxu0 0
        %1375 = vmatprep.subr.bf16.mxu0 0
        %1376 = vmatpush1.bf16.msra.mxu0 0
        %1377 = vmatprep.subr.bf16.mxu0 0
        %1378 = vmatpush1.bf16.msra.mxu0 0
        %1379 = vmatprep.subr.bf16.mxu0 0
        %1380 = vmatpush1.bf16.msra.mxu0 0
        %1381 = vmatprep.subr.bf16.mxu0 0
        %1382 = vmatpush1.bf16.msra.mxu0 0
        %1383 = vmatprep.subr.bf16.mxu0 0
        %1384 = vmatpush1.bf16.msra.mxu0 0
        %1385 = vmatprep.subr.bf16.mxu0 0
        %1386 = vmatpush1.bf16.msra.mxu0 0
        %1387 = vmatprep.subr.bf16.mxu0 0
        %1388 = vmatpush1.bf16.msra.mxu0 0
        %1389 = vmatprep.subr.bf16.mxu0 0
        %1390 = vmatpush1.bf16.msra.mxu0 0
        %1391 = vmatprep.subr.bf16.mxu0 0
        %1392 = vmatpush1.bf16.msra.mxu0 0
        %1393 = vmatprep.subr.bf16.mxu0 0
        %1394 = vmatpush1.bf16.msra.mxu0 0
        %1395 = vmatprep.subr.bf16.mxu0 0
        %1396 = vmatpush1.bf16.msra.mxu0 0
        %1397 = vmatprep.mubr.bf16.mxu0 0
        %1398 = vmatmul.mubr.bf16.gmra.mrb[0].mxu0 %v651
        %v1399 = vpop.f32.mrb[0].mxu0
        %v1400 = vadd.f32 0.0, %v1399
        %v1401 = vpop.f32.mrb[0].mxu0
        %v1402 = vpop.f32.mrb[0].mxu0
        %v1403 = vpop.f32.mrb[0].mxu0
        %1404 = vdwg.mxu0
        %v1405 = vpack.c.bf16 %v1400, %v1400
        %v1407 = vsel %vm751, %v1289, 0
        %v1410 = vsel %vm751, %v1347, 0
        %1412 = vmatprep.subr.bf16.mxu0 0
        %1413 = vmatpush1.bf16.xpose.msra.mxu0 %v1410
        %1414 = vmatprep.subr.bf16.mxu0 0
        %1415 = vmatpush1.bf16.xpose.msra.mxu0 0
        %1416 = vmatprep.subr.bf16.mxu0 0
        %1417 = vmatpush1.bf16.xpose.msra.mxu0 0
        %1418 = vmatprep.subr.bf16.mxu0 0
        %1419 = vmatpush1.bf16.xpose.msra.mxu0 0
        %1420 = vmatprep.subr.bf16.mxu0 0
        %1421 = vmatpush1.bf16.xpose.msra.mxu0 0
        %1422 = vmatprep.subr.bf16.mxu0 0
        %1423 = vmatpush1.bf16.xpose.msra.mxu0 0
        %1424 = vmatprep.subr.bf16.mxu0 0
        %1425 = vmatpush1.bf16.xpose.msra.mxu0 0
        %1426 = vmatprep.subr.bf16.mxu0 0
        %1427 = vmatpush1.bf16.xpose.msra.mxu0 0
        %1428 = vmatprep.subr.bf16.mxu0 0
        %1429 = vmatpush1.bf16.xpose.msra.mxu0 0
        %1430 = vmatprep.subr.bf16.mxu0 0
        %1431 = vmatpush1.bf16.xpose.msra.mxu0 0
        %1432 = vmatprep.subr.bf16.mxu0 0
        %1433 = vmatpush1.bf16.xpose.msra.mxu0 0
        %1434 = vmatprep.subr.bf16.mxu0 0
        %1435 = vmatpush1.bf16.xpose.msra.mxu0 0
        %1436 = vmatprep.subr.bf16.mxu0 0
        %1437 = vmatpush1.bf16.xpose.msra.mxu0 0
        %1438 = vmatprep.subr.bf16.mxu0 0
        %1439 = vmatpush1.bf16.xpose.msra.mxu0 0
        %1440 = vmatprep.subr.bf16.mxu0 0
        %1441 = vmatpush1.bf16.xpose.msra.mxu0 0
        %1442 = vmatprep.subr.bf16.mxu0 0
        %1443 = vmatpush1.bf16.xpose.msra.mxu0 0
        %1444 = vmatprep.mubr.bf16.mxu0 0
        %1445 = vmatmul.mubr.bf16.gmra.mrb[0].mxu0 %v1407
        %v1446 = vpop.f32.mrb[0].mxu0
        %v1447 = vadd.f32 0.0, %v1446
        %v1448 = vpop.f32.mrb[0].mxu0
        %v1449 = vpop.f32.mrb[0].mxu0
        %v1450 = vpop.f32.mrb[0].mxu0
        %1451 = vdwg.mxu0
        %v1452 = vsel %vm751, %v1447, -inf
        %1453 = vmax.xlane.f32.xlu0 %v1452
        %v1454 = vpop.xlane.xlu0 %1453
        %v1455 = vsub.f32 %v1447, %v1454
        %v1456 = vmul.f32 %v1455, 1.442695
        %v1457 = vpow.pop %v1456
        %v1458 = vsel %vm751, %v1457, 0.0
        %1459 = vadd.xlane.f32.xlu0 %v1458
        %v1460 = vpop.xlane.xlu0 %1459
        %v1461 = vrcp.pop %v1460
        %v1462 = vmul.f32 %v1457, %v1461
        %v1463 = vpack.c.bf16 %v1462, %v1462
        %v1465 = vsel %vm751, %v1463, 0
        %v1468 = vsel %vm813, %v1405, 0
        %1470 = vmatprep.subr.bf16.mxu0 0
        %1471 = vmatpush1.bf16.msra.mxu0 %v1468
        %1472 = vmatprep.subr.bf16.mxu0 0
        %1473 = vmatpush1.bf16.msra.mxu0 0
        %1474 = vmatprep.subr.bf16.mxu0 0
        %1475 = vmatpush1.bf16.msra.mxu0 0
        %1476 = vmatprep.subr.bf16.mxu0 0
        %1477 = vmatpush1.bf16.msra.mxu0 0
        %1478 = vmatprep.subr.bf16.mxu0 0
        %1479 = vmatpush1.bf16.msra.mxu0 0
        %1480 = vmatprep.subr.bf16.mxu0 0
        %1481 = vmatpush1.bf16.msra.mxu0 0
        %1482 = vmatprep.subr.bf16.mxu0 0
        %1483 = vmatpush1.bf16.msra.mxu0 0
        %1484 = vmatprep.subr.bf16.mxu0 0
        %1485 = vmatpush1.bf16.msra.mxu0 0
        %1486 = vmatprep.subr.bf16.mxu0 0
        %1487 = vmatpush1.bf16.msra.mxu0 0
        %1488 = vmatprep.subr.bf16.mxu0 0
        %1489 = vmatpush1.bf16.msra.mxu0 0
        %1490 = vmatprep.subr.bf16.mxu0 0
        %1491 = vmatpush1.bf16.msra.mxu0 0
        %1492 = vmatprep.subr.bf16.mxu0 0
        %1493 = vmatpush1.bf16.msra.mxu0 0
        %1494 = vmatprep.subr.bf16.mxu0 0
        %1495 = vmatpush1.bf16.msra.mxu0 0
        %1496 = vmatprep.subr.bf16.mxu0 0
        %1497 = vmatpush1.bf16.msra.mxu0 0
        %1498 = vmatprep.subr.bf16.mxu0 0
        %1499 = vmatpush1.bf16.msra.mxu0 0
        %1500 = vmatprep.subr.bf16.mxu0 0
        %1501 = vmatpush1.bf16.msra.mxu0 0
        %1502 = vmatprep.mubr.bf16.mxu0 0
        %1503 = vmatmul.mubr.bf16.gmra.mrb[0].mxu0 %v1465
        %v1504 = vpop.f32.mrb[0].mxu0
        %v1505 = vadd.f32 0.0, %v1504
        %v1506 = vpop.f32.mrb[0].mxu0
        %v1507 = vpop.f32.mrb[0].mxu0
        %v1508 = vpop.f32.mrb[0].mxu0
        %1509 = vdwg.mxu0
        %v1510 = vpack.c.bf16 %v1505, %v1505
        %s1511 = scalar_lea.vmem [#allocation11], 8
        %v1512 = vld [vmem:[%s1511] sm:$0xf]
        %v1514 = vsel %vm751, %v1510, 0
        %v1517 = vsel %vm813, %v1512, 0
        %1519 = vmatprep.subr.bf16.mxu0 0
        %1520 = vmatpush1.bf16.msra.mxu0 %v1517
        %1521 = vmatprep.subr.bf16.mxu0 0
        %1522 = vmatpush1.bf16.msra.mxu0 0
        %1523 = vmatprep.subr.bf16.mxu0 0
        %1524 = vmatpush1.bf16.msra.mxu0 0
        %1525 = vmatprep.subr.bf16.mxu0 0
        %1526 = vmatpush1.bf16.msra.mxu0 0
        %1527 = vmatprep.subr.bf16.mxu0 0
        %1528 = vmatpush1.bf16.msra.mxu0 0
        %1529 = vmatprep.subr.bf16.mxu0 0
        %1530 = vmatpush1.bf16.msra.mxu0 0
        %1531 = vmatprep.subr.bf16.mxu0 0
        %1532 = vmatpush1.bf16.msra.mxu0 0
        %1533 = vmatprep.subr.bf16.mxu0 0
        %1534 = vmatpush1.bf16.msra.mxu0 0
        %1535 = vmatprep.subr.bf16.mxu0 0
        %1536 = vmatpush1.bf16.msra.mxu0 0
        %1537 = vmatprep.subr.bf16.mxu0 0
        %1538 = vmatpush1.bf16.msra.mxu0 0
        %1539 = vmatprep.subr.bf16.mxu0 0
        %1540 = vmatpush1.bf16.msra.mxu0 0
        %1541 = vmatprep.subr.bf16.mxu0 0
        %1542 = vmatpush1.bf16.msra.mxu0 0
        %1543 = vmatprep.subr.bf16.mxu0 0
        %1544 = vmatpush1.bf16.msra.mxu0 0
        %1545 = vmatprep.subr.bf16.mxu0 0
        %1546 = vmatpush1.bf16.msra.mxu0 0
        %1547 = vmatprep.subr.bf16.mxu0 0
        %1548 = vmatpush1.bf16.msra.mxu0 0
        %1549 = vmatprep.subr.bf16.mxu0 0
        %1550 = vmatpush1.bf16.msra.mxu0 0
        %1551 = vmatprep.mubr.bf16.mxu0 0
        %1552 = vmatmul.mubr.bf16.gmra.mrb[0].mxu0 %v1514
        %v1553 = vpop.f32.mrb[0].mxu0
        %v1554 = vadd.f32 0.0, %v1553
        %v1555 = vpop.f32.mrb[0].mxu0
        %v1556 = vpop.f32.mrb[0].mxu0
        %v1557 = vpop.f32.mrb[0].mxu0
        %1558 = vdwg.mxu0
        %v1559 = vadd.f32 %v1227, %v1554
        %s1560 = scalar_lea.vmem [#allocation7], 48
        %v1561 = vld [vmem:[%s1560] sm:$0xf]
        %v1562 = vld [vmem:[%s1560 + $0x4] sm:$0xf]
        %v1563 = vld [vmem:[%s1560 + $0x8] sm:$0xf]
        %v1564 = vld [vmem:[%s1560 + $0xc] sm:$0xf]
        %v1569 = vunpack.c.l.b16 %v1561
        %v1570 = vunpack.c.l.b16 %v1562
        %v1571 = vunpack.c.l.b16 %v1563
        %v1572 = vunpack.c.l.b16 %v1564
        %v1573 = vpack.c.b16 %v1570, %v1569
        %v1574 = vpack.c.b16 %v1572, %v1571
        %1577 = vmatprep.subr.bf16.mxu0 0
        %1578 = vmatpush1.bf16.msra.mxu0 %v1573
        %1579 = vmatprep.subr.bf16.mxu0 0
        %1580 = vmatpush1.bf16.msra.mxu0 %v1574
        %1581 = vmatprep.subr.bf16.mxu0 0
        %1582 = vmatpush1.bf16.msra.mxu0 0
        %1583 = vmatprep.subr.bf16.mxu0 0
        %1584 = vmatpush1.bf16.msra.mxu0 0
        %1585 = vmatprep.subr.bf16.mxu0 0
        %1586 = vmatpush1.bf16.msra.mxu0 0
        %1587 = vmatprep.subr.bf16.mxu0 0
        %1588 = vmatpush1.bf16.msra.mxu0 0
        %1589 = vmatprep.subr.bf16.mxu0 0
        %1590 = vmatpush1.bf16.msra.mxu0 0
        %1591 = vmatprep.subr.bf16.mxu0 0
        %1592 = vmatpush1.bf16.msra.mxu0 0
        %1593 = vmatprep.subr.bf16.mxu0 0
        %1594 = vmatpush1.bf16.msra.mxu0 0
        %1595 = vmatprep.subr.bf16.mxu0 0
        %1596 = vmatpush1.bf16.msra.mxu0 0
        %1597 = vmatprep.subr.bf16.mxu0 0
        %1598 = vmatpush1.bf16.msra.mxu0 0
        %1599 = vmatprep.subr.bf16.mxu0 0
        %1600 = vmatpush1.bf16.msra.mxu0 0
        %1601 = vmatprep.subr.bf16.mxu0 0
        %1602 = vmatpush1.bf16.msra.mxu0 0
        %1603 = vmatprep.subr.bf16.mxu0 0
        %1604 = vmatpush1.bf16.msra.mxu0 0
        %1605 = vmatprep.subr.bf16.mxu0 0
        %1606 = vmatpush1.bf16.msra.mxu0 0
        %1607 = vmatprep.subr.bf16.mxu0 0
        %1608 = vmatpush1.bf16.msra.mxu0 0
        %1609 = vmatprep.mubr.bf16.mxu0 0
        %1610 = vmatmul.mubr.bf16.gmra.mrb[0].mxu0 %v591
        %v1611 = vpop.f32.mrb[0].mxu0
        %v1612 = vadd.f32 0.0, %v1611
        %v1613 = vpop.f32.mrb[0].mxu0
        %v1614 = vpop.f32.mrb[0].mxu0
        %v1615 = vpop.f32.mrb[0].mxu0
        %1616 = vdwg.mxu0
        %v1617 = vpack.c.bf16 %v1612, %v1612
        %s1618 = scalar_lea.vmem [#allocation8], 48
        %v1619 = vld [vmem:[%s1618] sm:$0xf]
        %v1620 = vld [vmem:[%s1618 + $0x4] sm:$0xf]
        %v1621 = vld [vmem:[%s1618 + $0x8] sm:$0xf]
        %v1622 = vld [vmem:[%s1618 + $0xc] sm:$0xf]
        %v1627 = vunpack.c.l.b16 %v1619
        %v1628 = vunpack.c.l.b16 %v1620
        %v1629 = vunpack.c.l.b16 %v1621
        %v1630 = vunpack.c.l.b16 %v1622
        %v1631 = vpack.c.b16 %v1628, %v1627
        %v1632 = vpack.c.b16 %v1630, %v1629
        %1635 = vmatprep.subr.bf16.mxu0 0
        %1636 = vmatpush1.bf16.msra.mxu0 %v1631
        %1637 = vmatprep.subr.bf16.mxu0 0
        %1638 = vmatpush1.bf16.msra.mxu0 %v1632
        %1639 = vmatprep.subr.bf16.mxu0 0
        %1640 = vmatpush1.bf16.msra.mxu0 0
        %1641 = vmatprep.subr.bf16.mxu0 0
        %1642 = vmatpush1.bf16.msra.mxu0 0
        %1643 = vmatprep.subr.bf16.mxu0 0
        %1644 = vmatpush1.bf16.msra.mxu0 0
        %1645 = vmatprep.subr.bf16.mxu0 0
        %1646 = vmatpush1.bf16.msra.mxu0 0
        %1647 = vmatprep.subr.bf16.mxu0 0
        %1648 = vmatpush1.bf16.msra.mxu0 0
        %1649 = vmatprep.subr.bf16.mxu0 0
        %1650 = vmatpush1.bf16.msra.mxu0 0
        %1651 = vmatprep.subr.bf16.mxu0 0
        %1652 = vmatpush1.bf16.msra.mxu0 0
        %1653 = vmatprep.subr.bf16.mxu0 0
        %1654 = vmatpush1.bf16.msra.mxu0 0
        %1655 = vmatprep.subr.bf16.mxu0 0
        %1656 = vmatpush1.bf16.msra.mxu0 0
        %1657 = vmatprep.subr.bf16.mxu0 0
        %1658 = vmatpush1.bf16.msra.mxu0 0
        %1659 = vmatprep.subr.bf16.mxu0 0
        %1660 = vmatpush1.bf16.msra.mxu0 0
        %1661 = vmatprep.subr.bf16.mxu0 0
        %1662 = vmatpush1.bf16.msra.mxu0 0
        %1663 = vmatprep.subr.bf16.mxu0 0
        %1664 = vmatpush1.bf16.msra.mxu0 0
        %1665 = vmatprep.subr.bf16.mxu0 0
        %1666 = vmatpush1.bf16.msra.mxu0 0
        %1667 = vmatprep.mubr.bf16.mxu0 0
        %1668 = vmatmul.mubr.bf16.gmra.mrb[0].mxu0 %v651
        %v1669 = vpop.f32.mrb[0].mxu0
        %v1670 = vadd.f32 0.0, %v1669
        %v1671 = vpop.f32.mrb[0].mxu0
        %v1672 = vpop.f32.mrb[0].mxu0
        %v1673 = vpop.f32.mrb[0].mxu0
        %1674 = vdwg.mxu0
        %v1675 = vpack.c.bf16 %v1670, %v1670
        %s1676 = scalar_lea.vmem [#allocation10], 48
        %v1677 = vld [vmem:[%s1676] sm:$0xf]
        %v1678 = vld [vmem:[%s1676 + $0x4] sm:$0xf]
        %v1679 = vld [vmem:[%s1676 + $0x8] sm:$0xf]
        %v1680 = vld [vmem:[%s1676 + $0xc] sm:$0xf]
        %v1685 = vunpack.c.l.b16 %v1677
        %v1686 = vunpack.c.l.b16 %v1678
        %v1687 = vunpack.c.l.b16 %v1679
        %v1688 = vunpack.c.l.b16 %v1680
        %v1689 = vpack.c.b16 %v1686, %v1685
        %v1690 = vpack.c.b16 %v1688, %v1687
        %1693 = vmatprep.subr.bf16.mxu0 0
        %1694 = vmatpush1.bf16.msra.mxu0 %v1689
        %1695 = vmatprep.subr.bf16.mxu0 0
        %1696 = vmatpush1.bf16.msra.mxu0 %v1690
        %1697 = vmatprep.subr.bf16.mxu0 0
        %1698 = vmatpush1.bf16.msra.mxu0 0
        %1699 = vmatprep.subr.bf16.mxu0 0
        %1700 = vmatpush1.bf16.msra.mxu0 0
        %1701 = vmatprep.subr.bf16.mxu0 0
        %1702 = vmatpush1.bf16.msra.mxu0 0
        %1703 = vmatprep.subr.bf16.mxu0 0
        %1704 = vmatpush1.bf16.msra.mxu0 0
        %1705 = vmatprep.subr.bf16.mxu0 0
        %1706 = vmatpush1.bf16.msra.mxu0 0
        %1707 = vmatprep.subr.bf16.mxu0 0
        %1708 = vmatpush1.bf16.msra.mxu0 0
        %1709 = vmatprep.subr.bf16.mxu0 0
        %1710 = vmatpush1.bf16.msra.mxu0 0
        %1711 = vmatprep.subr.bf16.mxu0 0
        %1712 = vmatpush1.bf16.msra.mxu0 0
        %1713 = vmatprep.subr.bf16.mxu0 0
        %1714 = vmatpush1.bf16.msra.mxu0 0
        %1715 = vmatprep.subr.bf16.mxu0 0
        %1716 = vmatpush1.bf16.msra.mxu0 0
        %1717 = vmatprep.subr.bf16.mxu0 0
        %1718 = vmatpush1.bf16.msra.mxu0 0
        %1719 = vmatprep.subr.bf16.mxu0 0
        %1720 = vmatpush1.bf16.msra.mxu0 0
        %1721 = vmatprep.subr.bf16.mxu0 0
        %1722 = vmatpush1.bf16.msra.mxu0 0
        %1723 = vmatprep.subr.bf16.mxu0 0
        %1724 = vmatpush1.bf16.msra.mxu0 0
        %1725 = vmatprep.mubr.bf16.mxu0 0
        %1726 = vmatmul.mubr.bf16.gmra.mrb[0].mxu0 %v651
        %v1727 = vpop.f32.mrb[0].mxu0
        %v1728 = vadd.f32 0.0, %v1727
        %v1729 = vpop.f32.mrb[0].mxu0
        %v1730 = vpop.f32.mrb[0].mxu0
        %v1731 = vpop.f32.mrb[0].mxu0
        %1732 = vdwg.mxu0
        %v1733 = vpack.c.bf16 %v1728, %v1728
        %v1735 = vsel %vm751, %v1617, 0
        %v1738 = vsel %vm751, %v1675, 0
        %1740 = vmatprep.subr.bf16.mxu0 0
        %1741 = vmatpush1.bf16.xpose.msra.mxu0 %v1738
        %1742 = vmatprep.subr.bf16.mxu0 0
        %1743 = vmatpush1.bf16.xpose.msra.mxu0 0
        %1744 = vmatprep.subr.bf16.mxu0 0
        %1745 = vmatpush1.bf16.xpose.msra.mxu0 0
        %1746 = vmatprep.subr.bf16.mxu0 0
        %1747 = vmatpush1.bf16.xpose.msra.mxu0 0
        %1748 = vmatprep.subr.bf16.mxu0 0
        %1749 = vmatpush1.bf16.xpose.msra.mxu0 0
        %1750 = vmatprep.subr.bf16.mxu0 0
        %1751 = vmatpush1.bf16.xpose.msra.mxu0 0
        %1752 = vmatprep.subr.bf16.mxu0 0
        %1753 = vmatpush1.bf16.xpose.msra.mxu0 0
        %1754 = vmatprep.subr.bf16.mxu0 0
        %1755 = vmatpush1.bf16.xpose.msra.mxu0 0
        %1756 = vmatprep.subr.bf16.mxu0 0
        %1757 = vmatpush1.bf16.xpose.msra.mxu0 0
        %1758 = vmatprep.subr.bf16.mxu0 0
        %1759 = vmatpush1.bf16.xpose.msra.mxu0 0
        %1760 = vmatprep.subr.bf16.mxu0 0
        %1761 = vmatpush1.bf16.xpose.msra.mxu0 0
        %1762 = vmatprep.subr.bf16.mxu0 0
        %1763 = vmatpush1.bf16.xpose.msra.mxu0 0
        %1764 = vmatprep.subr.bf16.mxu0 0
        %1765 = vmatpush1.bf16.xpose.msra.mxu0 0
        %1766 = vmatprep.subr.bf16.mxu0 0
        %1767 = vmatpush1.bf16.xpose.msra.mxu0 0
        %1768 = vmatprep.subr.bf16.mxu0 0
        %1769 = vmatpush1.bf16.xpose.msra.mxu0 0
        %1770 = vmatprep.subr.bf16.mxu0 0
        %1771 = vmatpush1.bf16.xpose.msra.mxu0 0
        %1772 = vmatprep.mubr.bf16.mxu0 0
        %1773 = vmatmul.mubr.bf16.gmra.mrb[0].mxu0 %v1735
        %v1774 = vpop.f32.mrb[0].mxu0
        %v1775 = vadd.f32 0.0, %v1774
        %v1776 = vpop.f32.mrb[0].mxu0
        %v1777 = vpop.f32.mrb[0].mxu0
        %v1778 = vpop.f32.mrb[0].mxu0
        %1779 = vdwg.mxu0
        %v1780 = vsel %vm751, %v1775, -inf
        %1781 = vmax.xlane.f32.xlu0 %v1780
        %v1782 = vpop.xlane.xlu0 %1781
        %v1783 = vsub.f32 %v1775, %v1782
        %v1784 = vmul.f32 %v1783, 1.442695
        %v1785 = vpow.pop %v1784
        %v1786 = vsel %vm751, %v1785, 0.0
        %1787 = vadd.xlane.f32.xlu0 %v1786
        %v1788 = vpop.xlane.xlu0 %1787
        %v1789 = vrcp.pop %v1788
        %v1790 = vmul.f32 %v1785, %v1789
        %v1791 = vpack.c.bf16 %v1790, %v1790
        %v1793 = vsel %vm751, %v1791, 0
        %v1796 = vsel %vm813, %v1733, 0
        %1798 = vmatprep.subr.bf16.mxu0 0
        %1799 = vmatpush1.bf16.msra.mxu0 %v1796
        %1800 = vmatprep.subr.bf16.mxu0 0
        %1801 = vmatpush1.bf16.msra.mxu0 0
        %1802 = vmatprep.subr.bf16.mxu0 0
        %1803 = vmatpush1.bf16.msra.mxu0 0
        %1804 = vmatprep.subr.bf16.mxu0 0
        %1805 = vmatpush1.bf16.msra.mxu0 0
        %1806 = vmatprep.subr.bf16.mxu0 0
        %1807 = vmatpush1.bf16.msra.mxu0 0
        %1808 = vmatprep.subr.bf16.mxu0 0
        %1809 = vmatpush1.bf16.msra.mxu0 0
        %1810 = vmatprep.subr.bf16.mxu0 0
        %1811 = vmatpush1.bf16.msra.mxu0 0
        %1812 = vmatprep.subr.bf16.mxu0 0
        %1813 = vmatpush1.bf16.msra.mxu0 0
        %1814 = vmatprep.subr.bf16.mxu0 0
        %1815 = vmatpush1.bf16.msra.mxu0 0
        %1816 = vmatprep.subr.bf16.mxu0 0
        %1817 = vmatpush1.bf16.msra.mxu0 0
        %1818 = vmatprep.subr.bf16.mxu0 0
        %1819 = vmatpush1.bf16.msra.mxu0 0
        %1820 = vmatprep.subr.bf16.mxu0 0
        %1821 = vmatpush1.bf16.msra.mxu0 0
        %1822 = vmatprep.subr.bf16.mxu0 0
        %1823 = vmatpush1.bf16.msra.mxu0 0
        %1824 = vmatprep.subr.bf16.mxu0 0
        %1825 = vmatpush1.bf16.msra.mxu0 0
        %1826 = vmatprep.subr.bf16.mxu0 0
        %1827 = vmatpush1.bf16.msra.mxu0 0
        %1828 = vmatprep.subr.bf16.mxu0 0
        %1829 = vmatpush1.bf16.msra.mxu0 0
        %1830 = vmatprep.mubr.bf16.mxu0 0
        %1831 = vmatmul.mubr.bf16.gmra.mrb[0].mxu0 %v1793
        %v1832 = vpop.f32.mrb[0].mxu0
        %v1833 = vadd.f32 0.0, %v1832
        %v1834 = vpop.f32.mrb[0].mxu0
        %v1835 = vpop.f32.mrb[0].mxu0
        %v1836 = vpop.f32.mrb[0].mxu0
        %1837 = vdwg.mxu0
        %v1838 = vpack.c.bf16 %v1833, %v1833
        %s1839 = scalar_lea.vmem [#allocation11], 12
        %v1840 = vld [vmem:[%s1839] sm:$0xf]
        %v1842 = vsel %vm751, %v1838, 0
        %v1845 = vsel %vm813, %v1840, 0
        %1847 = vmatprep.subr.bf16.mxu0 0
        %1848 = vmatpush1.bf16.msra.mxu0 %v1845
        %1849 = vmatprep.subr.bf16.mxu0 0
        %1850 = vmatpush1.bf16.msra.mxu0 0
        %1851 = vmatprep.subr.bf16.mxu0 0
        %1852 = vmatpush1.bf16.msra.mxu0 0
        %1853 = vmatprep.subr.bf16.mxu0 0
        %1854 = vmatpush1.bf16.msra.mxu0 0
        %1855 = vmatprep.subr.bf16.mxu0 0
        %1856 = vmatpush1.bf16.msra.mxu0 0
        %1857 = vmatprep.subr.bf16.mxu0 0
        %1858 = vmatpush1.bf16.msra.mxu0 0
        %1859 = vmatprep.subr.bf16.mxu0 0
        %1860 = vmatpush1.bf16.msra.mxu0 0
        %1861 = vmatprep.subr.bf16.mxu0 0
        %1862 = vmatpush1.bf16.msra.mxu0 0
        %1863 = vmatprep.subr.bf16.mxu0 0
        %1864 = vmatpush1.bf16.msra.mxu0 0
        %1865 = vmatprep.subr.bf16.mxu0 0
        %1866 = vmatpush1.bf16.msra.mxu0 0
        %1867 = vmatprep.subr.bf16.mxu0 0
        %1868 = vmatpush1.bf16.msra.mxu0 0
        %1869 = vmatprep.subr.bf16.mxu0 0
        %1870 = vmatpush1.bf16.msra.mxu0 0
        %1871 = vmatprep.subr.bf16.mxu0 0
        %1872 = vmatpush1.bf16.msra.mxu0 0
        %1873 = vmatprep.subr.bf16.mxu0 0
        %1874 = vmatpush1.bf16.msra.mxu0 0
        %1875 = vmatprep.subr.bf16.mxu0 0
        %1876 = vmatpush1.bf16.msra.mxu0 0
        %1877 = vmatprep.subr.bf16.mxu0 0
        %1878 = vmatpush1.bf16.msra.mxu0 0
        %1879 = vmatprep.mubr.bf16.mxu0 0
        %1880 = vmatmul.mubr.bf16.gmra.mrb[0].mxu0 %v1842
        %v1881 = vpop.f32.mrb[0].mxu0
        %v1882 = vadd.f32 0.0, %v1881
        %v1883 = vpop.f32.mrb[0].mxu0
        %v1884 = vpop.f32.mrb[0].mxu0
        %v1885 = vpop.f32.mrb[0].mxu0
        %1886 = vdwg.mxu0
        %v1887 = vadd.f32 %v1559, %v1882
        %v1888 = vadd.f32 %v542, %v1887
        %v1889 = vsel %vm544, %v1888, 0.0
        %1890 = vadd.xlane.f32.xlu0 %v1889
        %v1891 = vpop.xlane.xlu0 %1890
        %v1892 = vmul.f32 %v1891, %v548
        %v1893 = vsub.f32 %v1888, %v1892
        %v1894 = vmul.f32 %v1893, %v1893
        %v1895 = vsel %vm544, %v1894, 0.0
        %1896 = vadd.xlane.f32.xlu0 %v1895
        %v1897 = vpop.xlane.xlu0 %1896
        %v1898 = vmul.f32 %v1897, %v548
        %v1899 = vadd.f32 %v1898, 1e-05
        %v1900 = vrsqrt.pop %v1899
        %v1901 = vmul.f32 %v1893, %v1900
        %v1902 = vpack.c.bf16 %v1901, %v1901
        %v1903 = vld [vmem:[#allocation13] sm:$0xf]
        %v1904 = vld [vmem:[#allocation13 + $0x4] sm:$0xf]
        %v1905 = vld [vmem:[#allocation13 + $0x8] sm:$0xf]
        %v1906 = vld [vmem:[#allocation13 + $0xc] sm:$0xf]
        %v1907 = vld [vmem:[#allocation14] sm:$0x1]
        %v1909 = vlaneseq
        %v1910 = vshrl.u32 %v1909, 7
        %v1911 = vsub.s32 0, %v1910
        %v1912 = vrot.slane %v1907, %v1911
        %v1918 = vunpack.c.l.b16 %v1903
        %v1919 = vunpack.c.l.b16 %v1904
        %v1920 = vunpack.c.l.b16 %v1905
        %v1921 = vunpack.c.l.b16 %v1906
        %v1922 = vpack.c.b16 %v1919, %v1918
        %v1923 = vpack.c.b16 %v1921, %v1920
        %v1927 = vsel %vm544, %v1902, 0
        %1929 = vmatprep.subr.bf16.mxu0 0
        %1930 = vmatpush1.bf16.msra.mxu0 %v1922
        %1931 = vmatprep.subr.bf16.mxu0 0
        %1932 = vmatpush1.bf16.msra.mxu0 %v1923
        %1933 = vmatprep.subr.bf16.mxu0 0
        %1934 = vmatpush1.bf16.msra.mxu0 0
        %1935 = vmatprep.subr.bf16.mxu0 0
        %1936 = vmatpush1.bf16.msra.mxu0 0
        %1937 = vmatprep.subr.bf16.mxu0 0
        %1938 = vmatpush1.bf16.msra.mxu0 0
        %1939 = vmatprep.subr.bf16.mxu0 0
        %1940 = vmatpush1.bf16.msra.mxu0 0
        %1941 = vmatprep.subr.bf16.mxu0 0
        %1942 = vmatpush1.bf16.msra.mxu0 0
        %1943 = vmatprep.subr.bf16.mxu0 0
        %1944 = vmatpush1.bf16.msra.mxu0 0
        %1945 = vmatprep.subr.bf16.mxu0 0
        %1946 = vmatpush1.bf16.msra.mxu0 0
        %1947 = vmatprep.subr.bf16.mxu0 0
        %1948 = vmatpush1.bf16.msra.mxu0 0
        %1949 = vmatprep.subr.bf16.mxu0 0
        %1950 = vmatpush1.bf16.msra.mxu0 0
        %1951 = vmatprep.subr.bf16.mxu0 0
        %1952 = vmatpush1.bf16.msra.mxu0 0
        %1953 = vmatprep.subr.bf16.mxu0 0
        %1954 = vmatpush1.bf16.msra.mxu0 0
        %1955 = vmatprep.subr.bf16.mxu0 0
        %1956 = vmatpush1.bf16.msra.mxu0 0
        %1957 = vmatprep.subr.bf16.mxu0 0
        %1958 = vmatpush1.bf16.msra.mxu0 0
        %1959 = vmatprep.subr.bf16.mxu0 0
        %1960 = vmatpush1.bf16.msra.mxu0 0
        %1961 = vmatprep.mubr.bf16.mxu0 0
        %1962 = vmatmul.mubr.bf16.gmra.mrb[0].mxu0 %v1927
        %v1963 = vpop.f32.mrb[0].mxu0
        %v1964 = vadd.f32 %v1912, %v1963
        %v1965 = vpop.f32.mrb[0].mxu0
        %v1966 = vpop.f32.mrb[0].mxu0
        %v1967 = vpop.f32.mrb[0].mxu0
        %1968 = vdwg.mxu0
        %v1969 = vmul.f32 %v1964, 0.5
        %v1970 = vmul.f32 %v1964, 0.044715
        %v1971 = vmul.f32 %v1970, %v1964
        %v1972 = vmul.f32 %v1971, %v1964
        %v1973 = vadd.f32 %v1964, %v1972
        %v1974 = vmul.f32 %v1973, 0.7978846
        %v1975 = vtanh.pop %v1974
        %v1976 = vadd.f32 %v1975, 1.0
        %v1977 = vmul.f32 %v1969, %v1976
        %v1978 = vpack.c.bf16 %v1977, %v1977
        %v1979 = vld [vmem:[#allocation16] sm:$0xf]
        %v1980 = vld [vmem:[#allocation16 + $0x4] sm:$0xf]
        %v1981 = vld [vmem:[#allocation16 + $0x8] sm:$0xf]
        %v1982 = vld [vmem:[#allocation16 + $0xc] sm:$0xf]
        %v1983 = vld [vmem:[#allocation16 + $0x10] sm:$0xf]
        %v1984 = vld [vmem:[#allocation16 + $0x14] sm:$0xf]
        %v1985 = vld [vmem:[#allocation16 + $0x18] sm:$0xf]
        %v1986 = vld [vmem:[#allocation16 + $0x1c] sm:$0xf]
        %v1987 = vld [vmem:[#allocation16 + $0x20] sm:$0xf]
        %v1988 = vld [vmem:[#allocation16 + $0x24] sm:$0xf]
        %v1989 = vld [vmem:[#allocation16 + $0x28] sm:$0xf]
        %v1990 = vld [vmem:[#allocation16 + $0x2c] sm:$0xf]
        %v1991 = vld [vmem:[#allocation16 + $0x30] sm:$0xf]
        %v1992 = vld [vmem:[#allocation16 + $0x34] sm:$0xf]
        %v1993 = vld [vmem:[#allocation16 + $0x38] sm:$0xf]
        %v1994 = vld [vmem:[#allocation16 + $0x3c] sm:$0xf]
        %v2011 = vunpack.c.l.b16 %v1979
        %v2012 = vunpack.c.l.b16 %v1980
        %v2013 = vunpack.c.l.b16 %v1981
        %v2014 = vunpack.c.l.b16 %v1982
        %v2015 = vunpack.c.l.b16 %v1983
        %v2016 = vunpack.c.l.b16 %v1984
        %v2017 = vunpack.c.l.b16 %v1985
        %v2018 = vunpack.c.l.b16 %v1986
        %v2019 = vunpack.c.l.b16 %v1987
        %v2020 = vunpack.c.l.b16 %v1988
        %v2021 = vunpack.c.l.b16 %v1989
        %v2022 = vunpack.c.l.b16 %v1990
        %v2023 = vunpack.c.l.b16 %v1991
        %v2024 = vunpack.c.l.b16 %v1992
        %v2025 = vunpack.c.l.b16 %v1993
        %v2026 = vunpack.c.l.b16 %v1994
        %v2027 = vpack.c.b16 %v2012, %v2011
        %v2028 = vpack.c.b16 %v2014, %v2013
        %v2029 = vpack.c.b16 %v2016, %v2015
        %v2030 = vpack.c.b16 %v2018, %v2017
        %v2031 = vpack.c.b16 %v2020, %v2019
        %v2032 = vpack.c.b16 %v2022, %v2021
        %v2033 = vpack.c.b16 %v2024, %v2023
        %v2034 = vpack.c.b16 %v2026, %v2025
        %2043 = vmatprep.subr.bf16.mxu0 0
        %2044 = vmatpush1.bf16.msra.mxu0 %v2027
        %2045 = vmatprep.subr.bf16.mxu0 0
        %2046 = vmatpush1.bf16.msra.mxu0 %v2028
        %2047 = vmatprep.subr.bf16.mxu0 0
        %2048 = vmatpush1.bf16.msra.mxu0 %v2029
        %2049 = vmatprep.subr.bf16.mxu0 0
        %2050 = vmatpush1.bf16.msra.mxu0 %v2030
        %2051 = vmatprep.subr.bf16.mxu0 0
        %2052 = vmatpush1.bf16.msra.mxu0 %v2031
        %2053 = vmatprep.subr.bf16.mxu0 0
        %2054 = vmatpush1.bf16.msra.mxu0 %v2032
        %2055 = vmatprep.subr.bf16.mxu0 0
        %2056 = vmatpush1.bf16.msra.mxu0 %v2033
        %2057 = vmatprep.subr.bf16.mxu0 0
        %2058 = vmatpush1.bf16.msra.mxu0 %v2034
        %2059 = vmatprep.subr.bf16.mxu0 0
        %2060 = vmatpush1.bf16.msra.mxu0 0
        %2061 = vmatprep.subr.bf16.mxu0 0
        %2062 = vmatpush1.bf16.msra.mxu0 0
        %2063 = vmatprep.subr.bf16.mxu0 0
        %2064 = vmatpush1.bf16.msra.mxu0 0
        %2065 = vmatprep.subr.bf16.mxu0 0
        %2066 = vmatpush1.bf16.msra.mxu0 0
        %2067 = vmatprep.subr.bf16.mxu0 0
        %2068 = vmatpush1.bf16.msra.mxu0 0
        %2069 = vmatprep.subr.bf16.mxu0 0
        %2070 = vmatpush1.bf16.msra.mxu0 0
        %2071 = vmatprep.subr.bf16.mxu0 0
        %2072 = vmatpush1.bf16.msra.mxu0 0
        %2073 = vmatprep.subr.bf16.mxu0 0
        %2074 = vmatpush1.bf16.msra.mxu0 0
        %2075 = vmatprep.mubr.bf16.mxu0 0
        %2076 = vmatmul.mubr.bf16.gmra.mrb[0].mxu0 %v1978
        %v2077 = vpop.f32.mrb[0].mxu0
        %v2078 = vadd.f32 0.0, %v2077
        %v2079 = vpop.f32.mrb[0].mxu0
        %v2080 = vpop.f32.mrb[0].mxu0
        %v2081 = vpop.f32.mrb[0].mxu0
        %2082 = vdwg.mxu0
        %v2083 = vadd.f32 %v1888, %v2078
        %v2084 = vld [vmem:[#allocation17] sm:$0x1]
        %v2086 = vlaneseq
        %v2087 = vshrl.u32 %v2086, 7
        %v2088 = vsub.s32 0, %v2087
        %v2089 = vrot.slane %v2084, %v2088
        %v2091 = vadd.f32 %v2083, %v2089
        %2092 = vst.msk [vmem:[%s540] sm:$0xff] %vm544, %v2091
        %s2093 = sand.u32 %s278, 1
        %s2094 = scalar_lea.sflag [#allocation4], %s2093
        %s2095 = sand.u32 %s278, 1
        %s2096 = smul.addr %s2095, 8
        %s2097 = scalar_lea.vmem [#allocation19], %s2096
        // Predicated region
        $region101: #{tpu_custom_call.1} parent=59 // pred_check
          %p2098 = pneg %p288
        $region102: #{tpu_custom_call.1} parent=59 // pred_check_branch
          %2100 = sbr.rel (%p2098) target = $region104
        $region103: #{tpu_custom_call.1} parent=59 // pred_region
          %s2102 = ssub.s32 128, 128
          %2103 = vsyncadd %s2094, %s2102
          %s2104 = sadd.s32 %s39, %s38
          %s2105 = smul.addr %s2104, 128
          %s2106 = scalar_lea.hbm %s10, %s2105
          %s2108 = sshll.u32 %s2097, 4
          %s2109 = int_to_ptr.vmem [resolvable:$true] %s2108
          %2111 = dma.vmem_to_hbm [thread:$0]  %s2109, 128, %s2106, %s2094
        $region104: #{tpu_custom_call.1} parent=59 // pred_fallthru
          _
      $region60: #{tpu_custom_call.1} parent=5 // pred_fallthru
        _
      %p2112 = scmp.le.s32.totalorder 2, %s29
      // Predicated region
      $region105: #{tpu_custom_call.1} parent=5 // pred_check
        %p2113 = pneg %p2112
      $region106: #{tpu_custom_call.1} parent=5 // pred_check_branch
        %2115 = sbr.rel (%p2113) target = $region108
      $region107: #{tpu_custom_call.1} parent=5 // pred_region
        %s2116 = ssub.s32 %s29, 2
        // Predicated region
        $region109: #{tpu_custom_call.1} parent=107 // pred_check
          %p2117 = pneg %p294
        $region110: #{tpu_custom_call.1} parent=107 // pred_check_branch
          %2119 = sbr.rel (%p2117) target = $region112
        $region111: #{tpu_custom_call.1} parent=107 // pred_region
          %s2120 = sand.u32 %s279, 1
          %s2121 = scalar_lea.sflag [#allocation4], %s2120
          %s2122 = sand.u32 %s279, 1
          %s2123 = smul.addr %s2122, 8
          %s2124 = scalar_lea.vmem [#allocation19], %s2123
          %2125 = dma.done %s2121, 128
        $region112: #{tpu_custom_call.1} parent=107 // pred_fallthru
          _
      $region108: #{tpu_custom_call.1} parent=5 // pred_fallthru
        _
    $region6: #{tpu_custom_call.1} parent=1 // loop_footer
      %s33 = sadd.s32 1, %s29
    $region7: #{tpu_custom_call.1} parent=1 // loop_footer_branch
      %28 = sbr.rel target = $region3
    $region8: #{tpu_custom_call.1} parent=1 // loop_exit
      _
    %2126 = vsyncpa [#allocation3], 1
    %s2127 = scalar_lea.sflag [#allocation3], 1
    %2128 = vsyncpa %s2127, 1
    %2129 = vsyncpa [#allocation6], 1
    %s2130 = scalar_lea.sflag [#allocation6], 1
    %2131 = vsyncpa %s2130, 1
    %2132 = vsyncpa [#allocation9], 1
    %2133 = vsyncpa [#allocation12], 1
    %2134 = vsyncpa [#allocation15], 1
    %2135 = vsyncpa [#allocation18], 1
    %2136 = vsyncpa [#allocation4], 1
    %s2137 = scalar_lea.sflag [#allocation4], 1
    %2138 = vsyncpa %s2137, 1

</llo_original>
